<compile_context>
chip_gen: v7x
topology: tpu7x:2x2x1
jax: 0.10.0
libtpu: 0.0.40
codegen_flags: <defaults>
</compile_context>

<pallas_src>
import functools

import jax
import jax.numpy as jnp
import numpy as np
from jax import lax
from jax.experimental import pallas as pl
from jax.experimental.pallas import tpu as pltpu


# ---------------------------------------------------------------------------
# Fused kernel (one batch element per grid step)
# ---------------------------------------------------------------------------

def _decoder_block_kernel(x_ref, skip_ref, wup_ref, bup_ref, w1_ref, b1_ref,
                          w2_ref, b2_ref, o_ref, cat_ref, hid_ref,
                          *, cin, cout, csk, h, w):
    """Fused upconv + concat + conv1 + ReLU + conv2 + ReLU.

    In-kernel layouts (channels-first, spatial -> (sublane, lane)):
      x_ref    (1, cin,  h,    w)     low-res input
      skip_ref (1, csk,  2h,   2w)    skip connection
      o_ref    (1, cout, 2h,   2w)    output block
      cat_ref  (cin,  2h+2, 2w+2)     zero-padded [upconv | skip] concat (VMEM)
      hid_ref  (cout, 2h+2, 2w+2)     zero-padded conv1 output (VMEM)
    Weights / biases are flattened f32 arrays in SMEM (original PyTorch
    memory layouts, indexed with static scalar offsets).
    """
    f32 = jnp.float32
    h2, w2 = 2 * h, 2 * w

    # Constant 0/1 dilation matrices for the stride-2 sub-pixel scatter,
    # built on-chip from iotas and applied with tiny MXU matmuls.
    #   gcol[kj]: (w, w2),  gcol[kj][a, x] = 1 iff x == 2a + kj
    #   grow[ki]: (h2, h),  grow[ki][y, b] = 1 iff y == 2b + ki
    ra = lax.broadcasted_iota(jnp.int32, (w, w2), 0)
    ca = lax.broadcasted_iota(jnp.int32, (w, w2), 1)
    gcol = [jnp.where(ca == 2 * ra + kj, 1.0, 0.0).astype(f32) for kj in (0, 1)]
    rb = lax.broadcasted_iota(jnp.int32, (h2, h), 0)
    cb = lax.broadcasted_iota(jnp.int32, (h2, h), 1)
    grow = [jnp.where(rb == 2 * cb + ki, 1.0, 0.0).astype(f32) for ki in (0, 1)]

    # Zero the padded scratch buffers: provides both convs' pad=1 for free.
    cat_ref[...] = jnp.zeros(cat_ref.shape, f32)
    hid_ref[...] = jnp.zeros(hid_ref.shape, f32)

    # --- upconv (ConvTranspose2d k=2 s=2) + sub-pixel scatter + concat ------
    # out[o, 2a+ki, 2b+kj] = bup[o] + sum_c Wup[c,o,ki,kj] * x[c,a,b]
    xin = [x_ref[0, c, :, :] for c in range(cin)]            # (h, w) planes
    for o in range(cout):
        up = jnp.zeros((h2, w2), f32)
        for ki in range(2):
            rowblk = jnp.zeros((h, w2), f32)
            for kj in range(2):
                ph = jnp.zeros((h, w), f32)
                for c in range(cin):
                    wv = wup_ref[((c * cout + o) * 2 + ki) * 2 + kj]
                    ph = ph + wv * xin[c]
                rowblk = rowblk + jnp.dot(ph, gcol[kj],
                                          preferred_element_type=f32)
            up = up + jnp.dot(grow[ki], rowblk, preferred_element_type=f32)
        cat_ref[o, 1:1 + h2, 1:1 + w2] = up + bup_ref[o]
    for c in range(csk):                                     # channel concat
        cat_ref[cout + c, 1:1 + h2, 1:1 + w2] = skip_ref[0, c, :, :]

    # --- conv1 (3x3, pad=1) + ReLU ------------------------------------------
    for o in range(cout):
        acc = jnp.zeros((h2, w2), f32) + b1_ref[o]
        for c in range(cin):
            for kh in range(3):
                for kw in range(3):
                    wv = w1_ref[((o * cin + c) * 3 + kh) * 3 + kw]
                    acc = acc + wv * cat_ref[c, kh:kh + h2, kw:kw + w2]
        hid_ref[o, 1:1 + h2, 1:1 + w2] = jnp.maximum(acc, 0.0)

    # --- conv2 (3x3, pad=1) + ReLU ------------------------------------------
    for o in range(cout):
        acc = jnp.zeros((h2, w2), f32) + b2_ref[o]
        for c in range(cout):
            for kh in range(3):
                for kw in range(3):
                    wv = w2_ref[((o * cout + c) * 3 + kh) * 3 + kw]
                    acc = acc + wv * hid_ref[c, kh:kh + h2, kw:kw + w2]
        o_ref[0, o, :, :] = jnp.maximum(acc, 0.0)


# ---------------------------------------------------------------------------
# Wrapper (NCHW in / NCHW out, same semantics as the PyTorch module)
# ---------------------------------------------------------------------------

def pack_decoder_params(params):
    """One-time, copy-free (contiguous reshape) packing of PyTorch weights."""
    return {
        "up_w": params["up_w"].reshape(-1).astype(jnp.float32),   # (Cin*Cout*4,)
        "up_b": params["up_b"].astype(jnp.float32),               # (Cout,)
        "c1_w": params["c1_w"].reshape(-1).astype(jnp.float32),   # (Cout*Cin*9,)
        "c1_b": params["c1_b"].astype(jnp.float32),               # (Cout,)
        "c2_w": params["c2_w"].reshape(-1).astype(jnp.float32),   # (Cout*Cout*9,)
        "c2_b": params["c2_b"].astype(jnp.float32),               # (Cout,)
    }


def decoder_block_forward(x_nchw, skip_nchw, packed):
    N, cin, h, w = x_nchw.shape
    _, csk, h2, w2 = skip_nchw.shape
    cout = packed["up_b"].shape[0]
    assert cin == cout + csk and h2 == 2 * h and w2 == 2 * w

    kern = functools.partial(_decoder_block_kernel,
                             cin=cin, cout=cout, csk=csk, h=h, w=w)
    smem = lambda: pl.BlockSpec(memory_space=pltpu.MemorySpace.SMEM)

    return pl.pallas_call(
        kern,
        out_shape=jax.ShapeDtypeStruct((N, cout, h2, w2), jnp.float32),
        grid=(N,),
        in_specs=[
            pl.BlockSpec((1, cin, h, w), lambda n: (n, 0, 0, 0)),
            pl.BlockSpec((1, csk, h2, w2), lambda n: (n, 0, 0, 0)),
            smem(), smem(), smem(), smem(), smem(), smem(),
        ],
        out_specs=pl.BlockSpec((1, cout, h2, w2), lambda n: (n, 0, 0, 0)),
        scratch_shapes=[
            pltpu.VMEM((cin, h2 + 2, w2 + 2), jnp.float32),
            pltpu.VMEM((cout, h2 + 2, w2 + 2), jnp.float32),
        ],
        compiler_params=pltpu.CompilerParams(
            dimension_semantics=("parallel",)),
    )(x_nchw, skip_nchw,
      packed["up_w"], packed["up_b"],
      packed["c1_w"], packed["c1_b"],
      packed["c2_w"], packed["c2_b"])


# ---------------------------------------------------------------------------
# Pure-JAX reference (matches PyTorch semantics) for verification
# ---------------------------------------------------------------------------

def reference_forward(x, skip, p):
    N, Cin, H, W = x.shape
    Cout = p["up_w"].shape[1]
    # ConvTranspose2d k=2 s=2: out[n,o,2h+k,2w+l] = sum_c x[n,c,h,w] W[c,o,k,l]
    y = jnp.einsum("nchw,cokl->nohkwl", x, p["up_w"])
    y = y.reshape(N, Cout, 2 * H, 2 * W) + p["up_b"][None, :, None, None]
    cat = jnp.concatenate([y, skip], axis=1)

    def conv(z, wgt, b):
        out = lax.conv_general_dilated(
            z, wgt, window_strides=(1, 1), padding=((1, 1), (1, 1)),
            dimension_numbers=("NCHW", "OIHW", "NCHW"))
        return jnp.maximum(out + b[None, :, None, None], 0.0)

    hcat = conv(cat, p["c1_w"], p["c1_b"])
    return conv(hcat, p["c2_w"], p["c2_b"])


# ---------------------------------------------------------------------------
# Main
# ---------------------------------------------------------------------------

if __name__ == "__main__":
    # in_channels=4, out_channels=2; x: (2,4,16,16); skip: (2,2,32,32)
    N, Cin, Cout, H, W = 2, 4, 2, 16, 16

    key = jax.random.PRNGKey(0)
    ks = jax.random.split(key, 8)
    params = {
        "up_w": jax.random.normal(ks[0], (Cin, Cout, 2, 2), jnp.float32) * 0.1,
        "up_b": jax.random.normal(ks[1], (Cout,), jnp.float32) * 0.1,
        "c1_w": jax.random.normal(ks[2], (Cout, Cin, 3, 3), jnp.float32) * 0.1,
        "c1_b": jax.random.normal(ks[3], (Cout,), jnp.float32) * 0.1,
        "c2_w": jax.random.normal(ks[4], (Cout, Cout, 3, 3), jnp.float32) * 0.1,
        "c2_b": jax.random.normal(ks[5], (Cout,), jnp.float32) * 0.1,
    }

    x = jax.random.normal(ks[6], (N, Cin, H, W), jnp.float32)
    skip = jax.random.normal(ks[7], (N, Cin - Cout, 2 * H, 2 * W), jnp.float32)

    packed = pack_decoder_params(params)            # one-time weight packing
    fwd = jax.jit(decoder_block_forward)

    out = jax.block_until_ready(fwd(x, skip, packed))
    ref = jax.block_until_ready(reference_forward(x, skip, params))

    assert out.shape == (N, Cout, 2 * H, 2 * W), out.shape
    np.testing.assert_allclose(np.asarray(out), np.asarray(ref),
                               rtol=1e-4, atol=1e-4)
    print("KERNEL_OK")
</pallas_src>

<mosaic_0001>
module attributes {stable_mosaic.version = 11 : i64} {
  func.func @_decoder_block_kernel(%arg0: i32, %arg1: memref<1x4x16x16xf32, #tpu.memory_space<vmem>>, %arg2: memref<1x2x32x32xf32, #tpu.memory_space<vmem>>, %arg3: memref<32xf32, #tpu.memory_space<smem>>, %arg4: memref<2xf32, #tpu.memory_space<smem>>, %arg5: memref<72xf32, #tpu.memory_space<smem>>, %arg6: memref<2xf32, #tpu.memory_space<smem>>, %arg7: memref<36xf32, #tpu.memory_space<smem>>, %arg8: memref<2xf32, #tpu.memory_space<smem>>, %arg9: memref<1x2x32x32xf32, #tpu.memory_space<vmem>>, %arg10: memref<4x34x34xf32, #tpu.memory_space<vmem>>, %arg11: memref<2x34x34xf32, #tpu.memory_space<vmem>>) attributes {dimension_semantics = [#tpu.dimension_semantics<parallel>], iteration_bounds = array<i64: 2>, scalar_prefetch = 0 : i64, scratch_operands = 2 : i64, tpu.core_type = #tpu.core_type<tc>, window_params = [{transform_indices = @transform_0, window_bounds = array<i64: 1, 4, 16, 16>}, {transform_indices = @transform_1, window_bounds = array<i64: 1, 2, 32, 32>}, {transform_indices = @transform_2, window_bounds = array<i64: 32>}, {transform_indices = @transform_3, window_bounds = array<i64: 2>}, {transform_indices = @transform_4, window_bounds = array<i64: 72>}, {transform_indices = @transform_5, window_bounds = array<i64: 2>}, {transform_indices = @transform_6, window_bounds = array<i64: 36>}, {transform_indices = @transform_7, window_bounds = array<i64: 2>}, {transform_indices = @transform_8, window_bounds = array<i64: 1, 2, 32, 32>}]} {
    %0 = tpu.iota {dimensions = array<i32: 0>} : vector<16x32xi32>
    %1 = tpu.iota {dimensions = array<i32: 1>} : vector<16x32xi32>
    %c2_i32 = arith.constant 2 : i32
    %2 = vector.broadcast %c2_i32 : i32 to vector<16x32xi32>
    %3 = arith.muli %2, %0 : vector<16x32xi32>
    %c0_i32 = arith.constant 0 : i32
    %4 = vector.broadcast %c0_i32 : i32 to vector<16x32xi32>
    %5 = arith.addi %3, %4 : vector<16x32xi32>
    %6 = arith.cmpi eq, %1, %5 : vector<16x32xi32>
    %cst = arith.constant 1.000000e+00 : f32
    %cst_0 = arith.constant 0.000000e+00 : f32
    %7 = vector.broadcast %cst : f32 to vector<16x32xf32>
    %8 = vector.broadcast %cst_0 : f32 to vector<16x32xf32>
    %9 = arith.select %6, %7, %8 : vector<16x32xi1>, vector<16x32xf32>
    %c2_i32_1 = arith.constant 2 : i32
    %10 = vector.broadcast %c2_i32_1 : i32 to vector<16x32xi32>
    %11 = arith.muli %10, %0 : vector<16x32xi32>
    %c1_i32 = arith.constant 1 : i32
    %12 = vector.broadcast %c1_i32 : i32 to vector<16x32xi32>
    %13 = arith.addi %11, %12 : vector<16x32xi32>
    %14 = arith.cmpi eq, %1, %13 : vector<16x32xi32>
    %cst_2 = arith.constant 1.000000e+00 : f32
    %cst_3 = arith.constant 0.000000e+00 : f32
    %15 = vector.broadcast %cst_2 : f32 to vector<16x32xf32>
    %16 = vector.broadcast %cst_3 : f32 to vector<16x32xf32>
    %17 = arith.select %14, %15, %16 : vector<16x32xi1>, vector<16x32xf32>
    %18 = tpu.iota {dimensions = array<i32: 0>} : vector<32x16xi32>
    %19 = tpu.iota {dimensions = array<i32: 1>} : vector<32x16xi32>
    %c2_i32_4 = arith.constant 2 : i32
    %20 = vector.broadcast %c2_i32_4 : i32 to vector<32x16xi32>
    %21 = arith.muli %20, %19 : vector<32x16xi32>
    %c0_i32_5 = arith.constant 0 : i32
    %22 = vector.broadcast %c0_i32_5 : i32 to vector<32x16xi32>
    %23 = arith.addi %21, %22 : vector<32x16xi32>
    %24 = arith.cmpi eq, %18, %23 : vector<32x16xi32>
    %cst_6 = arith.constant 1.000000e+00 : f32
    %cst_7 = arith.constant 0.000000e+00 : f32
    %25 = vector.broadcast %cst_6 : f32 to vector<32x16xf32>
    %26 = vector.broadcast %cst_7 : f32 to vector<32x16xf32>
    %27 = arith.select %24, %25, %26 : vector<32x16xi1>, vector<32x16xf32>
    %c2_i32_8 = arith.constant 2 : i32
    %28 = vector.broadcast %c2_i32_8 : i32 to vector<32x16xi32>
    %29 = arith.muli %28, %19 : vector<32x16xi32>
    %c1_i32_9 = arith.constant 1 : i32
    %30 = vector.broadcast %c1_i32_9 : i32 to vector<32x16xi32>
    %31 = arith.addi %29, %30 : vector<32x16xi32>
    %32 = arith.cmpi eq, %18, %31 : vector<32x16xi32>
    %cst_10 = arith.constant 1.000000e+00 : f32
    %cst_11 = arith.constant 0.000000e+00 : f32
    %33 = vector.broadcast %cst_10 : f32 to vector<32x16xf32>
    %34 = vector.broadcast %cst_11 : f32 to vector<32x16xf32>
    %35 = arith.select %32, %33, %34 : vector<32x16xi1>, vector<32x16xf32>
    %cst_12 = arith.constant 0.000000e+00 : f32
    %36 = vector.broadcast %cst_12 : f32 to vector<4x34x34xf32>
    %c0 = arith.constant 0 : index
    %c0_13 = arith.constant 0 : index
    %c0_14 = arith.constant 0 : index
    %37 = vector.load %arg10[%c0, %c0_13, %c0_14] : memref<4x34x34xf32, #tpu.memory_space<vmem>>, vector<4x34x34xf32>
    tpu.vector_store %arg10[%c0, %c0_13, %c0_14], %36 {strides = array<i32>} : memref<4x34x34xf32, #tpu.memory_space<vmem>>, vector<4x34x34xf32>,
    %cst_15 = arith.constant 0.000000e+00 : f32
    %38 = vector.broadcast %cst_15 : f32 to vector<2x34x34xf32>
    %c0_16 = arith.constant 0 : index
    %c0_17 = arith.constant 0 : index
    %c0_18 = arith.constant 0 : index
    %39 = vector.load %arg11[%c0_16, %c0_17, %c0_18] : memref<2x34x34xf32, #tpu.memory_space<vmem>>, vector<2x34x34xf32>
    tpu.vector_store %arg11[%c0_16, %c0_17, %c0_18], %38 {strides = array<i32>} : memref<2x34x34xf32, #tpu.memory_space<vmem>>, vector<2x34x34xf32>,
    %c0_19 = arith.constant 0 : index
    %c0_20 = arith.constant 0 : index
    %c0_21 = arith.constant 0 : index
    %c0_22 = arith.constant 0 : index
    %40 = vector.load %arg1[%c0_19, %c0_20, %c0_21, %c0_22] : memref<1x4x16x16xf32, #tpu.memory_space<vmem>>, vector<1x1x16x16xf32>
    %41 = vector.shape_cast %40 : vector<1x1x16x16xf32> to vector<16x16xf32>
    %c0_23 = arith.constant 0 : index
    %c1 = arith.constant 1 : index
    %c0_24 = arith.constant 0 : index
    %c0_25 = arith.constant 0 : index
    %42 = vector.load %arg1[%c0_23, %c1, %c0_24, %c0_25] : memref<1x4x16x16xf32, #tpu.memory_space<vmem>>, vector<1x1x16x16xf32>
    %43 = vector.shape_cast %42 : vector<1x1x16x16xf32> to vector<16x16xf32>
    %c0_26 = arith.constant 0 : index
    %c2 = arith.constant 2 : index
    %c0_27 = arith.constant 0 : index
    %c0_28 = arith.constant 0 : index
    %44 = vector.load %arg1[%c0_26, %c2, %c0_27, %c0_28] : memref<1x4x16x16xf32, #tpu.memory_space<vmem>>, vector<1x1x16x16xf32>
    %45 = vector.shape_cast %44 : vector<1x1x16x16xf32> to vector<16x16xf32>
    %c0_29 = arith.constant 0 : index
    %c3 = arith.constant 3 : index
    %c0_30 = arith.constant 0 : index
    %c0_31 = arith.constant 0 : index
    %46 = vector.load %arg1[%c0_29, %c3, %c0_30, %c0_31] : memref<1x4x16x16xf32, #tpu.memory_space<vmem>>, vector<1x1x16x16xf32>
    %47 = vector.shape_cast %46 : vector<1x1x16x16xf32> to vector<16x16xf32>
    %cst_32 = arith.constant 0.000000e+00 : f32
    %48 = vector.broadcast %cst_32 : f32 to vector<32x32xf32>
    %cst_33 = arith.constant 0.000000e+00 : f32
    %49 = vector.broadcast %cst_33 : f32 to vector<16x32xf32>
    %cst_34 = arith.constant 0.000000e+00 : f32
    %50 = vector.broadcast %cst_34 : f32 to vector<16x16xf32>
    %c0_35 = arith.constant 0 : index
    %51 = memref.load %arg3[%c0_35] : memref<32xf32, #tpu.memory_space<smem>>
    %52 = vector.broadcast %51 : f32 to vector<16x16xf32>
    %53 = arith.mulf %52, %41 : vector<16x16xf32>
    %54 = arith.addf %50, %53 : vector<16x16xf32>
    %c8 = arith.constant 8 : index
    %55 = memref.load %arg3[%c8] : memref<32xf32, #tpu.memory_space<smem>>
    %56 = vector.broadcast %55 : f32 to vector<16x16xf32>
    %57 = arith.mulf %56, %43 : vector<16x16xf32>
    %58 = arith.addf %54, %57 : vector<16x16xf32>
    %c16 = arith.constant 16 : index
    %59 = memref.load %arg3[%c16] : memref<32xf32, #tpu.memory_space<smem>>
    %60 = vector.broadcast %59 : f32 to vector<16x16xf32>
    %61 = arith.mulf %60, %45 : vector<16x16xf32>
    %62 = arith.addf %58, %61 : vector<16x16xf32>
    %c24 = arith.constant 24 : index
    %63 = memref.load %arg3[%c24] : memref<32xf32, #tpu.memory_space<smem>>
    %64 = vector.broadcast %63 : f32 to vector<16x16xf32>
    %65 = arith.mulf %64, %47 : vector<16x16xf32>
    %66 = arith.addf %62, %65 : vector<16x16xf32>
    %cst_36 = arith.constant dense<0.000000e+00> : vector<16x32xf32>
    %67 = tpu.matmul %66, %9, %cst_36 {dimension_numbers = #tpu.dot_dimension_numbers<[1], [0], [0], [1], [0, 0, 1, 1], [], []>} : vector<16x16xf32>, vector<16x32xf32>, vector<16x32xf32> -> vector<16x32xf32>
    %68 = arith.addf %49, %67 : vector<16x32xf32>
    %cst_37 = arith.constant 0.000000e+00 : f32
    %69 = vector.broadcast %cst_37 : f32 to vector<16x16xf32>
    %c1_38 = arith.constant 1 : index
    %70 = memref.load %arg3[%c1_38] : memref<32xf32, #tpu.memory_space<smem>>
    %71 = vector.broadcast %70 : f32 to vector<16x16xf32>
    %72 = arith.mulf %71, %41 : vector<16x16xf32>
    %73 = arith.addf %69, %72 : vector<16x16xf32>
    %c9 = arith.constant 9 : index
    %74 = memref.load %arg3[%c9] : memref<32xf32, #tpu.memory_space<smem>>
    %75 = vector.broadcast %74 : f32 to vector<16x16xf32>
    %76 = arith.mulf %75, %43 : vector<16x16xf32>
    %77 = arith.addf %73, %76 : vector<16x16xf32>
    %c17 = arith.constant 17 : index
    %78 = memref.load %arg3[%c17] : memref<32xf32, #tpu.memory_space<smem>>
    %79 = vector.broadcast %78 : f32 to vector<16x16xf32>
    %80 = arith.mulf %79, %45 : vector<16x16xf32>
    %81 = arith.addf %77, %80 : vector<16x16xf32>
    %c25 = arith.constant 25 : index
    %82 = memref.load %arg3[%c25] : memref<32xf32, #tpu.memory_space<smem>>
    %83 = vector.broadcast %82 : f32 to vector<16x16xf32>
    %84 = arith.mulf %83, %47 : vector<16x16xf32>
    %85 = arith.addf %81, %84 : vector<16x16xf32>
    %cst_39 = arith.constant dense<0.000000e+00> : vector<16x32xf32>
    %86 = tpu.matmul %85, %17, %cst_39 {dimension_numbers = #tpu.dot_dimension_numbers<[1], [0], [0], [1], [0, 0, 1, 1], [], []>} : vector<16x16xf32>, vector<16x32xf32>, vector<16x32xf32> -> vector<16x32xf32>
    %87 = arith.addf %68, %86 : vector<16x32xf32>
    %cst_40 = arith.constant dense<0.000000e+00> : vector<32x32xf32>
    %88 = tpu.matmul %27, %87, %cst_40 {dimension_numbers = #tpu.dot_dimension_numbers<[1], [0], [0], [1], [0, 0, 1, 1], [], []>} : vector<32x16xf32>, vector<16x32xf32>, vector<32x32xf32> -> vector<32x32xf32>
    %89 = arith.addf %48, %88 : vector<32x32xf32>
    %cst_41 = arith.constant 0.000000e+00 : f32
    %90 = vector.broadcast %cst_41 : f32 to vector<16x32xf32>
    %cst_42 = arith.constant 0.000000e+00 : f32
    %91 = vector.broadcast %cst_42 : f32 to vector<16x16xf32>
    %c2_43 = arith.constant 2 : index
    %92 = memref.load %arg3[%c2_43] : memref<32xf32, #tpu.memory_space<smem>>
    %93 = vector.broadcast %92 : f32 to vector<16x16xf32>
    %94 = arith.mulf %93, %41 : vector<16x16xf32>
    %95 = arith.addf %91, %94 : vector<16x16xf32>
    %c10 = arith.constant 10 : index
    %96 = memref.load %arg3[%c10] : memref<32xf32, #tpu.memory_space<smem>>
    %97 = vector.broadcast %96 : f32 to vector<16x16xf32>
    %98 = arith.mulf %97, %43 : vector<16x16xf32>
    %99 = arith.addf %95, %98 : vector<16x16xf32>
    %c18 = arith.constant 18 : index
    %100 = memref.load %arg3[%c18] : memref<32xf32, #tpu.memory_space<smem>>
    %101 = vector.broadcast %100 : f32 to vector<16x16xf32>
    %102 = arith.mulf %101, %45 : vector<16x16xf32>
    %103 = arith.addf %99, %102 : vector<16x16xf32>
    %c26 = arith.constant 26 : index
    %104 = memref.load %arg3[%c26] : memref<32xf32, #tpu.memory_space<smem>>
    %105 = vector.broadcast %104 : f32 to vector<16x16xf32>
    %106 = arith.mulf %105, %47 : vector<16x16xf32>
    %107 = arith.addf %103, %106 : vector<16x16xf32>
    %cst_44 = arith.constant dense<0.000000e+00> : vector<16x32xf32>
    %108 = tpu.matmul %107, %9, %cst_44 {dimension_numbers = #tpu.dot_dimension_numbers<[1], [0], [0], [1], [0, 0, 1, 1], [], []>} : vector<16x16xf32>, vector<16x32xf32>, vector<16x32xf32> -> vector<16x32xf32>
    %109 = arith.addf %90, %108 : vector<16x32xf32>
    %cst_45 = arith.constant 0.000000e+00 : f32
    %110 = vector.broadcast %cst_45 : f32 to vector<16x16xf32>
    %c3_46 = arith.constant 3 : index
    %111 = memref.load %arg3[%c3_46] : memref<32xf32, #tpu.memory_space<smem>>
    %112 = vector.broadcast %111 : f32 to vector<16x16xf32>
    %113 = arith.mulf %112, %41 : vector<16x16xf32>
    %114 = arith.addf %110, %113 : vector<16x16xf32>
    %c11 = arith.constant 11 : index
    %115 = memref.load %arg3[%c11] : memref<32xf32, #tpu.memory_space<smem>>
    %116 = vector.broadcast %115 : f32 to vector<16x16xf32>
    %117 = arith.mulf %116, %43 : vector<16x16xf32>
    %118 = arith.addf %114, %117 : vector<16x16xf32>
    %c19 = arith.constant 19 : index
    %119 = memref.load %arg3[%c19] : memref<32xf32, #tpu.memory_space<smem>>
    %120 = vector.broadcast %119 : f32 to vector<16x16xf32>
    %121 = arith.mulf %120, %45 : vector<16x16xf32>
    %122 = arith.addf %118, %121 : vector<16x16xf32>
    %c27 = arith.constant 27 : index
    %123 = memref.load %arg3[%c27] : memref<32xf32, #tpu.memory_space<smem>>
    %124 = vector.broadcast %123 : f32 to vector<16x16xf32>
    %125 = arith.mulf %124, %47 : vector<16x16xf32>
    %126 = arith.addf %122, %125 : vector<16x16xf32>
    %cst_47 = arith.constant dense<0.000000e+00> : vector<16x32xf32>
    %127 = tpu.matmul %126, %17, %cst_47 {dimension_numbers = #tpu.dot_dimension_numbers<[1], [0], [0], [1], [0, 0, 1, 1], [], []>} : vector<16x16xf32>, vector<16x32xf32>, vector<16x32xf32> -> vector<16x32xf32>
    %128 = arith.addf %109, %127 : vector<16x32xf32>
    %cst_48 = arith.constant dense<0.000000e+00> : vector<32x32xf32>
    %129 = tpu.matmul %35, %128, %cst_48 {dimension_numbers = #tpu.dot_dimension_numbers<[1], [0], [0], [1], [0, 0, 1, 1], [], []>} : vector<32x16xf32>, vector<16x32xf32>, vector<32x32xf32> -> vector<32x32xf32>
    %130 = arith.addf %89, %129 : vector<32x32xf32>
    %c0_49 = arith.constant 0 : index
    %131 = memref.load %arg4[%c0_49] : memref<2xf32, #tpu.memory_space<smem>>
    %132 = vector.broadcast %131 : f32 to vector<32x32xf32>
    %133 = arith.addf %130, %132 : vector<32x32xf32>
    %c0_50 = arith.constant 0 : index
    %c1_51 = arith.constant 1 : index
    %c1_52 = arith.constant 1 : index
    %134 = vector.load %arg10[%c0_50, %c1_51, %c1_52] : memref<4x34x34xf32, #tpu.memory_space<vmem>>, vector<1x32x32xf32>
    %135 = vector.shape_cast %134 : vector<1x32x32xf32> to vector<32x32xf32>
    %136 = vector.shape_cast %133 : vector<32x32xf32> to vector<1x32x32xf32>
    tpu.vector_store %arg10[%c0_50, %c1_51, %c1_52], %136 {strides = array<i32>} : memref<4x34x34xf32, #tpu.memory_space<vmem>>, vector<1x32x32xf32>,
    %cst_53 = arith.constant 0.000000e+00 : f32
    %137 = vector.broadcast %cst_53 : f32 to vector<32x32xf32>
    %cst_54 = arith.constant 0.000000e+00 : f32
    %138 = vector.broadcast %cst_54 : f32 to vector<16x32xf32>
    %cst_55 = arith.constant 0.000000e+00 : f32
    %139 = vector.broadcast %cst_55 : f32 to vector<16x16xf32>
    %c4 = arith.constant 4 : index
    %140 = memref.load %arg3[%c4] : memref<32xf32, #tpu.memory_space<smem>>
    %141 = vector.broadcast %140 : f32 to vector<16x16xf32>
    %142 = arith.mulf %141, %41 : vector<16x16xf32>
    %143 = arith.addf %139, %142 : vector<16x16xf32>
    %c12 = arith.constant 12 : index
    %144 = memref.load %arg3[%c12] : memref<32xf32, #tpu.memory_space<smem>>
    %145 = vector.broadcast %144 : f32 to vector<16x16xf32>
    %146 = arith.mulf %145, %43 : vector<16x16xf32>
    %147 = arith.addf %143, %146 : vector<16x16xf32>
    %c20 = arith.constant 20 : index
    %148 = memref.load %arg3[%c20] : memref<32xf32, #tpu.memory_space<smem>>
    %149 = vector.broadcast %148 : f32 to vector<16x16xf32>
    %150 = arith.mulf %149, %45 : vector<16x16xf32>
    %151 = arith.addf %147, %150 : vector<16x16xf32>
    %c28 = arith.constant 28 : index
    %152 = memref.load %arg3[%c28] : memref<32xf32, #tpu.memory_space<smem>>
    %153 = vector.broadcast %152 : f32 to vector<16x16xf32>
    %154 = arith.mulf %153, %47 : vector<16x16xf32>
    %155 = arith.addf %151, %154 : vector<16x16xf32>
    %cst_56 = arith.constant dense<0.000000e+00> : vector<16x32xf32>
    %156 = tpu.matmul %155, %9, %cst_56 {dimension_numbers = #tpu.dot_dimension_numbers<[1], [0], [0], [1], [0, 0, 1, 1], [], []>} : vector<16x16xf32>, vector<16x32xf32>, vector<16x32xf32> -> vector<16x32xf32>
    %157 = arith.addf %138, %156 : vector<16x32xf32>
    %cst_57 = arith.constant 0.000000e+00 : f32
    %158 = vector.broadcast %cst_57 : f32 to vector<16x16xf32>
    %c5 = arith.constant 5 : index
    %159 = memref.load %arg3[%c5] : memref<32xf32, #tpu.memory_space<smem>>
    %160 = vector.broadcast %159 : f32 to vector<16x16xf32>
    %161 = arith.mulf %160, %41 : vector<16x16xf32>
    %162 = arith.addf %158, %161 : vector<16x16xf32>
    %c13 = arith.constant 13 : index
    %163 = memref.load %arg3[%c13] : memref<32xf32, #tpu.memory_space<smem>>
    %164 = vector.broadcast %163 : f32 to vector<16x16xf32>
    %165 = arith.mulf %164, %43 : vector<16x16xf32>
    %166 = arith.addf %162, %165 : vector<16x16xf32>
    %c21 = arith.constant 21 : index
    %167 = memref.load %arg3[%c21] : memref<32xf32, #tpu.memory_space<smem>>
    %168 = vector.broadcast %167 : f32 to vector<16x16xf32>
    %169 = arith.mulf %168, %45 : vector<16x16xf32>
    %170 = arith.addf %166, %169 : vector<16x16xf32>
    %c29 = arith.constant 29 : index
    %171 = memref.load %arg3[%c29] : memref<32xf32, #tpu.memory_space<smem>>
    %172 = vector.broadcast %171 : f32 to vector<16x16xf32>
    %173 = arith.mulf %172, %47 : vector<16x16xf32>
    %174 = arith.addf %170, %173 : vector<16x16xf32>
    %cst_58 = arith.constant dense<0.000000e+00> : vector<16x32xf32>
    %175 = tpu.matmul %174, %17, %cst_58 {dimension_numbers = #tpu.dot_dimension_numbers<[1], [0], [0], [1], [0, 0, 1, 1], [], []>} : vector<16x16xf32>, vector<16x32xf32>, vector<16x32xf32> -> vector<16x32xf32>
    %176 = arith.addf %157, %175 : vector<16x32xf32>
    %cst_59 = arith.constant dense<0.000000e+00> : vector<32x32xf32>
    %177 = tpu.matmul %27, %176, %cst_59 {dimension_numbers = #tpu.dot_dimension_numbers<[1], [0], [0], [1], [0, 0, 1, 1], [], []>} : vector<32x16xf32>, vector<16x32xf32>, vector<32x32xf32> -> vector<32x32xf32>
    %178 = arith.addf %137, %177 : vector<32x32xf32>
    %cst_60 = arith.constant 0.000000e+00 : f32
    %179 = vector.broadcast %cst_60 : f32 to vector<16x32xf32>
    %cst_61 = arith.constant 0.000000e+00 : f32
    %180 = vector.broadcast %cst_61 : f32 to vector<16x16xf32>
    %c6 = arith.constant 6 : index
    %181 = memref.load %arg3[%c6] : memref<32xf32, #tpu.memory_space<smem>>
    %182 = vector.broadcast %181 : f32 to vector<16x16xf32>
    %183 = arith.mulf %182, %41 : vector<16x16xf32>
    %184 = arith.addf %180, %183 : vector<16x16xf32>
    %c14 = arith.constant 14 : index
    %185 = memref.load %arg3[%c14] : memref<32xf32, #tpu.memory_space<smem>>
    %186 = vector.broadcast %185 : f32 to vector<16x16xf32>
    %187 = arith.mulf %186, %43 : vector<16x16xf32>
    %188 = arith.addf %184, %187 : vector<16x16xf32>
    %c22 = arith.constant 22 : index
    %189 = memref.load %arg3[%c22] : memref<32xf32, #tpu.memory_space<smem>>
    %190 = vector.broadcast %189 : f32 to vector<16x16xf32>
    %191 = arith.mulf %190, %45 : vector<16x16xf32>
    %192 = arith.addf %188, %191 : vector<16x16xf32>
    %c30 = arith.constant 30 : index
    %193 = memref.load %arg3[%c30] : memref<32xf32, #tpu.memory_space<smem>>
    %194 = vector.broadcast %193 : f32 to vector<16x16xf32>
    %195 = arith.mulf %194, %47 : vector<16x16xf32>
    %196 = arith.addf %192, %195 : vector<16x16xf32>
    %cst_62 = arith.constant dense<0.000000e+00> : vector<16x32xf32>
    %197 = tpu.matmul %196, %9, %cst_62 {dimension_numbers = #tpu.dot_dimension_numbers<[1], [0], [0], [1], [0, 0, 1, 1], [], []>} : vector<16x16xf32>, vector<16x32xf32>, vector<16x32xf32> -> vector<16x32xf32>
    %198 = arith.addf %179, %197 : vector<16x32xf32>
    %cst_63 = arith.constant 0.000000e+00 : f32
    %199 = vector.broadcast %cst_63 : f32 to vector<16x16xf32>
    %c7 = arith.constant 7 : index
    %200 = memref.load %arg3[%c7] : memref<32xf32, #tpu.memory_space<smem>>
    %201 = vector.broadcast %200 : f32 to vector<16x16xf32>
    %202 = arith.mulf %201, %41 : vector<16x16xf32>
    %203 = arith.addf %199, %202 : vector<16x16xf32>
    %c15 = arith.constant 15 : index
    %204 = memref.load %arg3[%c15] : memref<32xf32, #tpu.memory_space<smem>>
    %205 = vector.broadcast %204 : f32 to vector<16x16xf32>
    %206 = arith.mulf %205, %43 : vector<16x16xf32>
    %207 = arith.addf %203, %206 : vector<16x16xf32>
    %c23 = arith.constant 23 : index
    %208 = memref.load %arg3[%c23] : memref<32xf32, #tpu.memory_space<smem>>
    %209 = vector.broadcast %208 : f32 to vector<16x16xf32>
    %210 = arith.mulf %209, %45 : vector<16x16xf32>
    %211 = arith.addf %207, %210 : vector<16x16xf32>
    %c31 = arith.constant 31 : index
    %212 = memref.load %arg3[%c31] : memref<32xf32, #tpu.memory_space<smem>>
    %213 = vector.broadcast %212 : f32 to vector<16x16xf32>
    %214 = arith.mulf %213, %47 : vector<16x16xf32>
    %215 = arith.addf %211, %214 : vector<16x16xf32>
    %cst_64 = arith.constant dense<0.000000e+00> : vector<16x32xf32>
    %216 = tpu.matmul %215, %17, %cst_64 {dimension_numbers = #tpu.dot_dimension_numbers<[1], [0], [0], [1], [0, 0, 1, 1], [], []>} : vector<16x16xf32>, vector<16x32xf32>, vector<16x32xf32> -> vector<16x32xf32>
    %217 = arith.addf %198, %216 : vector<16x32xf32>
    %cst_65 = arith.constant dense<0.000000e+00> : vector<32x32xf32>
    %218 = tpu.matmul %35, %217, %cst_65 {dimension_numbers = #tpu.dot_dimension_numbers<[1], [0], [0], [1], [0, 0, 1, 1], [], []>} : vector<32x16xf32>, vector<16x32xf32>, vector<32x32xf32> -> vector<32x32xf32>
    %219 = arith.addf %178, %218 : vector<32x32xf32>
    %c1_66 = arith.constant 1 : index
    %220 = memref.load %arg4[%c1_66] : memref<2xf32, #tpu.memory_space<smem>>
    %221 = vector.broadcast %220 : f32 to vector<32x32xf32>
    %222 = arith.addf %219, %221 : vector<32x32xf32>
    %c1_67 = arith.constant 1 : index
    %c1_68 = arith.constant 1 : index
    %c1_69 = arith.constant 1 : index
    %223 = vector.load %arg10[%c1_67, %c1_68, %c1_69] : memref<4x34x34xf32, #tpu.memory_space<vmem>>, vector<1x32x32xf32>
    %224 = vector.shape_cast %223 : vector<1x32x32xf32> to vector<32x32xf32>
    %225 = vector.shape_cast %222 : vector<32x32xf32> to vector<1x32x32xf32>
    tpu.vector_store %arg10[%c1_67, %c1_68, %c1_69], %225 {strides = array<i32>} : memref<4x34x34xf32, #tpu.memory_space<vmem>>, vector<1x32x32xf32>,
    %c0_70 = arith.constant 0 : index
    %c0_71 = arith.constant 0 : index
    %c0_72 = arith.constant 0 : index
    %c0_73 = arith.constant 0 : index
    %226 = vector.load %arg2[%c0_70, %c0_71, %c0_72, %c0_73] : memref<1x2x32x32xf32, #tpu.memory_space<vmem>>, vector<1x1x32x32xf32>
    %227 = vector.shape_cast %226 : vector<1x1x32x32xf32> to vector<32x32xf32>
    %c2_74 = arith.constant 2 : index
    %c1_75 = arith.constant 1 : index
    %c1_76 = arith.constant 1 : index
    %228 = vector.load %arg10[%c2_74, %c1_75, %c1_76] : memref<4x34x34xf32, #tpu.memory_space<vmem>>, vector<1x32x32xf32>
    %229 = vector.shape_cast %228 : vector<1x32x32xf32> to vector<32x32xf32>
    %230 = vector.shape_cast %227 : vector<32x32xf32> to vector<1x32x32xf32>
    tpu.vector_store %arg10[%c2_74, %c1_75, %c1_76], %230 {strides = array<i32>} : memref<4x34x34xf32, #tpu.memory_space<vmem>>, vector<1x32x32xf32>,
    %c0_77 = arith.constant 0 : index
    %c1_78 = arith.constant 1 : index
    %c0_79 = arith.constant 0 : index
    %c0_80 = arith.constant 0 : index
    %231 = vector.load %arg2[%c0_77, %c1_78, %c0_79, %c0_80] : memref<1x2x32x32xf32, #tpu.memory_space<vmem>>, vector<1x1x32x32xf32>
    %232 = vector.shape_cast %231 : vector<1x1x32x32xf32> to vector<32x32xf32>
    %c3_81 = arith.constant 3 : index
    %c1_82 = arith.constant 1 : index
    %c1_83 = arith.constant 1 : index
    %233 = vector.load %arg10[%c3_81, %c1_82, %c1_83] : memref<4x34x34xf32, #tpu.memory_space<vmem>>, vector<1x32x32xf32>
    %234 = vector.shape_cast %233 : vector<1x32x32xf32> to vector<32x32xf32>
    %235 = vector.shape_cast %232 : vector<32x32xf32> to vector<1x32x32xf32>
    tpu.vector_store %arg10[%c3_81, %c1_82, %c1_83], %235 {strides = array<i32>} : memref<4x34x34xf32, #tpu.memory_space<vmem>>, vector<1x32x32xf32>,
    %cst_84 = arith.constant 0.000000e+00 : f32
    %236 = vector.broadcast %cst_84 : f32 to vector<32x32xf32>
    %c0_85 = arith.constant 0 : index
    %237 = memref.load %arg6[%c0_85] : memref<2xf32, #tpu.memory_space<smem>>
    %238 = vector.broadcast %237 : f32 to vector<32x32xf32>
    %239 = arith.addf %236, %238 : vector<32x32xf32>
    %c0_86 = arith.constant 0 : index
    %240 = memref.load %arg5[%c0_86] : memref<72xf32, #tpu.memory_space<smem>>
    %c0_87 = arith.constant 0 : index
    %c0_88 = arith.constant 0 : index
    %c0_89 = arith.constant 0 : index
    %241 = vector.load %arg10[%c0_87, %c0_88, %c0_89] : memref<4x34x34xf32, #tpu.memory_space<vmem>>, vector<1x32x32xf32>
    %242 = vector.shape_cast %241 : vector<1x32x32xf32> to vector<32x32xf32>
    %243 = vector.broadcast %240 : f32 to vector<32x32xf32>
    %244 = arith.mulf %243, %242 : vector<32x32xf32>
    %245 = arith.addf %239, %244 : vector<32x32xf32>
    %c1_90 = arith.constant 1 : index
    %246 = memref.load %arg5[%c1_90] : memref<72xf32, #tpu.memory_space<smem>>
    %c0_91 = arith.constant 0 : index
    %c0_92 = arith.constant 0 : index
    %c1_93 = arith.constant 1 : index
    %247 = vector.load %arg10[%c0_91, %c0_92, %c1_93] : memref<4x34x34xf32, #tpu.memory_space<vmem>>, vector<1x32x32xf32>
    %248 = vector.shape_cast %247 : vector<1x32x32xf32> to vector<32x32xf32>
    %249 = vector.broadcast %246 : f32 to vector<32x32xf32>
    %250 = arith.mulf %249, %248 : vector<32x32xf32>
    %251 = arith.addf %245, %250 : vector<32x32xf32>
    %c2_94 = arith.constant 2 : index
    %252 = memref.load %arg5[%c2_94] : memref<72xf32, #tpu.memory_space<smem>>
    %c0_95 = arith.constant 0 : index
    %c0_96 = arith.constant 0 : index
    %c2_97 = arith.constant 2 : index
    %253 = vector.load %arg10[%c0_95, %c0_96, %c2_97] : memref<4x34x34xf32, #tpu.memory_space<vmem>>, vector<1x32x32xf32>
    %254 = vector.shape_cast %253 : vector<1x32x32xf32> to vector<32x32xf32>
    %255 = vector.broadcast %252 : f32 to vector<32x32xf32>
    %256 = arith.mulf %255, %254 : vector<32x32xf32>
    %257 = arith.addf %251, %256 : vector<32x32xf32>
    %c3_98 = arith.constant 3 : index
    %258 = memref.load %arg5[%c3_98] : memref<72xf32, #tpu.memory_space<smem>>
    %c0_99 = arith.constant 0 : index
    %c1_100 = arith.constant 1 : index
    %c0_101 = arith.constant 0 : index
    %259 = vector.load %arg10[%c0_99, %c1_100, %c0_101] : memref<4x34x34xf32, #tpu.memory_space<vmem>>, vector<1x32x32xf32>
    %260 = vector.shape_cast %259 : vector<1x32x32xf32> to vector<32x32xf32>
    %261 = vector.broadcast %258 : f32 to vector<32x32xf32>
    %262 = arith.mulf %261, %260 : vector<32x32xf32>
    %263 = arith.addf %257, %262 : vector<32x32xf32>
    %c4_102 = arith.constant 4 : index
    %264 = memref.load %arg5[%c4_102] : memref<72xf32, #tpu.memory_space<smem>>
    %c0_103 = arith.constant 0 : index
    %c1_104 = arith.constant 1 : index
    %c1_105 = arith.constant 1 : index
    %265 = vector.load %arg10[%c0_103, %c1_104, %c1_105] : memref<4x34x34xf32, #tpu.memory_space<vmem>>, vector<1x32x32xf32>
    %266 = vector.shape_cast %265 : vector<1x32x32xf32> to vector<32x32xf32>
    %267 = vector.broadcast %264 : f32 to vector<32x32xf32>
    %268 = arith.mulf %267, %266 : vector<32x32xf32>
    %269 = arith.addf %263, %268 : vector<32x32xf32>
    %c5_106 = arith.constant 5 : index
    %270 = memref.load %arg5[%c5_106] : memref<72xf32, #tpu.memory_space<smem>>
    %c0_107 = arith.constant 0 : index
    %c1_108 = arith.constant 1 : index
    %c2_109 = arith.constant 2 : index
    %271 = vector.load %arg10[%c0_107, %c1_108, %c2_109] : memref<4x34x34xf32, #tpu.memory_space<vmem>>, vector<1x32x32xf32>
    %272 = vector.shape_cast %271 : vector<1x32x32xf32> to vector<32x32xf32>
    %273 = vector.broadcast %270 : f32 to vector<32x32xf32>
    %274 = arith.mulf %273, %272 : vector<32x32xf32>
    %275 = arith.addf %269, %274 : vector<32x32xf32>
    %c6_110 = arith.constant 6 : index
    %276 = memref.load %arg5[%c6_110] : memref<72xf32, #tpu.memory_space<smem>>
    %c0_111 = arith.constant 0 : index
    %c2_112 = arith.constant 2 : index
    %c0_113 = arith.constant 0 : index
    %277 = vector.load %arg10[%c0_111, %c2_112, %c0_113] : memref<4x34x34xf32, #tpu.memory_space<vmem>>, vector<1x32x32xf32>
    %278 = vector.shape_cast %277 : vector<1x32x32xf32> to vector<32x32xf32>
    %279 = vector.broadcast %276 : f32 to vector<32x32xf32>
    %280 = arith.mulf %279, %278 : vector<32x32xf32>
    %281 = arith.addf %275, %280 : vector<32x32xf32>
    %c7_114 = arith.constant 7 : index
    %282 = memref.load %arg5[%c7_114] : memref<72xf32, #tpu.memory_space<smem>>
    %c0_115 = arith.constant 0 : index
    %c2_116 = arith.constant 2 : index
    %c1_117 = arith.constant 1 : index
    %283 = vector.load %arg10[%c0_115, %c2_116, %c1_117] : memref<4x34x34xf32, #tpu.memory_space<vmem>>, vector<1x32x32xf32>
    %284 = vector.shape_cast %283 : vector<1x32x32xf32> to vector<32x32xf32>
    %285 = vector.broadcast %282 : f32 to vector<32x32xf32>
    %286 = arith.mulf %285, %284 : vector<32x32xf32>
    %287 = arith.addf %281, %286 : vector<32x32xf32>
    %c8_118 = arith.constant 8 : index
    %288 = memref.load %arg5[%c8_118] : memref<72xf32, #tpu.memory_space<smem>>
    %c0_119 = arith.constant 0 : index
    %c2_120 = arith.constant 2 : index
    %c2_121 = arith.constant 2 : index
    %289 = vector.load %arg10[%c0_119, %c2_120, %c2_121] : memref<4x34x34xf32, #tpu.memory_space<vmem>>, vector<1x32x32xf32>
    %290 = vector.shape_cast %289 : vector<1x32x32xf32> to vector<32x32xf32>
    %291 = vector.broadcast %288 : f32 to vector<32x32xf32>
    %292 = arith.mulf %291, %290 : vector<32x32xf32>
    %293 = arith.addf %287, %292 : vector<32x32xf32>
    %c9_122 = arith.constant 9 : index
    %294 = memref.load %arg5[%c9_122] : memref<72xf32, #tpu.memory_space<smem>>
    %c1_123 = arith.constant 1 : index
    %c0_124 = arith.constant 0 : index
    %c0_125 = arith.constant 0 : index
    %295 = vector.load %arg10[%c1_123, %c0_124, %c0_125] : memref<4x34x34xf32, #tpu.memory_space<vmem>>, vector<1x32x32xf32>
    %296 = vector.shape_cast %295 : vector<1x32x32xf32> to vector<32x32xf32>
    %297 = vector.broadcast %294 : f32 to vector<32x32xf32>
    %298 = arith.mulf %297, %296 : vector<32x32xf32>
    %299 = arith.addf %293, %298 : vector<32x32xf32>
    %c10_126 = arith.constant 10 : index
    %300 = memref.load %arg5[%c10_126] : memref<72xf32, #tpu.memory_space<smem>>
    %c1_127 = arith.constant 1 : index
    %c0_128 = arith.constant 0 : index
    %c1_129 = arith.constant 1 : index
    %301 = vector.load %arg10[%c1_127, %c0_128, %c1_129] : memref<4x34x34xf32, #tpu.memory_space<vmem>>, vector<1x32x32xf32>
    %302 = vector.shape_cast %301 : vector<1x32x32xf32> to vector<32x32xf32>
    %303 = vector.broadcast %300 : f32 to vector<32x32xf32>
    %304 = arith.mulf %303, %302 : vector<32x32xf32>
    %305 = arith.addf %299, %304 : vector<32x32xf32>
    %c11_130 = arith.constant 11 : index
    %306 = memref.load %arg5[%c11_130] : memref<72xf32, #tpu.memory_space<smem>>
    %c1_131 = arith.constant 1 : index
    %c0_132 = arith.constant 0 : index
    %c2_133 = arith.constant 2 : index
    %307 = vector.load %arg10[%c1_131, %c0_132, %c2_133] : memref<4x34x34xf32, #tpu.memory_space<vmem>>, vector<1x32x32xf32>
    %308 = vector.shape_cast %307 : vector<1x32x32xf32> to vector<32x32xf32>
    %309 = vector.broadcast %306 : f32 to vector<32x32xf32>
    %310 = arith.mulf %309, %308 : vector<32x32xf32>
    %311 = arith.addf %305, %310 : vector<32x32xf32>
    %c12_134 = arith.constant 12 : index
    %312 = memref.load %arg5[%c12_134] : memref<72xf32, #tpu.memory_space<smem>>
    %c1_135 = arith.constant 1 : index
    %c1_136 = arith.constant 1 : index
    %c0_137 = arith.constant 0 : index
    %313 = vector.load %arg10[%c1_135, %c1_136, %c0_137] : memref<4x34x34xf32, #tpu.memory_space<vmem>>, vector<1x32x32xf32>
    %314 = vector.shape_cast %313 : vector<1x32x32xf32> to vector<32x32xf32>
    %315 = vector.broadcast %312 : f32 to vector<32x32xf32>
    %316 = arith.mulf %315, %314 : vector<32x32xf32>
    %317 = arith.addf %311, %316 : vector<32x32xf32>
    %c13_138 = arith.constant 13 : index
    %318 = memref.load %arg5[%c13_138] : memref<72xf32, #tpu.memory_space<smem>>
    %c1_139 = arith.constant 1 : index
    %c1_140 = arith.constant 1 : index
    %c1_141 = arith.constant 1 : index
    %319 = vector.load %arg10[%c1_139, %c1_140, %c1_141] : memref<4x34x34xf32, #tpu.memory_space<vmem>>, vector<1x32x32xf32>
    %320 = vector.shape_cast %319 : vector<1x32x32xf32> to vector<32x32xf32>
    %321 = vector.broadcast %318 : f32 to vector<32x32xf32>
    %322 = arith.mulf %321, %320 : vector<32x32xf32>
    %323 = arith.addf %317, %322 : vector<32x32xf32>
    %c14_142 = arith.constant 14 : index
    %324 = memref.load %arg5[%c14_142] : memref<72xf32, #tpu.memory_space<smem>>
    %c1_143 = arith.constant 1 : index
    %c1_144 = arith.constant 1 : index
    %c2_145 = arith.constant 2 : index
    %325 = vector.load %arg10[%c1_143, %c1_144, %c2_145] : memref<4x34x34xf32, #tpu.memory_space<vmem>>, vector<1x32x32xf32>
    %326 = vector.shape_cast %325 : vector<1x32x32xf32> to vector<32x32xf32>
    %327 = vector.broadcast %324 : f32 to vector<32x32xf32>
    %328 = arith.mulf %327, %326 : vector<32x32xf32>
    %329 = arith.addf %323, %328 : vector<32x32xf32>
    %c15_146 = arith.constant 15 : index
    %330 = memref.load %arg5[%c15_146] : memref<72xf32, #tpu.memory_space<smem>>
    %c1_147 = arith.constant 1 : index
    %c2_148 = arith.constant 2 : index
    %c0_149 = arith.constant 0 : index
    %331 = vector.load %arg10[%c1_147, %c2_148, %c0_149] : memref<4x34x34xf32, #tpu.memory_space<vmem>>, vector<1x32x32xf32>
    %332 = vector.shape_cast %331 : vector<1x32x32xf32> to vector<32x32xf32>
    %333 = vector.broadcast %330 : f32 to vector<32x32xf32>
    %334 = arith.mulf %333, %332 : vector<32x32xf32>
    %335 = arith.addf %329, %334 : vector<32x32xf32>
    %c16_150 = arith.constant 16 : index
    %336 = memref.load %arg5[%c16_150] : memref<72xf32, #tpu.memory_space<smem>>
    %c1_151 = arith.constant 1 : index
    %c2_152 = arith.constant 2 : index
    %c1_153 = arith.constant 1 : index
    %337 = vector.load %arg10[%c1_151, %c2_152, %c1_153] : memref<4x34x34xf32, #tpu.memory_space<vmem>>, vector<1x32x32xf32>
    %338 = vector.shape_cast %337 : vector<1x32x32xf32> to vector<32x32xf32>
    %339 = vector.broadcast %336 : f32 to vector<32x32xf32>
    %340 = arith.mulf %339, %338 : vector<32x32xf32>
    %341 = arith.addf %335, %340 : vector<32x32xf32>
    %c17_154 = arith.constant 17 : index
    %342 = memref.load %arg5[%c17_154] : memref<72xf32, #tpu.memory_space<smem>>
    %c1_155 = arith.constant 1 : index
    %c2_156 = arith.constant 2 : index
    %c2_157 = arith.constant 2 : index
    %343 = vector.load %arg10[%c1_155, %c2_156, %c2_157] : memref<4x34x34xf32, #tpu.memory_space<vmem>>, vector<1x32x32xf32>
    %344 = vector.shape_cast %343 : vector<1x32x32xf32> to vector<32x32xf32>
    %345 = vector.broadcast %342 : f32 to vector<32x32xf32>
    %346 = arith.mulf %345, %344 : vector<32x32xf32>
    %347 = arith.addf %341, %346 : vector<32x32xf32>
    %c18_158 = arith.constant 18 : index
    %348 = memref.load %arg5[%c18_158] : memref<72xf32, #tpu.memory_space<smem>>
    %c2_159 = arith.constant 2 : index
    %c0_160 = arith.constant 0 : index
    %c0_161 = arith.constant 0 : index
    %349 = vector.load %arg10[%c2_159, %c0_160, %c0_161] : memref<4x34x34xf32, #tpu.memory_space<vmem>>, vector<1x32x32xf32>
    %350 = vector.shape_cast %349 : vector<1x32x32xf32> to vector<32x32xf32>
    %351 = vector.broadcast %348 : f32 to vector<32x32xf32>
    %352 = arith.mulf %351, %350 : vector<32x32xf32>
    %353 = arith.addf %347, %352 : vector<32x32xf32>
    %c19_162 = arith.constant 19 : index
    %354 = memref.load %arg5[%c19_162] : memref<72xf32, #tpu.memory_space<smem>>
    %c2_163 = arith.constant 2 : index
    %c0_164 = arith.constant 0 : index
    %c1_165 = arith.constant 1 : index
    %355 = vector.load %arg10[%c2_163, %c0_164, %c1_165] : memref<4x34x34xf32, #tpu.memory_space<vmem>>, vector<1x32x32xf32>
    %356 = vector.shape_cast %355 : vector<1x32x32xf32> to vector<32x32xf32>
    %357 = vector.broadcast %354 : f32 to vector<32x32xf32>
    %358 = arith.mulf %357, %356 : vector<32x32xf32>
    %359 = arith.addf %353, %358 : vector<32x32xf32>
    %c20_166 = arith.constant 20 : index
    %360 = memref.load %arg5[%c20_166] : memref<72xf32, #tpu.memory_space<smem>>
    %c2_167 = arith.constant 2 : index
    %c0_168 = arith.constant 0 : index
    %c2_169 = arith.constant 2 : index
    %361 = vector.load %arg10[%c2_167, %c0_168, %c2_169] : memref<4x34x34xf32, #tpu.memory_space<vmem>>, vector<1x32x32xf32>
    %362 = vector.shape_cast %361 : vector<1x32x32xf32> to vector<32x32xf32>
    %363 = vector.broadcast %360 : f32 to vector<32x32xf32>
    %364 = arith.mulf %363, %362 : vector<32x32xf32>
    %365 = arith.addf %359, %364 : vector<32x32xf32>
    %c21_170 = arith.constant 21 : index
    %366 = memref.load %arg5[%c21_170] : memref<72xf32, #tpu.memory_space<smem>>
    %c2_171 = arith.constant 2 : index
    %c1_172 = arith.constant 1 : index
    %c0_173 = arith.constant 0 : index
    %367 = vector.load %arg10[%c2_171, %c1_172, %c0_173] : memref<4x34x34xf32, #tpu.memory_space<vmem>>, vector<1x32x32xf32>
    %368 = vector.shape_cast %367 : vector<1x32x32xf32> to vector<32x32xf32>
    %369 = vector.broadcast %366 : f32 to vector<32x32xf32>
    %370 = arith.mulf %369, %368 : vector<32x32xf32>
    %371 = arith.addf %365, %370 : vector<32x32xf32>
    %c22_174 = arith.constant 22 : index
    %372 = memref.load %arg5[%c22_174] : memref<72xf32, #tpu.memory_space<smem>>
    %c2_175 = arith.constant 2 : index
    %c1_176 = arith.constant 1 : index
    %c1_177 = arith.constant 1 : index
    %373 = vector.load %arg10[%c2_175, %c1_176, %c1_177] : memref<4x34x34xf32, #tpu.memory_space<vmem>>, vector<1x32x32xf32>
    %374 = vector.shape_cast %373 : vector<1x32x32xf32> to vector<32x32xf32>
    %375 = vector.broadcast %372 : f32 to vector<32x32xf32>
    %376 = arith.mulf %375, %374 : vector<32x32xf32>
    %377 = arith.addf %371, %376 : vector<32x32xf32>
    %c23_178 = arith.constant 23 : index
    %378 = memref.load %arg5[%c23_178] : memref<72xf32, #tpu.memory_space<smem>>
    %c2_179 = arith.constant 2 : index
    %c1_180 = arith.constant 1 : index
    %c2_181 = arith.constant 2 : index
    %379 = vector.load %arg10[%c2_179, %c1_180, %c2_181] : memref<4x34x34xf32, #tpu.memory_space<vmem>>, vector<1x32x32xf32>
    %380 = vector.shape_cast %379 : vector<1x32x32xf32> to vector<32x32xf32>
    %381 = vector.broadcast %378 : f32 to vector<32x32xf32>
    %382 = arith.mulf %381, %380 : vector<32x32xf32>
    %383 = arith.addf %377, %382 : vector<32x32xf32>
    %c24_182 = arith.constant 24 : index
    %384 = memref.load %arg5[%c24_182] : memref<72xf32, #tpu.memory_space<smem>>
    %c2_183 = arith.constant 2 : index
    %c2_184 = arith.constant 2 : index
    %c0_185 = arith.constant 0 : index
    %385 = vector.load %arg10[%c2_183, %c2_184, %c0_185] : memref<4x34x34xf32, #tpu.memory_space<vmem>>, vector<1x32x32xf32>
    %386 = vector.shape_cast %385 : vector<1x32x32xf32> to vector<32x32xf32>
    %387 = vector.broadcast %384 : f32 to vector<32x32xf32>
    %388 = arith.mulf %387, %386 : vector<32x32xf32>
    %389 = arith.addf %383, %388 : vector<32x32xf32>
    %c25_186 = arith.constant 25 : index
    %390 = memref.load %arg5[%c25_186] : memref<72xf32, #tpu.memory_space<smem>>
    %c2_187 = arith.constant 2 : index
    %c2_188 = arith.constant 2 : index
    %c1_189 = arith.constant 1 : index
    %391 = vector.load %arg10[%c2_187, %c2_188, %c1_189] : memref<4x34x34xf32, #tpu.memory_space<vmem>>, vector<1x32x32xf32>
    %392 = vector.shape_cast %391 : vector<1x32x32xf32> to vector<32x32xf32>
    %393 = vector.broadcast %390 : f32 to vector<32x32xf32>
    %394 = arith.mulf %393, %392 : vector<32x32xf32>
    %395 = arith.addf %389, %394 : vector<32x32xf32>
    %c26_190 = arith.constant 26 : index
    %396 = memref.load %arg5[%c26_190] : memref<72xf32, #tpu.memory_space<smem>>
    %c2_191 = arith.constant 2 : index
    %c2_192 = arith.constant 2 : index
    %c2_193 = arith.constant 2 : index
    %397 = vector.load %arg10[%c2_191, %c2_192, %c2_193] : memref<4x34x34xf32, #tpu.memory_space<vmem>>, vector<1x32x32xf32>
    %398 = vector.shape_cast %397 : vector<1x32x32xf32> to vector<32x32xf32>
    %399 = vector.broadcast %396 : f32 to vector<32x32xf32>
    %400 = arith.mulf %399, %398 : vector<32x32xf32>
    %401 = arith.addf %395, %400 : vector<32x32xf32>
    %c27_194 = arith.constant 27 : index
    %402 = memref.load %arg5[%c27_194] : memref<72xf32, #tpu.memory_space<smem>>
    %c3_195 = arith.constant 3 : index
    %c0_196 = arith.constant 0 : index
    %c0_197 = arith.constant 0 : index
    %403 = vector.load %arg10[%c3_195, %c0_196, %c0_197] : memref<4x34x34xf32, #tpu.memory_space<vmem>>, vector<1x32x32xf32>
    %404 = vector.shape_cast %403 : vector<1x32x32xf32> to vector<32x32xf32>
    %405 = vector.broadcast %402 : f32 to vector<32x32xf32>
    %406 = arith.mulf %405, %404 : vector<32x32xf32>
    %407 = arith.addf %401, %406 : vector<32x32xf32>
    %c28_198 = arith.constant 28 : index
    %408 = memref.load %arg5[%c28_198] : memref<72xf32, #tpu.memory_space<smem>>
    %c3_199 = arith.constant 3 : index
    %c0_200 = arith.constant 0 : index
    %c1_201 = arith.constant 1 : index
    %409 = vector.load %arg10[%c3_199, %c0_200, %c1_201] : memref<4x34x34xf32, #tpu.memory_space<vmem>>, vector<1x32x32xf32>
    %410 = vector.shape_cast %409 : vector<1x32x32xf32> to vector<32x32xf32>
    %411 = vector.broadcast %408 : f32 to vector<32x32xf32>
    %412 = arith.mulf %411, %410 : vector<32x32xf32>
    %413 = arith.addf %407, %412 : vector<32x32xf32>
    %c29_202 = arith.constant 29 : index
    %414 = memref.load %arg5[%c29_202] : memref<72xf32, #tpu.memory_space<smem>>
    %c3_203 = arith.constant 3 : index
    %c0_204 = arith.constant 0 : index
    %c2_205 = arith.constant 2 : index
    %415 = vector.load %arg10[%c3_203, %c0_204, %c2_205] : memref<4x34x34xf32, #tpu.memory_space<vmem>>, vector<1x32x32xf32>
    %416 = vector.shape_cast %415 : vector<1x32x32xf32> to vector<32x32xf32>
    %417 = vector.broadcast %414 : f32 to vector<32x32xf32>
    %418 = arith.mulf %417, %416 : vector<32x32xf32>
    %419 = arith.addf %413, %418 : vector<32x32xf32>
    %c30_206 = arith.constant 30 : index
    %420 = memref.load %arg5[%c30_206] : memref<72xf32, #tpu.memory_space<smem>>
    %c3_207 = arith.constant 3 : index
    %c1_208 = arith.constant 1 : index
    %c0_209 = arith.constant 0 : index
    %421 = vector.load %arg10[%c3_207, %c1_208, %c0_209] : memref<4x34x34xf32, #tpu.memory_space<vmem>>, vector<1x32x32xf32>
    %422 = vector.shape_cast %421 : vector<1x32x32xf32> to vector<32x32xf32>
    %423 = vector.broadcast %420 : f32 to vector<32x32xf32>
    %424 = arith.mulf %423, %422 : vector<32x32xf32>
    %425 = arith.addf %419, %424 : vector<32x32xf32>
    %c31_210 = arith.constant 31 : index
    %426 = memref.load %arg5[%c31_210] : memref<72xf32, #tpu.memory_space<smem>>
    %c3_211 = arith.constant 3 : index
    %c1_212 = arith.constant 1 : index
    %c1_213 = arith.constant 1 : index
    %427 = vector.load %arg10[%c3_211, %c1_212, %c1_213] : memref<4x34x34xf32, #tpu.memory_space<vmem>>, vector<1x32x32xf32>
    %428 = vector.shape_cast %427 : vector<1x32x32xf32> to vector<32x32xf32>
    %429 = vector.broadcast %426 : f32 to vector<32x32xf32>
    %430 = arith.mulf %429, %428 : vector<32x32xf32>
    %431 = arith.addf %425, %430 : vector<32x32xf32>
    %c32 = arith.constant 32 : index
    %432 = memref.load %arg5[%c32] : memref<72xf32, #tpu.memory_space<smem>>
    %c3_214 = arith.constant 3 : index
    %c1_215 = arith.constant 1 : index
    %c2_216 = arith.constant 2 : index
    %433 = vector.load %arg10[%c3_214, %c1_215, %c2_216] : memref<4x34x34xf32, #tpu.memory_space<vmem>>, vector<1x32x32xf32>
    %434 = vector.shape_cast %433 : vector<1x32x32xf32> to vector<32x32xf32>
    %435 = vector.broadcast %432 : f32 to vector<32x32xf32>
    %436 = arith.mulf %435, %434 : vector<32x32xf32>
    %437 = arith.addf %431, %436 : vector<32x32xf32>
    %c33 = arith.constant 33 : index
    %438 = memref.load %arg5[%c33] : memref<72xf32, #tpu.memory_space<smem>>
    %c3_217 = arith.constant 3 : index
    %c2_218 = arith.constant 2 : index
    %c0_219 = arith.constant 0 : index
    %439 = vector.load %arg10[%c3_217, %c2_218, %c0_219] : memref<4x34x34xf32, #tpu.memory_space<vmem>>, vector<1x32x32xf32>
    %440 = vector.shape_cast %439 : vector<1x32x32xf32> to vector<32x32xf32>
    %441 = vector.broadcast %438 : f32 to vector<32x32xf32>
    %442 = arith.mulf %441, %440 : vector<32x32xf32>
    %443 = arith.addf %437, %442 : vector<32x32xf32>
    %c34 = arith.constant 34 : index
    %444 = memref.load %arg5[%c34] : memref<72xf32, #tpu.memory_space<smem>>
    %c3_220 = arith.constant 3 : index
    %c2_221 = arith.constant 2 : index
    %c1_222 = arith.constant 1 : index
    %445 = vector.load %arg10[%c3_220, %c2_221, %c1_222] : memref<4x34x34xf32, #tpu.memory_space<vmem>>, vector<1x32x32xf32>
    %446 = vector.shape_cast %445 : vector<1x32x32xf32> to vector<32x32xf32>
    %447 = vector.broadcast %444 : f32 to vector<32x32xf32>
    %448 = arith.mulf %447, %446 : vector<32x32xf32>
    %449 = arith.addf %443, %448 : vector<32x32xf32>
    %c35 = arith.constant 35 : index
    %450 = memref.load %arg5[%c35] : memref<72xf32, #tpu.memory_space<smem>>
    %c3_223 = arith.constant 3 : index
    %c2_224 = arith.constant 2 : index
    %c2_225 = arith.constant 2 : index
    %451 = vector.load %arg10[%c3_223, %c2_224, %c2_225] : memref<4x34x34xf32, #tpu.memory_space<vmem>>, vector<1x32x32xf32>
    %452 = vector.shape_cast %451 : vector<1x32x32xf32> to vector<32x32xf32>
    %453 = vector.broadcast %450 : f32 to vector<32x32xf32>
    %454 = arith.mulf %453, %452 : vector<32x32xf32>
    %455 = arith.addf %449, %454 : vector<32x32xf32>
    %cst_226 = arith.constant 0.000000e+00 : f32
    %456 = vector.broadcast %cst_226 : f32 to vector<32x32xf32>
    %457 = arith.maximumf %455, %456 : vector<32x32xf32>
    %c0_227 = arith.constant 0 : index
    %c1_228 = arith.constant 1 : index
    %c1_229 = arith.constant 1 : index
    %458 = vector.load %arg11[%c0_227, %c1_228, %c1_229] : memref<2x34x34xf32, #tpu.memory_space<vmem>>, vector<1x32x32xf32>
    %459 = vector.shape_cast %458 : vector<1x32x32xf32> to vector<32x32xf32>
    %460 = vector.shape_cast %457 : vector<32x32xf32> to vector<1x32x32xf32>
    tpu.vector_store %arg11[%c0_227, %c1_228, %c1_229], %460 {strides = array<i32>} : memref<2x34x34xf32, #tpu.memory_space<vmem>>, vector<1x32x32xf32>,
    %cst_230 = arith.constant 0.000000e+00 : f32
    %461 = vector.broadcast %cst_230 : f32 to vector<32x32xf32>
    %c1_231 = arith.constant 1 : index
    %462 = memref.load %arg6[%c1_231] : memref<2xf32, #tpu.memory_space<smem>>
    %463 = vector.broadcast %462 : f32 to vector<32x32xf32>
    %464 = arith.addf %461, %463 : vector<32x32xf32>
    %c36 = arith.constant 36 : index
    %465 = memref.load %arg5[%c36] : memref<72xf32, #tpu.memory_space<smem>>
    %c0_232 = arith.constant 0 : index
    %c0_233 = arith.constant 0 : index
    %c0_234 = arith.constant 0 : index
    %466 = vector.load %arg10[%c0_232, %c0_233, %c0_234] : memref<4x34x34xf32, #tpu.memory_space<vmem>>, vector<1x32x32xf32>
    %467 = vector.shape_cast %466 : vector<1x32x32xf32> to vector<32x32xf32>
    %468 = vector.broadcast %465 : f32 to vector<32x32xf32>
    %469 = arith.mulf %468, %467 : vector<32x32xf32>
    %470 = arith.addf %464, %469 : vector<32x32xf32>
    %c37 = arith.constant 37 : index
    %471 = memref.load %arg5[%c37] : memref<72xf32, #tpu.memory_space<smem>>
    %c0_235 = arith.constant 0 : index
    %c0_236 = arith.constant 0 : index
    %c1_237 = arith.constant 1 : index
    %472 = vector.load %arg10[%c0_235, %c0_236, %c1_237] : memref<4x34x34xf32, #tpu.memory_space<vmem>>, vector<1x32x32xf32>
    %473 = vector.shape_cast %472 : vector<1x32x32xf32> to vector<32x32xf32>
    %474 = vector.broadcast %471 : f32 to vector<32x32xf32>
    %475 = arith.mulf %474, %473 : vector<32x32xf32>
    %476 = arith.addf %470, %475 : vector<32x32xf32>
    %c38 = arith.constant 38 : index
    %477 = memref.load %arg5[%c38] : memref<72xf32, #tpu.memory_space<smem>>
    %c0_238 = arith.constant 0 : index
    %c0_239 = arith.constant 0 : index
    %c2_240 = arith.constant 2 : index
    %478 = vector.load %arg10[%c0_238, %c0_239, %c2_240] : memref<4x34x34xf32, #tpu.memory_space<vmem>>, vector<1x32x32xf32>
    %479 = vector.shape_cast %478 : vector<1x32x32xf32> to vector<32x32xf32>
    %480 = vector.broadcast %477 : f32 to vector<32x32xf32>
    %481 = arith.mulf %480, %479 : vector<32x32xf32>
    %482 = arith.addf %476, %481 : vector<32x32xf32>
    %c39 = arith.constant 39 : index
    %483 = memref.load %arg5[%c39] : memref<72xf32, #tpu.memory_space<smem>>
    %c0_241 = arith.constant 0 : index
    %c1_242 = arith.constant 1 : index
    %c0_243 = arith.constant 0 : index
    %484 = vector.load %arg10[%c0_241, %c1_242, %c0_243] : memref<4x34x34xf32, #tpu.memory_space<vmem>>, vector<1x32x32xf32>
    %485 = vector.shape_cast %484 : vector<1x32x32xf32> to vector<32x32xf32>
    %486 = vector.broadcast %483 : f32 to vector<32x32xf32>
    %487 = arith.mulf %486, %485 : vector<32x32xf32>
    %488 = arith.addf %482, %487 : vector<32x32xf32>
    %c40 = arith.constant 40 : index
    %489 = memref.load %arg5[%c40] : memref<72xf32, #tpu.memory_space<smem>>
    %c0_244 = arith.constant 0 : index
    %c1_245 = arith.constant 1 : index
    %c1_246 = arith.constant 1 : index
    %490 = vector.load %arg10[%c0_244, %c1_245, %c1_246] : memref<4x34x34xf32, #tpu.memory_space<vmem>>, vector<1x32x32xf32>
    %491 = vector.shape_cast %490 : vector<1x32x32xf32> to vector<32x32xf32>
    %492 = vector.broadcast %489 : f32 to vector<32x32xf32>
    %493 = arith.mulf %492, %491 : vector<32x32xf32>
    %494 = arith.addf %488, %493 : vector<32x32xf32>
    %c41 = arith.constant 41 : index
    %495 = memref.load %arg5[%c41] : memref<72xf32, #tpu.memory_space<smem>>
    %c0_247 = arith.constant 0 : index
    %c1_248 = arith.constant 1 : index
    %c2_249 = arith.constant 2 : index
    %496 = vector.load %arg10[%c0_247, %c1_248, %c2_249] : memref<4x34x34xf32, #tpu.memory_space<vmem>>, vector<1x32x32xf32>
    %497 = vector.shape_cast %496 : vector<1x32x32xf32> to vector<32x32xf32>
    %498 = vector.broadcast %495 : f32 to vector<32x32xf32>
    %499 = arith.mulf %498, %497 : vector<32x32xf32>
    %500 = arith.addf %494, %499 : vector<32x32xf32>
    %c42 = arith.constant 42 : index
    %501 = memref.load %arg5[%c42] : memref<72xf32, #tpu.memory_space<smem>>
    %c0_250 = arith.constant 0 : index
    %c2_251 = arith.constant 2 : index
    %c0_252 = arith.constant 0 : index
    %502 = vector.load %arg10[%c0_250, %c2_251, %c0_252] : memref<4x34x34xf32, #tpu.memory_space<vmem>>, vector<1x32x32xf32>
    %503 = vector.shape_cast %502 : vector<1x32x32xf32> to vector<32x32xf32>
    %504 = vector.broadcast %501 : f32 to vector<32x32xf32>
    %505 = arith.mulf %504, %503 : vector<32x32xf32>
    %506 = arith.addf %500, %505 : vector<32x32xf32>
    %c43 = arith.constant 43 : index
    %507 = memref.load %arg5[%c43] : memref<72xf32, #tpu.memory_space<smem>>
    %c0_253 = arith.constant 0 : index
    %c2_254 = arith.constant 2 : index
    %c1_255 = arith.constant 1 : index
    %508 = vector.load %arg10[%c0_253, %c2_254, %c1_255] : memref<4x34x34xf32, #tpu.memory_space<vmem>>, vector<1x32x32xf32>
    %509 = vector.shape_cast %508 : vector<1x32x32xf32> to vector<32x32xf32>
    %510 = vector.broadcast %507 : f32 to vector<32x32xf32>
    %511 = arith.mulf %510, %509 : vector<32x32xf32>
    %512 = arith.addf %506, %511 : vector<32x32xf32>
    %c44 = arith.constant 44 : index
    %513 = memref.load %arg5[%c44] : memref<72xf32, #tpu.memory_space<smem>>
    %c0_256 = arith.constant 0 : index
    %c2_257 = arith.constant 2 : index
    %c2_258 = arith.constant 2 : index
    %514 = vector.load %arg10[%c0_256, %c2_257, %c2_258] : memref<4x34x34xf32, #tpu.memory_space<vmem>>, vector<1x32x32xf32>
    %515 = vector.shape_cast %514 : vector<1x32x32xf32> to vector<32x32xf32>
    %516 = vector.broadcast %513 : f32 to vector<32x32xf32>
    %517 = arith.mulf %516, %515 : vector<32x32xf32>
    %518 = arith.addf %512, %517 : vector<32x32xf32>
    %c45 = arith.constant 45 : index
    %519 = memref.load %arg5[%c45] : memref<72xf32, #tpu.memory_space<smem>>
    %c1_259 = arith.constant 1 : index
    %c0_260 = arith.constant 0 : index
    %c0_261 = arith.constant 0 : index
    %520 = vector.load %arg10[%c1_259, %c0_260, %c0_261] : memref<4x34x34xf32, #tpu.memory_space<vmem>>, vector<1x32x32xf32>
    %521 = vector.shape_cast %520 : vector<1x32x32xf32> to vector<32x32xf32>
    %522 = vector.broadcast %519 : f32 to vector<32x32xf32>
    %523 = arith.mulf %522, %521 : vector<32x32xf32>
    %524 = arith.addf %518, %523 : vector<32x32xf32>
    %c46 = arith.constant 46 : index
    %525 = memref.load %arg5[%c46] : memref<72xf32, #tpu.memory_space<smem>>
    %c1_262 = arith.constant 1 : index
    %c0_263 = arith.constant 0 : index
    %c1_264 = arith.constant 1 : index
    %526 = vector.load %arg10[%c1_262, %c0_263, %c1_264] : memref<4x34x34xf32, #tpu.memory_space<vmem>>, vector<1x32x32xf32>
    %527 = vector.shape_cast %526 : vector<1x32x32xf32> to vector<32x32xf32>
    %528 = vector.broadcast %525 : f32 to vector<32x32xf32>
    %529 = arith.mulf %528, %527 : vector<32x32xf32>
    %530 = arith.addf %524, %529 : vector<32x32xf32>
    %c47 = arith.constant 47 : index
    %531 = memref.load %arg5[%c47] : memref<72xf32, #tpu.memory_space<smem>>
    %c1_265 = arith.constant 1 : index
    %c0_266 = arith.constant 0 : index
    %c2_267 = arith.constant 2 : index
    %532 = vector.load %arg10[%c1_265, %c0_266, %c2_267] : memref<4x34x34xf32, #tpu.memory_space<vmem>>, vector<1x32x32xf32>
    %533 = vector.shape_cast %532 : vector<1x32x32xf32> to vector<32x32xf32>
    %534 = vector.broadcast %531 : f32 to vector<32x32xf32>
    %535 = arith.mulf %534, %533 : vector<32x32xf32>
    %536 = arith.addf %530, %535 : vector<32x32xf32>
    %c48 = arith.constant 48 : index
    %537 = memref.load %arg5[%c48] : memref<72xf32, #tpu.memory_space<smem>>
    %c1_268 = arith.constant 1 : index
    %c1_269 = arith.constant 1 : index
    %c0_270 = arith.constant 0 : index
    %538 = vector.load %arg10[%c1_268, %c1_269, %c0_270] : memref<4x34x34xf32, #tpu.memory_space<vmem>>, vector<1x32x32xf32>
    %539 = vector.shape_cast %538 : vector<1x32x32xf32> to vector<32x32xf32>
    %540 = vector.broadcast %537 : f32 to vector<32x32xf32>
    %541 = arith.mulf %540, %539 : vector<32x32xf32>
    %542 = arith.addf %536, %541 : vector<32x32xf32>
    %c49 = arith.constant 49 : index
    %543 = memref.load %arg5[%c49] : memref<72xf32, #tpu.memory_space<smem>>
    %c1_271 = arith.constant 1 : index
    %c1_272 = arith.constant 1 : index
    %c1_273 = arith.constant 1 : index
    %544 = vector.load %arg10[%c1_271, %c1_272, %c1_273] : memref<4x34x34xf32, #tpu.memory_space<vmem>>, vector<1x32x32xf32>
    %545 = vector.shape_cast %544 : vector<1x32x32xf32> to vector<32x32xf32>
    %546 = vector.broadcast %543 : f32 to vector<32x32xf32>
    %547 = arith.mulf %546, %545 : vector<32x32xf32>
    %548 = arith.addf %542, %547 : vector<32x32xf32>
    %c50 = arith.constant 50 : index
    %549 = memref.load %arg5[%c50] : memref<72xf32, #tpu.memory_space<smem>>
    %c1_274 = arith.constant 1 : index
    %c1_275 = arith.constant 1 : index
    %c2_276 = arith.constant 2 : index
    %550 = vector.load %arg10[%c1_274, %c1_275, %c2_276] : memref<4x34x34xf32, #tpu.memory_space<vmem>>, vector<1x32x32xf32>
    %551 = vector.shape_cast %550 : vector<1x32x32xf32> to vector<32x32xf32>
    %552 = vector.broadcast %549 : f32 to vector<32x32xf32>
    %553 = arith.mulf %552, %551 : vector<32x32xf32>
    %554 = arith.addf %548, %553 : vector<32x32xf32>
    %c51 = arith.constant 51 : index
    %555 = memref.load %arg5[%c51] : memref<72xf32, #tpu.memory_space<smem>>
    %c1_277 = arith.constant 1 : index
    %c2_278 = arith.constant 2 : index
    %c0_279 = arith.constant 0 : index
    %556 = vector.load %arg10[%c1_277, %c2_278, %c0_279] : memref<4x34x34xf32, #tpu.memory_space<vmem>>, vector<1x32x32xf32>
    %557 = vector.shape_cast %556 : vector<1x32x32xf32> to vector<32x32xf32>
    %558 = vector.broadcast %555 : f32 to vector<32x32xf32>
    %559 = arith.mulf %558, %557 : vector<32x32xf32>
    %560 = arith.addf %554, %559 : vector<32x32xf32>
    %c52 = arith.constant 52 : index
    %561 = memref.load %arg5[%c52] : memref<72xf32, #tpu.memory_space<smem>>
    %c1_280 = arith.constant 1 : index
    %c2_281 = arith.constant 2 : index
    %c1_282 = arith.constant 1 : index
    %562 = vector.load %arg10[%c1_280, %c2_281, %c1_282] : memref<4x34x34xf32, #tpu.memory_space<vmem>>, vector<1x32x32xf32>
    %563 = vector.shape_cast %562 : vector<1x32x32xf32> to vector<32x32xf32>
    %564 = vector.broadcast %561 : f32 to vector<32x32xf32>
    %565 = arith.mulf %564, %563 : vector<32x32xf32>
    %566 = arith.addf %560, %565 : vector<32x32xf32>
    %c53 = arith.constant 53 : index
    %567 = memref.load %arg5[%c53] : memref<72xf32, #tpu.memory_space<smem>>
    %c1_283 = arith.constant 1 : index
    %c2_284 = arith.constant 2 : index
    %c2_285 = arith.constant 2 : index
    %568 = vector.load %arg10[%c1_283, %c2_284, %c2_285] : memref<4x34x34xf32, #tpu.memory_space<vmem>>, vector<1x32x32xf32>
    %569 = vector.shape_cast %568 : vector<1x32x32xf32> to vector<32x32xf32>
    %570 = vector.broadcast %567 : f32 to vector<32x32xf32>
    %571 = arith.mulf %570, %569 : vector<32x32xf32>
    %572 = arith.addf %566, %571 : vector<32x32xf32>
    %c54 = arith.constant 54 : index
    %573 = memref.load %arg5[%c54] : memref<72xf32, #tpu.memory_space<smem>>
    %c2_286 = arith.constant 2 : index
    %c0_287 = arith.constant 0 : index
    %c0_288 = arith.constant 0 : index
    %574 = vector.load %arg10[%c2_286, %c0_287, %c0_288] : memref<4x34x34xf32, #tpu.memory_space<vmem>>, vector<1x32x32xf32>
    %575 = vector.shape_cast %574 : vector<1x32x32xf32> to vector<32x32xf32>
    %576 = vector.broadcast %573 : f32 to vector<32x32xf32>
    %577 = arith.mulf %576, %575 : vector<32x32xf32>
    %578 = arith.addf %572, %577 : vector<32x32xf32>
    %c55 = arith.constant 55 : index
    %579 = memref.load %arg5[%c55] : memref<72xf32, #tpu.memory_space<smem>>
    %c2_289 = arith.constant 2 : index
    %c0_290 = arith.constant 0 : index
    %c1_291 = arith.constant 1 : index
    %580 = vector.load %arg10[%c2_289, %c0_290, %c1_291] : memref<4x34x34xf32, #tpu.memory_space<vmem>>, vector<1x32x32xf32>
    %581 = vector.shape_cast %580 : vector<1x32x32xf32> to vector<32x32xf32>
    %582 = vector.broadcast %579 : f32 to vector<32x32xf32>
    %583 = arith.mulf %582, %581 : vector<32x32xf32>
    %584 = arith.addf %578, %583 : vector<32x32xf32>
    %c56 = arith.constant 56 : index
    %585 = memref.load %arg5[%c56] : memref<72xf32, #tpu.memory_space<smem>>
    %c2_292 = arith.constant 2 : index
    %c0_293 = arith.constant 0 : index
    %c2_294 = arith.constant 2 : index
    %586 = vector.load %arg10[%c2_292, %c0_293, %c2_294] : memref<4x34x34xf32, #tpu.memory_space<vmem>>, vector<1x32x32xf32>
    %587 = vector.shape_cast %586 : vector<1x32x32xf32> to vector<32x32xf32>
    %588 = vector.broadcast %585 : f32 to vector<32x32xf32>
    %589 = arith.mulf %588, %587 : vector<32x32xf32>
    %590 = arith.addf %584, %589 : vector<32x32xf32>
    %c57 = arith.constant 57 : index
    %591 = memref.load %arg5[%c57] : memref<72xf32, #tpu.memory_space<smem>>
    %c2_295 = arith.constant 2 : index
    %c1_296 = arith.constant 1 : index
    %c0_297 = arith.constant 0 : index
    %592 = vector.load %arg10[%c2_295, %c1_296, %c0_297] : memref<4x34x34xf32, #tpu.memory_space<vmem>>, vector<1x32x32xf32>
    %593 = vector.shape_cast %592 : vector<1x32x32xf32> to vector<32x32xf32>
    %594 = vector.broadcast %591 : f32 to vector<32x32xf32>
    %595 = arith.mulf %594, %593 : vector<32x32xf32>
    %596 = arith.addf %590, %595 : vector<32x32xf32>
    %c58 = arith.constant 58 : index
    %597 = memref.load %arg5[%c58] : memref<72xf32, #tpu.memory_space<smem>>
    %c2_298 = arith.constant 2 : index
    %c1_299 = arith.constant 1 : index
    %c1_300 = arith.constant 1 : index
    %598 = vector.load %arg10[%c2_298, %c1_299, %c1_300] : memref<4x34x34xf32, #tpu.memory_space<vmem>>, vector<1x32x32xf32>
    %599 = vector.shape_cast %598 : vector<1x32x32xf32> to vector<32x32xf32>
    %600 = vector.broadcast %597 : f32 to vector<32x32xf32>
    %601 = arith.mulf %600, %599 : vector<32x32xf32>
    %602 = arith.addf %596, %601 : vector<32x32xf32>
    %c59 = arith.constant 59 : index
    %603 = memref.load %arg5[%c59] : memref<72xf32, #tpu.memory_space<smem>>
    %c2_301 = arith.constant 2 : index
    %c1_302 = arith.constant 1 : index
    %c2_303 = arith.constant 2 : index
    %604 = vector.load %arg10[%c2_301, %c1_302, %c2_303] : memref<4x34x34xf32, #tpu.memory_space<vmem>>, vector<1x32x32xf32>
    %605 = vector.shape_cast %604 : vector<1x32x32xf32> to vector<32x32xf32>
    %606 = vector.broadcast %603 : f32 to vector<32x32xf32>
    %607 = arith.mulf %606, %605 : vector<32x32xf32>
    %608 = arith.addf %602, %607 : vector<32x32xf32>
    %c60 = arith.constant 60 : index
    %609 = memref.load %arg5[%c60] : memref<72xf32, #tpu.memory_space<smem>>
    %c2_304 = arith.constant 2 : index
    %c2_305 = arith.constant 2 : index
    %c0_306 = arith.constant 0 : index
    %610 = vector.load %arg10[%c2_304, %c2_305, %c0_306] : memref<4x34x34xf32, #tpu.memory_space<vmem>>, vector<1x32x32xf32>
    %611 = vector.shape_cast %610 : vector<1x32x32xf32> to vector<32x32xf32>
    %612 = vector.broadcast %609 : f32 to vector<32x32xf32>
    %613 = arith.mulf %612, %611 : vector<32x32xf32>
    %614 = arith.addf %608, %613 : vector<32x32xf32>
    %c61 = arith.constant 61 : index
    %615 = memref.load %arg5[%c61] : memref<72xf32, #tpu.memory_space<smem>>
    %c2_307 = arith.constant 2 : index
    %c2_308 = arith.constant 2 : index
    %c1_309 = arith.constant 1 : index
    %616 = vector.load %arg10[%c2_307, %c2_308, %c1_309] : memref<4x34x34xf32, #tpu.memory_space<vmem>>, vector<1x32x32xf32>
    %617 = vector.shape_cast %616 : vector<1x32x32xf32> to vector<32x32xf32>
    %618 = vector.broadcast %615 : f32 to vector<32x32xf32>
    %619 = arith.mulf %618, %617 : vector<32x32xf32>
    %620 = arith.addf %614, %619 : vector<32x32xf32>
    %c62 = arith.constant 62 : index
    %621 = memref.load %arg5[%c62] : memref<72xf32, #tpu.memory_space<smem>>
    %c2_310 = arith.constant 2 : index
    %c2_311 = arith.constant 2 : index
    %c2_312 = arith.constant 2 : index
    %622 = vector.load %arg10[%c2_310, %c2_311, %c2_312] : memref<4x34x34xf32, #tpu.memory_space<vmem>>, vector<1x32x32xf32>
    %623 = vector.shape_cast %622 : vector<1x32x32xf32> to vector<32x32xf32>
    %624 = vector.broadcast %621 : f32 to vector<32x32xf32>
    %625 = arith.mulf %624, %623 : vector<32x32xf32>
    %626 = arith.addf %620, %625 : vector<32x32xf32>
    %c63 = arith.constant 63 : index
    %627 = memref.load %arg5[%c63] : memref<72xf32, #tpu.memory_space<smem>>
    %c3_313 = arith.constant 3 : index
    %c0_314 = arith.constant 0 : index
    %c0_315 = arith.constant 0 : index
    %628 = vector.load %arg10[%c3_313, %c0_314, %c0_315] : memref<4x34x34xf32, #tpu.memory_space<vmem>>, vector<1x32x32xf32>
    %629 = vector.shape_cast %628 : vector<1x32x32xf32> to vector<32x32xf32>
    %630 = vector.broadcast %627 : f32 to vector<32x32xf32>
    %631 = arith.mulf %630, %629 : vector<32x32xf32>
    %632 = arith.addf %626, %631 : vector<32x32xf32>
    %c64 = arith.constant 64 : index
    %633 = memref.load %arg5[%c64] : memref<72xf32, #tpu.memory_space<smem>>
    %c3_316 = arith.constant 3 : index
    %c0_317 = arith.constant 0 : index
    %c1_318 = arith.constant 1 : index
    %634 = vector.load %arg10[%c3_316, %c0_317, %c1_318] : memref<4x34x34xf32, #tpu.memory_space<vmem>>, vector<1x32x32xf32>
    %635 = vector.shape_cast %634 : vector<1x32x32xf32> to vector<32x32xf32>
    %636 = vector.broadcast %633 : f32 to vector<32x32xf32>
    %637 = arith.mulf %636, %635 : vector<32x32xf32>
    %638 = arith.addf %632, %637 : vector<32x32xf32>
    %c65 = arith.constant 65 : index
    %639 = memref.load %arg5[%c65] : memref<72xf32, #tpu.memory_space<smem>>
    %c3_319 = arith.constant 3 : index
    %c0_320 = arith.constant 0 : index
    %c2_321 = arith.constant 2 : index
    %640 = vector.load %arg10[%c3_319, %c0_320, %c2_321] : memref<4x34x34xf32, #tpu.memory_space<vmem>>, vector<1x32x32xf32>
    %641 = vector.shape_cast %640 : vector<1x32x32xf32> to vector<32x32xf32>
    %642 = vector.broadcast %639 : f32 to vector<32x32xf32>
    %643 = arith.mulf %642, %641 : vector<32x32xf32>
    %644 = arith.addf %638, %643 : vector<32x32xf32>
    %c66 = arith.constant 66 : index
    %645 = memref.load %arg5[%c66] : memref<72xf32, #tpu.memory_space<smem>>
    %c3_322 = arith.constant 3 : index
    %c1_323 = arith.constant 1 : index
    %c0_324 = arith.constant 0 : index
    %646 = vector.load %arg10[%c3_322, %c1_323, %c0_324] : memref<4x34x34xf32, #tpu.memory_space<vmem>>, vector<1x32x32xf32>
    %647 = vector.shape_cast %646 : vector<1x32x32xf32> to vector<32x32xf32>
    %648 = vector.broadcast %645 : f32 to vector<32x32xf32>
    %649 = arith.mulf %648, %647 : vector<32x32xf32>
    %650 = arith.addf %644, %649 : vector<32x32xf32>
    %c67 = arith.constant 67 : index
    %651 = memref.load %arg5[%c67] : memref<72xf32, #tpu.memory_space<smem>>
    %c3_325 = arith.constant 3 : index
    %c1_326 = arith.constant 1 : index
    %c1_327 = arith.constant 1 : index
    %652 = vector.load %arg10[%c3_325, %c1_326, %c1_327] : memref<4x34x34xf32, #tpu.memory_space<vmem>>, vector<1x32x32xf32>
    %653 = vector.shape_cast %652 : vector<1x32x32xf32> to vector<32x32xf32>
    %654 = vector.broadcast %651 : f32 to vector<32x32xf32>
    %655 = arith.mulf %654, %653 : vector<32x32xf32>
    %656 = arith.addf %650, %655 : vector<32x32xf32>
    %c68 = arith.constant 68 : index
    %657 = memref.load %arg5[%c68] : memref<72xf32, #tpu.memory_space<smem>>
    %c3_328 = arith.constant 3 : index
    %c1_329 = arith.constant 1 : index
    %c2_330 = arith.constant 2 : index
    %658 = vector.load %arg10[%c3_328, %c1_329, %c2_330] : memref<4x34x34xf32, #tpu.memory_space<vmem>>, vector<1x32x32xf32>
    %659 = vector.shape_cast %658 : vector<1x32x32xf32> to vector<32x32xf32>
    %660 = vector.broadcast %657 : f32 to vector<32x32xf32>
    %661 = arith.mulf %660, %659 : vector<32x32xf32>
    %662 = arith.addf %656, %661 : vector<32x32xf32>
    %c69 = arith.constant 69 : index
    %663 = memref.load %arg5[%c69] : memref<72xf32, #tpu.memory_space<smem>>
    %c3_331 = arith.constant 3 : index
    %c2_332 = arith.constant 2 : index
    %c0_333 = arith.constant 0 : index
    %664 = vector.load %arg10[%c3_331, %c2_332, %c0_333] : memref<4x34x34xf32, #tpu.memory_space<vmem>>, vector<1x32x32xf32>
    %665 = vector.shape_cast %664 : vector<1x32x32xf32> to vector<32x32xf32>
    %666 = vector.broadcast %663 : f32 to vector<32x32xf32>
    %667 = arith.mulf %666, %665 : vector<32x32xf32>
    %668 = arith.addf %662, %667 : vector<32x32xf32>
    %c70 = arith.constant 70 : index
    %669 = memref.load %arg5[%c70] : memref<72xf32, #tpu.memory_space<smem>>
    %c3_334 = arith.constant 3 : index
    %c2_335 = arith.constant 2 : index
    %c1_336 = arith.constant 1 : index
    %670 = vector.load %arg10[%c3_334, %c2_335, %c1_336] : memref<4x34x34xf32, #tpu.memory_space<vmem>>, vector<1x32x32xf32>
    %671 = vector.shape_cast %670 : vector<1x32x32xf32> to vector<32x32xf32>
    %672 = vector.broadcast %669 : f32 to vector<32x32xf32>
    %673 = arith.mulf %672, %671 : vector<32x32xf32>
    %674 = arith.addf %668, %673 : vector<32x32xf32>
    %c71 = arith.constant 71 : index
    %675 = memref.load %arg5[%c71] : memref<72xf32, #tpu.memory_space<smem>>
    %c3_337 = arith.constant 3 : index
    %c2_338 = arith.constant 2 : index
    %c2_339 = arith.constant 2 : index
    %676 = vector.load %arg10[%c3_337, %c2_338, %c2_339] : memref<4x34x34xf32, #tpu.memory_space<vmem>>, vector<1x32x32xf32>
    %677 = vector.shape_cast %676 : vector<1x32x32xf32> to vector<32x32xf32>
    %678 = vector.broadcast %675 : f32 to vector<32x32xf32>
    %679 = arith.mulf %678, %677 : vector<32x32xf32>
    %680 = arith.addf %674, %679 : vector<32x32xf32>
    %cst_340 = arith.constant 0.000000e+00 : f32
    %681 = vector.broadcast %cst_340 : f32 to vector<32x32xf32>
    %682 = arith.maximumf %680, %681 : vector<32x32xf32>
    %c1_341 = arith.constant 1 : index
    %c1_342 = arith.constant 1 : index
    %c1_343 = arith.constant 1 : index
    %683 = vector.load %arg11[%c1_341, %c1_342, %c1_343] : memref<2x34x34xf32, #tpu.memory_space<vmem>>, vector<1x32x32xf32>
    %684 = vector.shape_cast %683 : vector<1x32x32xf32> to vector<32x32xf32>
    %685 = vector.shape_cast %682 : vector<32x32xf32> to vector<1x32x32xf32>
    tpu.vector_store %arg11[%c1_341, %c1_342, %c1_343], %685 {strides = array<i32>} : memref<2x34x34xf32, #tpu.memory_space<vmem>>, vector<1x32x32xf32>,
    %cst_344 = arith.constant 0.000000e+00 : f32
    %686 = vector.broadcast %cst_344 : f32 to vector<32x32xf32>
    %c0_345 = arith.constant 0 : index
    %687 = memref.load %arg8[%c0_345] : memref<2xf32, #tpu.memory_space<smem>>
    %688 = vector.broadcast %687 : f32 to vector<32x32xf32>
    %689 = arith.addf %686, %688 : vector<32x32xf32>
    %c0_346 = arith.constant 0 : index
    %690 = memref.load %arg7[%c0_346] : memref<36xf32, #tpu.memory_space<smem>>
    %c0_347 = arith.constant 0 : index
    %c0_348 = arith.constant 0 : index
    %c0_349 = arith.constant 0 : index
    %691 = vector.load %arg11[%c0_347, %c0_348, %c0_349] : memref<2x34x34xf32, #tpu.memory_space<vmem>>, vector<1x32x32xf32>
    %692 = vector.shape_cast %691 : vector<1x32x32xf32> to vector<32x32xf32>
    %693 = vector.broadcast %690 : f32 to vector<32x32xf32>
    %694 = arith.mulf %693, %692 : vector<32x32xf32>
    %695 = arith.addf %689, %694 : vector<32x32xf32>
    %c1_350 = arith.constant 1 : index
    %696 = memref.load %arg7[%c1_350] : memref<36xf32, #tpu.memory_space<smem>>
    %c0_351 = arith.constant 0 : index
    %c0_352 = arith.constant 0 : index
    %c1_353 = arith.constant 1 : index
    %697 = vector.load %arg11[%c0_351, %c0_352, %c1_353] : memref<2x34x34xf32, #tpu.memory_space<vmem>>, vector<1x32x32xf32>
    %698 = vector.shape_cast %697 : vector<1x32x32xf32> to vector<32x32xf32>
    %699 = vector.broadcast %696 : f32 to vector<32x32xf32>
    %700 = arith.mulf %699, %698 : vector<32x32xf32>
    %701 = arith.addf %695, %700 : vector<32x32xf32>
    %c2_354 = arith.constant 2 : index
    %702 = memref.load %arg7[%c2_354] : memref<36xf32, #tpu.memory_space<smem>>
    %c0_355 = arith.constant 0 : index
    %c0_356 = arith.constant 0 : index
    %c2_357 = arith.constant 2 : index
    %703 = vector.load %arg11[%c0_355, %c0_356, %c2_357] : memref<2x34x34xf32, #tpu.memory_space<vmem>>, vector<1x32x32xf32>
    %704 = vector.shape_cast %703 : vector<1x32x32xf32> to vector<32x32xf32>
    %705 = vector.broadcast %702 : f32 to vector<32x32xf32>
    %706 = arith.mulf %705, %704 : vector<32x32xf32>
    %707 = arith.addf %701, %706 : vector<32x32xf32>
    %c3_358 = arith.constant 3 : index
    %708 = memref.load %arg7[%c3_358] : memref<36xf32, #tpu.memory_space<smem>>
    %c0_359 = arith.constant 0 : index
    %c1_360 = arith.constant 1 : index
    %c0_361 = arith.constant 0 : index
    %709 = vector.load %arg11[%c0_359, %c1_360, %c0_361] : memref<2x34x34xf32, #tpu.memory_space<vmem>>, vector<1x32x32xf32>
    %710 = vector.shape_cast %709 : vector<1x32x32xf32> to vector<32x32xf32>
    %711 = vector.broadcast %708 : f32 to vector<32x32xf32>
    %712 = arith.mulf %711, %710 : vector<32x32xf32>
    %713 = arith.addf %707, %712 : vector<32x32xf32>
    %c4_362 = arith.constant 4 : index
    %714 = memref.load %arg7[%c4_362] : memref<36xf32, #tpu.memory_space<smem>>
    %c0_363 = arith.constant 0 : index
    %c1_364 = arith.constant 1 : index
    %c1_365 = arith.constant 1 : index
    %715 = vector.load %arg11[%c0_363, %c1_364, %c1_365] : memref<2x34x34xf32, #tpu.memory_space<vmem>>, vector<1x32x32xf32>
    %716 = vector.shape_cast %715 : vector<1x32x32xf32> to vector<32x32xf32>
    %717 = vector.broadcast %714 : f32 to vector<32x32xf32>
    %718 = arith.mulf %717, %716 : vector<32x32xf32>
    %719 = arith.addf %713, %718 : vector<32x32xf32>
    %c5_366 = arith.constant 5 : index
    %720 = memref.load %arg7[%c5_366] : memref<36xf32, #tpu.memory_space<smem>>
    %c0_367 = arith.constant 0 : index
    %c1_368 = arith.constant 1 : index
    %c2_369 = arith.constant 2 : index
    %721 = vector.load %arg11[%c0_367, %c1_368, %c2_369] : memref<2x34x34xf32, #tpu.memory_space<vmem>>, vector<1x32x32xf32>
    %722 = vector.shape_cast %721 : vector<1x32x32xf32> to vector<32x32xf32>
    %723 = vector.broadcast %720 : f32 to vector<32x32xf32>
    %724 = arith.mulf %723, %722 : vector<32x32xf32>
    %725 = arith.addf %719, %724 : vector<32x32xf32>
    %c6_370 = arith.constant 6 : index
    %726 = memref.load %arg7[%c6_370] : memref<36xf32, #tpu.memory_space<smem>>
    %c0_371 = arith.constant 0 : index
    %c2_372 = arith.constant 2 : index
    %c0_373 = arith.constant 0 : index
    %727 = vector.load %arg11[%c0_371, %c2_372, %c0_373] : memref<2x34x34xf32, #tpu.memory_space<vmem>>, vector<1x32x32xf32>
    %728 = vector.shape_cast %727 : vector<1x32x32xf32> to vector<32x32xf32>
    %729 = vector.broadcast %726 : f32 to vector<32x32xf32>
    %730 = arith.mulf %729, %728 : vector<32x32xf32>
    %731 = arith.addf %725, %730 : vector<32x32xf32>
    %c7_374 = arith.constant 7 : index
    %732 = memref.load %arg7[%c7_374] : memref<36xf32, #tpu.memory_space<smem>>
    %c0_375 = arith.constant 0 : index
    %c2_376 = arith.constant 2 : index
    %c1_377 = arith.constant 1 : index
    %733 = vector.load %arg11[%c0_375, %c2_376, %c1_377] : memref<2x34x34xf32, #tpu.memory_space<vmem>>, vector<1x32x32xf32>
    %734 = vector.shape_cast %733 : vector<1x32x32xf32> to vector<32x32xf32>
    %735 = vector.broadcast %732 : f32 to vector<32x32xf32>
    %736 = arith.mulf %735, %734 : vector<32x32xf32>
    %737 = arith.addf %731, %736 : vector<32x32xf32>
    %c8_378 = arith.constant 8 : index
    %738 = memref.load %arg7[%c8_378] : memref<36xf32, #tpu.memory_space<smem>>
    %c0_379 = arith.constant 0 : index
    %c2_380 = arith.constant 2 : index
    %c2_381 = arith.constant 2 : index
    %739 = vector.load %arg11[%c0_379, %c2_380, %c2_381] : memref<2x34x34xf32, #tpu.memory_space<vmem>>, vector<1x32x32xf32>
    %740 = vector.shape_cast %739 : vector<1x32x32xf32> to vector<32x32xf32>
    %741 = vector.broadcast %738 : f32 to vector<32x32xf32>
    %742 = arith.mulf %741, %740 : vector<32x32xf32>
    %743 = arith.addf %737, %742 : vector<32x32xf32>
    %c9_382 = arith.constant 9 : index
    %744 = memref.load %arg7[%c9_382] : memref<36xf32, #tpu.memory_space<smem>>
    %c1_383 = arith.constant 1 : index
    %c0_384 = arith.constant 0 : index
    %c0_385 = arith.constant 0 : index
    %745 = vector.load %arg11[%c1_383, %c0_384, %c0_385] : memref<2x34x34xf32, #tpu.memory_space<vmem>>, vector<1x32x32xf32>
    %746 = vector.shape_cast %745 : vector<1x32x32xf32> to vector<32x32xf32>
    %747 = vector.broadcast %744 : f32 to vector<32x32xf32>
    %748 = arith.mulf %747, %746 : vector<32x32xf32>
    %749 = arith.addf %743, %748 : vector<32x32xf32>
    %c10_386 = arith.constant 10 : index
    %750 = memref.load %arg7[%c10_386] : memref<36xf32, #tpu.memory_space<smem>>
    %c1_387 = arith.constant 1 : index
    %c0_388 = arith.constant 0 : index
    %c1_389 = arith.constant 1 : index
    %751 = vector.load %arg11[%c1_387, %c0_388, %c1_389] : memref<2x34x34xf32, #tpu.memory_space<vmem>>, vector<1x32x32xf32>
    %752 = vector.shape_cast %751 : vector<1x32x32xf32> to vector<32x32xf32>
    %753 = vector.broadcast %750 : f32 to vector<32x32xf32>
    %754 = arith.mulf %753, %752 : vector<32x32xf32>
    %755 = arith.addf %749, %754 : vector<32x32xf32>
    %c11_390 = arith.constant 11 : index
    %756 = memref.load %arg7[%c11_390] : memref<36xf32, #tpu.memory_space<smem>>
    %c1_391 = arith.constant 1 : index
    %c0_392 = arith.constant 0 : index
    %c2_393 = arith.constant 2 : index
    %757 = vector.load %arg11[%c1_391, %c0_392, %c2_393] : memref<2x34x34xf32, #tpu.memory_space<vmem>>, vector<1x32x32xf32>
    %758 = vector.shape_cast %757 : vector<1x32x32xf32> to vector<32x32xf32>
    %759 = vector.broadcast %756 : f32 to vector<32x32xf32>
    %760 = arith.mulf %759, %758 : vector<32x32xf32>
    %761 = arith.addf %755, %760 : vector<32x32xf32>
    %c12_394 = arith.constant 12 : index
    %762 = memref.load %arg7[%c12_394] : memref<36xf32, #tpu.memory_space<smem>>
    %c1_395 = arith.constant 1 : index
    %c1_396 = arith.constant 1 : index
    %c0_397 = arith.constant 0 : index
    %763 = vector.load %arg11[%c1_395, %c1_396, %c0_397] : memref<2x34x34xf32, #tpu.memory_space<vmem>>, vector<1x32x32xf32>
    %764 = vector.shape_cast %763 : vector<1x32x32xf32> to vector<32x32xf32>
    %765 = vector.broadcast %762 : f32 to vector<32x32xf32>
    %766 = arith.mulf %765, %764 : vector<32x32xf32>
    %767 = arith.addf %761, %766 : vector<32x32xf32>
    %c13_398 = arith.constant 13 : index
    %768 = memref.load %arg7[%c13_398] : memref<36xf32, #tpu.memory_space<smem>>
    %c1_399 = arith.constant 1 : index
    %c1_400 = arith.constant 1 : index
    %c1_401 = arith.constant 1 : index
    %769 = vector.load %arg11[%c1_399, %c1_400, %c1_401] : memref<2x34x34xf32, #tpu.memory_space<vmem>>, vector<1x32x32xf32>
    %770 = vector.shape_cast %769 : vector<1x32x32xf32> to vector<32x32xf32>
    %771 = vector.broadcast %768 : f32 to vector<32x32xf32>
    %772 = arith.mulf %771, %770 : vector<32x32xf32>
    %773 = arith.addf %767, %772 : vector<32x32xf32>
    %c14_402 = arith.constant 14 : index
    %774 = memref.load %arg7[%c14_402] : memref<36xf32, #tpu.memory_space<smem>>
    %c1_403 = arith.constant 1 : index
    %c1_404 = arith.constant 1 : index
    %c2_405 = arith.constant 2 : index
    %775 = vector.load %arg11[%c1_403, %c1_404, %c2_405] : memref<2x34x34xf32, #tpu.memory_space<vmem>>, vector<1x32x32xf32>
    %776 = vector.shape_cast %775 : vector<1x32x32xf32> to vector<32x32xf32>
    %777 = vector.broadcast %774 : f32 to vector<32x32xf32>
    %778 = arith.mulf %777, %776 : vector<32x32xf32>
    %779 = arith.addf %773, %778 : vector<32x32xf32>
    %c15_406 = arith.constant 15 : index
    %780 = memref.load %arg7[%c15_406] : memref<36xf32, #tpu.memory_space<smem>>
    %c1_407 = arith.constant 1 : index
    %c2_408 = arith.constant 2 : index
    %c0_409 = arith.constant 0 : index
    %781 = vector.load %arg11[%c1_407, %c2_408, %c0_409] : memref<2x34x34xf32, #tpu.memory_space<vmem>>, vector<1x32x32xf32>
    %782 = vector.shape_cast %781 : vector<1x32x32xf32> to vector<32x32xf32>
    %783 = vector.broadcast %780 : f32 to vector<32x32xf32>
    %784 = arith.mulf %783, %782 : vector<32x32xf32>
    %785 = arith.addf %779, %784 : vector<32x32xf32>
    %c16_410 = arith.constant 16 : index
    %786 = memref.load %arg7[%c16_410] : memref<36xf32, #tpu.memory_space<smem>>
    %c1_411 = arith.constant 1 : index
    %c2_412 = arith.constant 2 : index
    %c1_413 = arith.constant 1 : index
    %787 = vector.load %arg11[%c1_411, %c2_412, %c1_413] : memref<2x34x34xf32, #tpu.memory_space<vmem>>, vector<1x32x32xf32>
    %788 = vector.shape_cast %787 : vector<1x32x32xf32> to vector<32x32xf32>
    %789 = vector.broadcast %786 : f32 to vector<32x32xf32>
    %790 = arith.mulf %789, %788 : vector<32x32xf32>
    %791 = arith.addf %785, %790 : vector<32x32xf32>
    %c17_414 = arith.constant 17 : index
    %792 = memref.load %arg7[%c17_414] : memref<36xf32, #tpu.memory_space<smem>>
    %c1_415 = arith.constant 1 : index
    %c2_416 = arith.constant 2 : index
    %c2_417 = arith.constant 2 : index
    %793 = vector.load %arg11[%c1_415, %c2_416, %c2_417] : memref<2x34x34xf32, #tpu.memory_space<vmem>>, vector<1x32x32xf32>
    %794 = vector.shape_cast %793 : vector<1x32x32xf32> to vector<32x32xf32>
    %795 = vector.broadcast %792 : f32 to vector<32x32xf32>
    %796 = arith.mulf %795, %794 : vector<32x32xf32>
    %797 = arith.addf %791, %796 : vector<32x32xf32>
    %cst_418 = arith.constant 0.000000e+00 : f32
    %798 = vector.broadcast %cst_418 : f32 to vector<32x32xf32>
    %799 = arith.maximumf %797, %798 : vector<32x32xf32>
    %c0_419 = arith.constant 0 : index
    %c0_420 = arith.constant 0 : index
    %c0_421 = arith.constant 0 : index
    %c0_422 = arith.constant 0 : index
    %800 = vector.load %arg9[%c0_419, %c0_420, %c0_421, %c0_422] : memref<1x2x32x32xf32, #tpu.memory_space<vmem>>, vector<1x1x32x32xf32>
    %801 = vector.shape_cast %800 : vector<1x1x32x32xf32> to vector<32x32xf32>
    %802 = vector.shape_cast %799 : vector<32x32xf32> to vector<1x1x32x32xf32>
    tpu.vector_store %arg9[%c0_419, %c0_420, %c0_421, %c0_422], %802 {strides = array<i32>} : memref<1x2x32x32xf32, #tpu.memory_space<vmem>>, vector<1x1x32x32xf32>,
    %cst_423 = arith.constant 0.000000e+00 : f32
    %803 = vector.broadcast %cst_423 : f32 to vector<32x32xf32>
    %c1_424 = arith.constant 1 : index
    %804 = memref.load %arg8[%c1_424] : memref<2xf32, #tpu.memory_space<smem>>
    %805 = vector.broadcast %804 : f32 to vector<32x32xf32>
    %806 = arith.addf %803, %805 : vector<32x32xf32>
    %c18_425 = arith.constant 18 : index
    %807 = memref.load %arg7[%c18_425] : memref<36xf32, #tpu.memory_space<smem>>
    %c0_426 = arith.constant 0 : index
    %c0_427 = arith.constant 0 : index
    %c0_428 = arith.constant 0 : index
    %808 = vector.load %arg11[%c0_426, %c0_427, %c0_428] : memref<2x34x34xf32, #tpu.memory_space<vmem>>, vector<1x32x32xf32>
    %809 = vector.shape_cast %808 : vector<1x32x32xf32> to vector<32x32xf32>
    %810 = vector.broadcast %807 : f32 to vector<32x32xf32>
    %811 = arith.mulf %810, %809 : vector<32x32xf32>
    %812 = arith.addf %806, %811 : vector<32x32xf32>
    %c19_429 = arith.constant 19 : index
    %813 = memref.load %arg7[%c19_429] : memref<36xf32, #tpu.memory_space<smem>>
    %c0_430 = arith.constant 0 : index
    %c0_431 = arith.constant 0 : index
    %c1_432 = arith.constant 1 : index
    %814 = vector.load %arg11[%c0_430, %c0_431, %c1_432] : memref<2x34x34xf32, #tpu.memory_space<vmem>>, vector<1x32x32xf32>
    %815 = vector.shape_cast %814 : vector<1x32x32xf32> to vector<32x32xf32>
    %816 = vector.broadcast %813 : f32 to vector<32x32xf32>
    %817 = arith.mulf %816, %815 : vector<32x32xf32>
    %818 = arith.addf %812, %817 : vector<32x32xf32>
    %c20_433 = arith.constant 20 : index
    %819 = memref.load %arg7[%c20_433] : memref<36xf32, #tpu.memory_space<smem>>
    %c0_434 = arith.constant 0 : index
    %c0_435 = arith.constant 0 : index
    %c2_436 = arith.constant 2 : index
    %820 = vector.load %arg11[%c0_434, %c0_435, %c2_436] : memref<2x34x34xf32, #tpu.memory_space<vmem>>, vector<1x32x32xf32>
    %821 = vector.shape_cast %820 : vector<1x32x32xf32> to vector<32x32xf32>
    %822 = vector.broadcast %819 : f32 to vector<32x32xf32>
    %823 = arith.mulf %822, %821 : vector<32x32xf32>
    %824 = arith.addf %818, %823 : vector<32x32xf32>
    %c21_437 = arith.constant 21 : index
    %825 = memref.load %arg7[%c21_437] : memref<36xf32, #tpu.memory_space<smem>>
    %c0_438 = arith.constant 0 : index
    %c1_439 = arith.constant 1 : index
    %c0_440 = arith.constant 0 : index
    %826 = vector.load %arg11[%c0_438, %c1_439, %c0_440] : memref<2x34x34xf32, #tpu.memory_space<vmem>>, vector<1x32x32xf32>
    %827 = vector.shape_cast %826 : vector<1x32x32xf32> to vector<32x32xf32>
    %828 = vector.broadcast %825 : f32 to vector<32x32xf32>
    %829 = arith.mulf %828, %827 : vector<32x32xf32>
    %830 = arith.addf %824, %829 : vector<32x32xf32>
    %c22_441 = arith.constant 22 : index
    %831 = memref.load %arg7[%c22_441] : memref<36xf32, #tpu.memory_space<smem>>
    %c0_442 = arith.constant 0 : index
    %c1_443 = arith.constant 1 : index
    %c1_444 = arith.constant 1 : index
    %832 = vector.load %arg11[%c0_442, %c1_443, %c1_444] : memref<2x34x34xf32, #tpu.memory_space<vmem>>, vector<1x32x32xf32>
    %833 = vector.shape_cast %832 : vector<1x32x32xf32> to vector<32x32xf32>
    %834 = vector.broadcast %831 : f32 to vector<32x32xf32>
    %835 = arith.mulf %834, %833 : vector<32x32xf32>
    %836 = arith.addf %830, %835 : vector<32x32xf32>
    %c23_445 = arith.constant 23 : index
    %837 = memref.load %arg7[%c23_445] : memref<36xf32, #tpu.memory_space<smem>>
    %c0_446 = arith.constant 0 : index
    %c1_447 = arith.constant 1 : index
    %c2_448 = arith.constant 2 : index
    %838 = vector.load %arg11[%c0_446, %c1_447, %c2_448] : memref<2x34x34xf32, #tpu.memory_space<vmem>>, vector<1x32x32xf32>
    %839 = vector.shape_cast %838 : vector<1x32x32xf32> to vector<32x32xf32>
    %840 = vector.broadcast %837 : f32 to vector<32x32xf32>
    %841 = arith.mulf %840, %839 : vector<32x32xf32>
    %842 = arith.addf %836, %841 : vector<32x32xf32>
    %c24_449 = arith.constant 24 : index
    %843 = memref.load %arg7[%c24_449] : memref<36xf32, #tpu.memory_space<smem>>
    %c0_450 = arith.constant 0 : index
    %c2_451 = arith.constant 2 : index
    %c0_452 = arith.constant 0 : index
    %844 = vector.load %arg11[%c0_450, %c2_451, %c0_452] : memref<2x34x34xf32, #tpu.memory_space<vmem>>, vector<1x32x32xf32>
    %845 = vector.shape_cast %844 : vector<1x32x32xf32> to vector<32x32xf32>
    %846 = vector.broadcast %843 : f32 to vector<32x32xf32>
    %847 = arith.mulf %846, %845 : vector<32x32xf32>
    %848 = arith.addf %842, %847 : vector<32x32xf32>
    %c25_453 = arith.constant 25 : index
    %849 = memref.load %arg7[%c25_453] : memref<36xf32, #tpu.memory_space<smem>>
    %c0_454 = arith.constant 0 : index
    %c2_455 = arith.constant 2 : index
    %c1_456 = arith.constant 1 : index
    %850 = vector.load %arg11[%c0_454, %c2_455, %c1_456] : memref<2x34x34xf32, #tpu.memory_space<vmem>>, vector<1x32x32xf32>
    %851 = vector.shape_cast %850 : vector<1x32x32xf32> to vector<32x32xf32>
    %852 = vector.broadcast %849 : f32 to vector<32x32xf32>
    %853 = arith.mulf %852, %851 : vector<32x32xf32>
    %854 = arith.addf %848, %853 : vector<32x32xf32>
    %c26_457 = arith.constant 26 : index
    %855 = memref.load %arg7[%c26_457] : memref<36xf32, #tpu.memory_space<smem>>
    %c0_458 = arith.constant 0 : index
    %c2_459 = arith.constant 2 : index
    %c2_460 = arith.constant 2 : index
    %856 = vector.load %arg11[%c0_458, %c2_459, %c2_460] : memref<2x34x34xf32, #tpu.memory_space<vmem>>, vector<1x32x32xf32>
    %857 = vector.shape_cast %856 : vector<1x32x32xf32> to vector<32x32xf32>
    %858 = vector.broadcast %855 : f32 to vector<32x32xf32>
    %859 = arith.mulf %858, %857 : vector<32x32xf32>
    %860 = arith.addf %854, %859 : vector<32x32xf32>
    %c27_461 = arith.constant 27 : index
    %861 = memref.load %arg7[%c27_461] : memref<36xf32, #tpu.memory_space<smem>>
    %c1_462 = arith.constant 1 : index
    %c0_463 = arith.constant 0 : index
    %c0_464 = arith.constant 0 : index
    %862 = vector.load %arg11[%c1_462, %c0_463, %c0_464] : memref<2x34x34xf32, #tpu.memory_space<vmem>>, vector<1x32x32xf32>
    %863 = vector.shape_cast %862 : vector<1x32x32xf32> to vector<32x32xf32>
    %864 = vector.broadcast %861 : f32 to vector<32x32xf32>
    %865 = arith.mulf %864, %863 : vector<32x32xf32>
    %866 = arith.addf %860, %865 : vector<32x32xf32>
    %c28_465 = arith.constant 28 : index
    %867 = memref.load %arg7[%c28_465] : memref<36xf32, #tpu.memory_space<smem>>
    %c1_466 = arith.constant 1 : index
    %c0_467 = arith.constant 0 : index
    %c1_468 = arith.constant 1 : index
    %868 = vector.load %arg11[%c1_466, %c0_467, %c1_468] : memref<2x34x34xf32, #tpu.memory_space<vmem>>, vector<1x32x32xf32>
    %869 = vector.shape_cast %868 : vector<1x32x32xf32> to vector<32x32xf32>
    %870 = vector.broadcast %867 : f32 to vector<32x32xf32>
    %871 = arith.mulf %870, %869 : vector<32x32xf32>
    %872 = arith.addf %866, %871 : vector<32x32xf32>
    %c29_469 = arith.constant 29 : index
    %873 = memref.load %arg7[%c29_469] : memref<36xf32, #tpu.memory_space<smem>>
    %c1_470 = arith.constant 1 : index
    %c0_471 = arith.constant 0 : index
    %c2_472 = arith.constant 2 : index
    %874 = vector.load %arg11[%c1_470, %c0_471, %c2_472] : memref<2x34x34xf32, #tpu.memory_space<vmem>>, vector<1x32x32xf32>
    %875 = vector.shape_cast %874 : vector<1x32x32xf32> to vector<32x32xf32>
    %876 = vector.broadcast %873 : f32 to vector<32x32xf32>
    %877 = arith.mulf %876, %875 : vector<32x32xf32>
    %878 = arith.addf %872, %877 : vector<32x32xf32>
    %c30_473 = arith.constant 30 : index
    %879 = memref.load %arg7[%c30_473] : memref<36xf32, #tpu.memory_space<smem>>
    %c1_474 = arith.constant 1 : index
    %c1_475 = arith.constant 1 : index
    %c0_476 = arith.constant 0 : index
    %880 = vector.load %arg11[%c1_474, %c1_475, %c0_476] : memref<2x34x34xf32, #tpu.memory_space<vmem>>, vector<1x32x32xf32>
    %881 = vector.shape_cast %880 : vector<1x32x32xf32> to vector<32x32xf32>
    %882 = vector.broadcast %879 : f32 to vector<32x32xf32>
    %883 = arith.mulf %882, %881 : vector<32x32xf32>
    %884 = arith.addf %878, %883 : vector<32x32xf32>
    %c31_477 = arith.constant 31 : index
    %885 = memref.load %arg7[%c31_477] : memref<36xf32, #tpu.memory_space<smem>>
    %c1_478 = arith.constant 1 : index
    %c1_479 = arith.constant 1 : index
    %c1_480 = arith.constant 1 : index
    %886 = vector.load %arg11[%c1_478, %c1_479, %c1_480] : memref<2x34x34xf32, #tpu.memory_space<vmem>>, vector<1x32x32xf32>
    %887 = vector.shape_cast %886 : vector<1x32x32xf32> to vector<32x32xf32>
    %888 = vector.broadcast %885 : f32 to vector<32x32xf32>
    %889 = arith.mulf %888, %887 : vector<32x32xf32>
    %890 = arith.addf %884, %889 : vector<32x32xf32>
    %c32_481 = arith.constant 32 : index
    %891 = memref.load %arg7[%c32_481] : memref<36xf32, #tpu.memory_space<smem>>
    %c1_482 = arith.constant 1 : index
    %c1_483 = arith.constant 1 : index
    %c2_484 = arith.constant 2 : index
    %892 = vector.load %arg11[%c1_482, %c1_483, %c2_484] : memref<2x34x34xf32, #tpu.memory_space<vmem>>, vector<1x32x32xf32>
    %893 = vector.shape_cast %892 : vector<1x32x32xf32> to vector<32x32xf32>
    %894 = vector.broadcast %891 : f32 to vector<32x32xf32>
    %895 = arith.mulf %894, %893 : vector<32x32xf32>
    %896 = arith.addf %890, %895 : vector<32x32xf32>
    %c33_485 = arith.constant 33 : index
    %897 = memref.load %arg7[%c33_485] : memref<36xf32, #tpu.memory_space<smem>>
    %c1_486 = arith.constant 1 : index
    %c2_487 = arith.constant 2 : index
    %c0_488 = arith.constant 0 : index
    %898 = vector.load %arg11[%c1_486, %c2_487, %c0_488] : memref<2x34x34xf32, #tpu.memory_space<vmem>>, vector<1x32x32xf32>
    %899 = vector.shape_cast %898 : vector<1x32x32xf32> to vector<32x32xf32>
    %900 = vector.broadcast %897 : f32 to vector<32x32xf32>
    %901 = arith.mulf %900, %899 : vector<32x32xf32>
    %902 = arith.addf %896, %901 : vector<32x32xf32>
    %c34_489 = arith.constant 34 : index
    %903 = memref.load %arg7[%c34_489] : memref<36xf32, #tpu.memory_space<smem>>
    %c1_490 = arith.constant 1 : index
    %c2_491 = arith.constant 2 : index
    %c1_492 = arith.constant 1 : index
    %904 = vector.load %arg11[%c1_490, %c2_491, %c1_492] : memref<2x34x34xf32, #tpu.memory_space<vmem>>, vector<1x32x32xf32>
    %905 = vector.shape_cast %904 : vector<1x32x32xf32> to vector<32x32xf32>
    %906 = vector.broadcast %903 : f32 to vector<32x32xf32>
    %907 = arith.mulf %906, %905 : vector<32x32xf32>
    %908 = arith.addf %902, %907 : vector<32x32xf32>
    %c35_493 = arith.constant 35 : index
    %909 = memref.load %arg7[%c35_493] : memref<36xf32, #tpu.memory_space<smem>>
    %c1_494 = arith.constant 1 : index
    %c2_495 = arith.constant 2 : index
    %c2_496 = arith.constant 2 : index
    %910 = vector.load %arg11[%c1_494, %c2_495, %c2_496] : memref<2x34x34xf32, #tpu.memory_space<vmem>>, vector<1x32x32xf32>
    %911 = vector.shape_cast %910 : vector<1x32x32xf32> to vector<32x32xf32>
    %912 = vector.broadcast %909 : f32 to vector<32x32xf32>
    %913 = arith.mulf %912, %911 : vector<32x32xf32>
    %914 = arith.addf %908, %913 : vector<32x32xf32>
    %cst_497 = arith.constant 0.000000e+00 : f32
    %915 = vector.broadcast %cst_497 : f32 to vector<32x32xf32>
    %916 = arith.maximumf %914, %915 : vector<32x32xf32>
    %c0_498 = arith.constant 0 : index
    %c1_499 = arith.constant 1 : index
    %c0_500 = arith.constant 0 : index
    %c0_501 = arith.constant 0 : index
    %917 = vector.load %arg9[%c0_498, %c1_499, %c0_500, %c0_501] : memref<1x2x32x32xf32, #tpu.memory_space<vmem>>, vector<1x1x32x32xf32>
    %918 = vector.shape_cast %917 : vector<1x1x32x32xf32> to vector<32x32xf32>
    %919 = vector.shape_cast %916 : vector<32x32xf32> to vector<1x1x32x32xf32>
    tpu.vector_store %arg9[%c0_498, %c1_499, %c0_500, %c0_501], %919 {strides = array<i32>} : memref<1x2x32x32xf32, #tpu.memory_space<vmem>>, vector<1x1x32x32xf32>,
    return
  }
  func.func @transform_0(%arg0: i32) -> (i32, i32, i32, i32) {
    %c0_i32 = arith.constant 0 : i32
    %c0_i32_0 = arith.constant 0 : i32
    %c0_i32_1 = arith.constant 0 : i32
    %c0_i32_2 = arith.constant 0 : i32
    return %arg0, %c0_i32, %c0_i32_0, %c0_i32_1 : i32, i32, i32, i32
  }
  func.func @transform_1(%arg0: i32) -> (i32, i32, i32, i32) {
    %c0_i32 = arith.constant 0 : i32
    %c0_i32_0 = arith.constant 0 : i32
    %c0_i32_1 = arith.constant 0 : i32
    %c0_i32_2 = arith.constant 0 : i32
    return %arg0, %c0_i32, %c0_i32_0, %c0_i32_1 : i32, i32, i32, i32
  }
  func.func @transform_2(%arg0: i32) -> i32 {
    %c0_i32 = arith.constant 0 : i32
    %c0_i32_0 = arith.constant 0 : i32
    return %c0_i32 : i32
  }
  func.func @transform_3(%arg0: i32) -> i32 {
    %c0_i32 = arith.constant 0 : i32
    %c0_i32_0 = arith.constant 0 : i32
    return %c0_i32 : i32
  }
  func.func @transform_4(%arg0: i32) -> i32 {
    %c0_i32 = arith.constant 0 : i32
    %c0_i32_0 = arith.constant 0 : i32
    return %c0_i32 : i32
  }
  func.func @transform_5(%arg0: i32) -> i32 {
    %c0_i32 = arith.constant 0 : i32
    %c0_i32_0 = arith.constant 0 : i32
    return %c0_i32 : i32
  }
  func.func @transform_6(%arg0: i32) -> i32 {
    %c0_i32 = arith.constant 0 : i32
    %c0_i32_0 = arith.constant 0 : i32
    return %c0_i32 : i32
  }
  func.func @transform_7(%arg0: i32) -> i32 {
    %c0_i32 = arith.constant 0 : i32
    %c0_i32_0 = arith.constant 0 : i32
    return %c0_i32 : i32
  }
  func.func @transform_8(%arg0: i32) -> (i32, i32, i32, i32) {
    %c0_i32 = arith.constant 0 : i32
    %c0_i32_0 = arith.constant 0 : i32
    %c0_i32_1 = arith.constant 0 : i32
    %c0_i32_2 = arith.constant 0 : i32
    return %arg0, %c0_i32, %c0_i32_0, %c0_i32_1 : i32, i32, i32, i32
  }
}

</mosaic_0001>

<llo_original>
// kernel: decoder_block_forward.1
$region0: #{decoder_block_forward.1}
  #allocation0 [shape = 'u32[]', space=smem, size = 0x4, offset = 0x4, fixed_abs, tag = 'smem constant byte address 0x4 - core index']
  #allocation1 [shape = 'u32[144,128]{1,0:T(1,128)}', space=vmem, size = 0x12000, scoped, tag = 'internal scratch']
  #allocation2 [shape = 'f32[4,34,34]{2,1,0:T(8,128)}', space=vmem, size = 0x14000, scoped, tag = 'scratch operand']
  #allocation3 [shape = 'f32[2,34,34]{2,1,0:T(8,128)}', space=vmem, size = 0xa000, scoped, tag = 'scratch operand']
  %s0 = inlined_call_operand.hbm [shape: f32[2,4,16,16], index: 0, kind: input, shape index: {}]
  %s1 = inlined_call_operand.hbm [shape: f32[2,2,32,32], index: 1, kind: input, shape index: {}]
  %s2 = inlined_call_operand.vmem [shape: f32[32], index: 2, kind: input, shape index: {}]
  %s3 = inlined_call_operand.vmem [shape: f32[2], index: 3, kind: input, shape index: {}]
  %s4 = inlined_call_operand.vmem [shape: f32[72], index: 4, kind: input, shape index: {}]
  %s5 = inlined_call_operand.vmem [shape: f32[2], index: 5, kind: input, shape index: {}]
  %s6 = inlined_call_operand.vmem [shape: f32[36], index: 6, kind: input, shape index: {}]
  %s7 = inlined_call_operand.vmem [shape: f32[2], index: 7, kind: input, shape index: {}]
  %s8 = inlined_call_operand.hbm [shape: f32[2,2,32,32], index: 8, kind: output, shape index: {}]
  %s9 = sld [smem:[#allocation0]]
  $region97: #{decoder_block_forward.1} parent=0
    _
  %s11 = ssub.s32 1, %s9
  %s12 = scalar_select 0, %s11, %s9
  $region1: #{decoder_block_forward.1} parent=0
    #allocation4 [shape = 'u8[65536]{0}', space=vmem, size = 0x10000, scoped, tag = 'input window, operand 0']
    #allocation5 [shape = 's32[2]{0}', space=sflag, size = 0x8, scoped, tag = 'scoped memory for decoder_block_forward.1']
    #allocation6 [shape = 's32[2]{0}', space=sflag, size = 0x8, scoped, tag = 'scoped memory for decoder_block_forward.1']
    #allocation7 [shape = 's32[2]{0}', space=sflag, size = 0x8, scoped, tag = 'scoped memory for decoder_block_forward.1']
    #allocation8 [shape = 'u8[65536]{0}', space=vmem, size = 0x10000, scoped, tag = 'input window, operand 1']
    #allocation9 [shape = 's32[2]{0}', space=sflag, size = 0x8, scoped, tag = 'scoped memory for decoder_block_forward.1']
    #allocation10 [shape = 'u8[512]{0}', space=smem, size = 0x200, scoped, tag = 'input window, operand 2, single buffered']
    #allocation11 [shape = 'u8[512]{0}', space=smem, size = 0x200, scoped, tag = 'input window, operand 3, single buffered']
    #allocation12 [shape = 's32[1]{0}', space=sflag, size = 0x4, scoped, tag = 'scoped memory for decoder_block_forward.1']
    #allocation13 [shape = 'u8[512]{0}', space=smem, size = 0x200, scoped, tag = 'input window, operand 4, single buffered']
    #allocation14 [shape = 'u8[512]{0}', space=smem, size = 0x200, scoped, tag = 'input window, operand 5, single buffered']
    #allocation15 [shape = 's32[1]{0}', space=sflag, size = 0x4, scoped, tag = 'scoped memory for decoder_block_forward.1']
    #allocation16 [shape = 'u8[512]{0}', space=smem, size = 0x200, scoped, tag = 'input window, operand 6, single buffered']
    #allocation17 [shape = 'u8[512]{0}', space=smem, size = 0x200, scoped, tag = 'input window, operand 7, single buffered']
    #allocation18 [shape = 's32[1]{0}', space=sflag, size = 0x4, scoped, tag = 'scoped memory for decoder_block_forward.1']
    #allocation19 [shape = 'u8[65536]{0}', space=vmem, size = 0x10000, scoped, tag = 'output window, operand 0']
    %13 = vsyncpa [#allocation5], 0
    %s14 = scalar_lea.sflag [#allocation5], 1
    %15 = vsyncpa %s14, 0
    %16 = vsyncpa [#allocation9], 0
    %s17 = scalar_lea.sflag [#allocation9], 1
    %18 = vsyncpa %s17, 0
    %19 = vsyncpa [#allocation7], 0
    %20 = vsyncpa [#allocation12], 0
    %21 = vsyncpa [#allocation15], 0
    %22 = vsyncpa [#allocation18], 0
    %23 = vsyncpa [#allocation6], 0
    %s24 = scalar_lea.sflag [#allocation6], 1
    %25 = vsyncpa %s24, 0
    loop: start=0, step=1, limit=4
    $region2: #{decoder_block_forward.1} parent=1 // loop_pre_header
      _
    $region3: #{decoder_block_forward.1} parent=1 // loop_header
      %s27 = sphi 0, %s31
      %p28 = scmp.ge.s32.totalorder %s27, 4
      %s37 = sphi 0, %s39
      %s40 = sphi 0, %s37
      %s41 = sphi 0, %s40
      %s57 = sphi 0, %s41
      %s63 = sphi 0, %s65
      %s66 = sphi 0, %s63
      %s67 = sphi 0, %s66
      %s83 = sphi 0, %s67
      %s87 = sphi 0, %s87
      %s89 = sphi 0, %s87
      %s90 = sphi 0, %s89
      %s104 = sphi 0, %s90
      %s108 = sphi 0, %s108
      %s110 = sphi 0, %s108
      %s111 = sphi 0, %s110
      %s125 = sphi 0, %s111
      %s129 = sphi 0, %s129
      %s131 = sphi 0, %s129
      %s132 = sphi 0, %s131
      %s146 = sphi 0, %s132
      %s150 = sphi 0, %s150
      %s152 = sphi 0, %s150
      %s153 = sphi 0, %s152
      %s167 = sphi 0, %s153
      %s171 = sphi 0, %s171
      %s173 = sphi 0, %s171
      %s174 = sphi 0, %s173
      %s188 = sphi 0, %s174
      %s192 = sphi 0, %s192
      %s194 = sphi 0, %s192
      %s195 = sphi 0, %s194
      %s209 = sphi 0, %s195
      %s215 = sphi 0, %s217
      %s218 = sphi 0, %s215
      %s219 = sphi 0, %s218
      %s235 = sphi 0, %s219
    $region4: #{decoder_block_forward.1} parent=1 // loop_header_branch
      %30 = sbr.rel (%p28) target = $region8
    $region5: #{decoder_block_forward.1} parent=1 // loop_body
      %s32 = ssub.s32 %s27, 1
      %s33 = ssub.s32 %s27, 2
      %s34 = sadd.s32 %s27, 1
      %s35 = ssub.s32 %s27, %s34
      %p36 = scmp.eq.s32.totalorder %s35, 0
      %s38 = sadd.s32 %s37, 1
      %s39 = scalar_select %p36, %s37, %s38
      %p42 = pneg %p36
      %p43 = scmp.eq.s32.totalorder %s27, 1
      %p44 = por %p42, %p43
      %p45 = scmp.ne.s32.totalorder %s37, %s40
      %p46 = scmp.eq.s32.totalorder %s27, 0
      %p47 = por %p45, %p46
      %p48 = scmp.ne.s32.totalorder %s37, %s40
      %p49 = scmp.eq.s32.totalorder %s32, 1
      %p50 = por %p48, %p49
      %p51 = scmp.ne.s32.totalorder %s40, %s41
      %p52 = scmp.eq.s32.totalorder %s32, 0
      %p53 = por %p51, %p52
      %p54 = scmp.ne.s32.totalorder %s40, %s41
      %p55 = scmp.eq.s32.totalorder %s33, 1
      %p56 = por %p54, %p55
      %p58 = scmp.ne.s32.totalorder %s41, %s57
      %p59 = scmp.eq.s32.totalorder %s33, 0
      %p60 = por %p58, %p59
      %s61 = ssub.s32 %s27, %s34
      %p62 = scmp.eq.s32.totalorder %s61, 0
      %s64 = sadd.s32 %s63, 1
      %s65 = scalar_select %p62, %s63, %s64
      %p68 = pneg %p62
      %p69 = scmp.eq.s32.totalorder %s27, 1
      %p70 = por %p68, %p69
      %p71 = scmp.ne.s32.totalorder %s63, %s66
      %p72 = scmp.eq.s32.totalorder %s27, 0
      %p73 = por %p71, %p72
      %p74 = scmp.ne.s32.totalorder %s63, %s66
      %p75 = scmp.eq.s32.totalorder %s32, 1
      %p76 = por %p74, %p75
      %p77 = scmp.ne.s32.totalorder %s66, %s67
      %p78 = scmp.eq.s32.totalorder %s32, 0
      %p79 = por %p77, %p78
      %p80 = scmp.ne.s32.totalorder %s66, %s67
      %p81 = scmp.eq.s32.totalorder %s33, 1
      %p82 = por %p80, %p81
      %p84 = scmp.ne.s32.totalorder %s67, %s83
      %p85 = scmp.eq.s32.totalorder %s33, 0
      %p86 = por %p84, %p85
      %s88 = sadd.s32 %s87, 1
      %p91 = scmp.eq.s32.totalorder %s27, 1
      %p92 = scmp.ne.s32.totalorder %s87, %s89
      %p93 = scmp.eq.s32.totalorder %s27, 0
      %p94 = por %p92, %p93
      %p95 = scmp.ne.s32.totalorder %s87, %s89
      %p96 = scmp.eq.s32.totalorder %s32, 1
      %p97 = por %p95, %p96
      %p98 = scmp.ne.s32.totalorder %s89, %s90
      %p99 = scmp.eq.s32.totalorder %s32, 0
      %p100 = por %p98, %p99
      %p101 = scmp.ne.s32.totalorder %s89, %s90
      %p102 = scmp.eq.s32.totalorder %s33, 1
      %p103 = por %p101, %p102
      %p105 = scmp.ne.s32.totalorder %s90, %s104
      %p106 = scmp.eq.s32.totalorder %s33, 0
      %p107 = por %p105, %p106
      %s109 = sadd.s32 %s108, 1
      %p112 = scmp.eq.s32.totalorder %s27, 1
      %p113 = scmp.ne.s32.totalorder %s108, %s110
      %p114 = scmp.eq.s32.totalorder %s27, 0
      %p115 = por %p113, %p114
      %p116 = scmp.ne.s32.totalorder %s108, %s110
      %p117 = scmp.eq.s32.totalorder %s32, 1
      %p118 = por %p116, %p117
      %p119 = scmp.ne.s32.totalorder %s110, %s111
      %p120 = scmp.eq.s32.totalorder %s32, 0
      %p121 = por %p119, %p120
      %p122 = scmp.ne.s32.totalorder %s110, %s111
      %p123 = scmp.eq.s32.totalorder %s33, 1
      %p124 = por %p122, %p123
      %p126 = scmp.ne.s32.totalorder %s111, %s125
      %p127 = scmp.eq.s32.totalorder %s33, 0
      %p128 = por %p126, %p127
      %s130 = sadd.s32 %s129, 1
      %p133 = scmp.eq.s32.totalorder %s27, 1
      %p134 = scmp.ne.s32.totalorder %s129, %s131
      %p135 = scmp.eq.s32.totalorder %s27, 0
      %p136 = por %p134, %p135
      %p137 = scmp.ne.s32.totalorder %s129, %s131
      %p138 = scmp.eq.s32.totalorder %s32, 1
      %p139 = por %p137, %p138
      %p140 = scmp.ne.s32.totalorder %s131, %s132
      %p141 = scmp.eq.s32.totalorder %s32, 0
      %p142 = por %p140, %p141
      %p143 = scmp.ne.s32.totalorder %s131, %s132
      %p144 = scmp.eq.s32.totalorder %s33, 1
      %p145 = por %p143, %p144
      %p147 = scmp.ne.s32.totalorder %s132, %s146
      %p148 = scmp.eq.s32.totalorder %s33, 0
      %p149 = por %p147, %p148
      %s151 = sadd.s32 %s150, 1
      %p154 = scmp.eq.s32.totalorder %s27, 1
      %p155 = scmp.ne.s32.totalorder %s150, %s152
      %p156 = scmp.eq.s32.totalorder %s27, 0
      %p157 = por %p155, %p156
      %p158 = scmp.ne.s32.totalorder %s150, %s152
      %p159 = scmp.eq.s32.totalorder %s32, 1
      %p160 = por %p158, %p159
      %p161 = scmp.ne.s32.totalorder %s152, %s153
      %p162 = scmp.eq.s32.totalorder %s32, 0
      %p163 = por %p161, %p162
      %p164 = scmp.ne.s32.totalorder %s152, %s153
      %p165 = scmp.eq.s32.totalorder %s33, 1
      %p166 = por %p164, %p165
      %p168 = scmp.ne.s32.totalorder %s153, %s167
      %p169 = scmp.eq.s32.totalorder %s33, 0
      %p170 = por %p168, %p169
      %s172 = sadd.s32 %s171, 1
      %p175 = scmp.eq.s32.totalorder %s27, 1
      %p176 = scmp.ne.s32.totalorder %s171, %s173
      %p177 = scmp.eq.s32.totalorder %s27, 0
      %p178 = por %p176, %p177
      %p179 = scmp.ne.s32.totalorder %s171, %s173
      %p180 = scmp.eq.s32.totalorder %s32, 1
      %p181 = por %p179, %p180
      %p182 = scmp.ne.s32.totalorder %s173, %s174
      %p183 = scmp.eq.s32.totalorder %s32, 0
      %p184 = por %p182, %p183
      %p185 = scmp.ne.s32.totalorder %s173, %s174
      %p186 = scmp.eq.s32.totalorder %s33, 1
      %p187 = por %p185, %p186
      %p189 = scmp.ne.s32.totalorder %s174, %s188
      %p190 = scmp.eq.s32.totalorder %s33, 0
      %p191 = por %p189, %p190
      %s193 = sadd.s32 %s192, 1
      %p196 = scmp.eq.s32.totalorder %s27, 1
      %p197 = scmp.ne.s32.totalorder %s192, %s194
      %p198 = scmp.eq.s32.totalorder %s27, 0
      %p199 = por %p197, %p198
      %p200 = scmp.ne.s32.totalorder %s192, %s194
      %p201 = scmp.eq.s32.totalorder %s32, 1
      %p202 = por %p200, %p201
      %p203 = scmp.ne.s32.totalorder %s194, %s195
      %p204 = scmp.eq.s32.totalorder %s32, 0
      %p205 = por %p203, %p204
      %p206 = scmp.ne.s32.totalorder %s194, %s195
      %p207 = scmp.eq.s32.totalorder %s33, 1
      %p208 = por %p206, %p207
      %p210 = scmp.ne.s32.totalorder %s195, %s209
      %p211 = scmp.eq.s32.totalorder %s33, 0
      %p212 = por %p210, %p211
      %s213 = ssub.s32 %s27, %s34
      %p214 = scmp.eq.s32.totalorder %s213, 0
      %s216 = sadd.s32 %s215, 1
      %s217 = scalar_select %p214, %s215, %s216
      %p220 = pneg %p214
      %p221 = scmp.eq.s32.totalorder %s27, 1
      %p222 = por %p220, %p221
      %p223 = scmp.ne.s32.totalorder %s215, %s218
      %p224 = scmp.eq.s32.totalorder %s27, 0
      %p225 = por %p223, %p224
      %p226 = scmp.ne.s32.totalorder %s215, %s218
      %p227 = scmp.eq.s32.totalorder %s32, 1
      %p228 = por %p226, %p227
      %p229 = scmp.ne.s32.totalorder %s218, %s219
      %p230 = scmp.eq.s32.totalorder %s32, 0
      %p231 = por %p229, %p230
      %p232 = scmp.ne.s32.totalorder %s218, %s219
      %p233 = scmp.eq.s32.totalorder %s33, 1
      %p234 = por %p232, %p233
      %p236 = scmp.ne.s32.totalorder %s219, %s235
      %p237 = scmp.eq.s32.totalorder %s33, 0
      %p238 = por %p236, %p237
      %p239 = scmp.le.s32.totalorder 1, %s27
      %p240 = scmp.lt.s32.totalorder %s27, 3
      %p241 = pnand %p239, %p240
      %p242 = pneg %p241
      // Predicated region
      $region9: #{decoder_block_forward.1} parent=5 // pred_check
        _
      $region10: #{decoder_block_forward.1} parent=5 // pred_check_branch
        %244 = sbr.rel (%p241) target = $region12
      $region11: #{decoder_block_forward.1} parent=5 // pred_region
        %s245 = ssub.s32 %s27, 1
        // Predicated region
        $region13: #{decoder_block_forward.1} parent=11 // pred_check
          %p246 = pneg %p100
        $region14: #{decoder_block_forward.1} parent=11 // pred_check_branch
          %248 = sbr.rel (%p246) target = $region16
        $region15: #{decoder_block_forward.1} parent=11 // pred_region
          %s250 = ssub.s32 16, 16
          %251 = vsyncadd [#allocation7], %s250
          %s253 = sshll.u32 %s2, 4
          %s254 = int_to_ptr.vmem [resolvable:$true] %s253
          %256 = dma.vmem_to_smem %s254, 16, [#allocation10], [#allocation7]
        $region16: #{decoder_block_forward.1} parent=11 // pred_fallthru
          _
        // Predicated region
        $region17: #{decoder_block_forward.1} parent=11 // pred_check
          %p257 = pneg %p121
        $region18: #{decoder_block_forward.1} parent=11 // pred_check_branch
          %259 = sbr.rel (%p257) target = $region20
        $region19: #{decoder_block_forward.1} parent=11 // pred_region
          %s261 = ssub.s32 16, 16
          %262 = vsyncadd [#allocation12], %s261
          %s264 = sshll.u32 %s3, 4
          %s265 = int_to_ptr.vmem [resolvable:$true] %s264
          %267 = dma.vmem_to_smem %s265, 16, [#allocation11], [#allocation12]
        $region20: #{decoder_block_forward.1} parent=11 // pred_fallthru
          _
        // Predicated region
        $region21: #{decoder_block_forward.1} parent=11 // pred_check
          %p268 = pneg %p142
        $region22: #{decoder_block_forward.1} parent=11 // pred_check_branch
          %270 = sbr.rel (%p268) target = $region24
        $region23: #{decoder_block_forward.1} parent=11 // pred_region
          %s272 = ssub.s32 16, 16
          %273 = vsyncadd [#allocation12], %s272
          %s275 = sshll.u32 %s4, 4
          %s276 = int_to_ptr.vmem [resolvable:$true] %s275
          %278 = dma.vmem_to_smem %s276, 16, [#allocation13], [#allocation12]
        $region24: #{decoder_block_forward.1} parent=11 // pred_fallthru
          _
        // Predicated region
        $region25: #{decoder_block_forward.1} parent=11 // pred_check
          %p279 = pneg %p163
        $region26: #{decoder_block_forward.1} parent=11 // pred_check_branch
          %281 = sbr.rel (%p279) target = $region28
        $region27: #{decoder_block_forward.1} parent=11 // pred_region
          %s283 = ssub.s32 16, 16
          %284 = vsyncadd [#allocation15], %s283
          %s286 = sshll.u32 %s5, 4
          %s287 = int_to_ptr.vmem [resolvable:$true] %s286
          %289 = dma.vmem_to_smem %s287, 16, [#allocation14], [#allocation15]
        $region28: #{decoder_block_forward.1} parent=11 // pred_fallthru
          _
        // Predicated region
        $region29: #{decoder_block_forward.1} parent=11 // pred_check
          %p290 = pneg %p184
        $region30: #{decoder_block_forward.1} parent=11 // pred_check_branch
          %292 = sbr.rel (%p290) target = $region32
        $region31: #{decoder_block_forward.1} parent=11 // pred_region
          %s294 = ssub.s32 16, 16
          %295 = vsyncadd [#allocation15], %s294
          %s297 = sshll.u32 %s6, 4
          %s298 = int_to_ptr.vmem [resolvable:$true] %s297
          %300 = dma.vmem_to_smem %s298, 16, [#allocation16], [#allocation15]
        $region32: #{decoder_block_forward.1} parent=11 // pred_fallthru
          _
        // Predicated region
        $region33: #{decoder_block_forward.1} parent=11 // pred_check
          %p301 = pneg %p205
        $region34: #{decoder_block_forward.1} parent=11 // pred_check_branch
          %303 = sbr.rel (%p301) target = $region36
        $region35: #{decoder_block_forward.1} parent=11 // pred_region
          %s305 = ssub.s32 16, 16
          %306 = vsyncadd [#allocation18], %s305
          %s308 = sshll.u32 %s7, 4
          %s309 = int_to_ptr.vmem [resolvable:$true] %s308
          %311 = dma.vmem_to_smem %s309, 16, [#allocation17], [#allocation18]
        $region36: #{decoder_block_forward.1} parent=11 // pred_fallthru
          _
      $region12: #{decoder_block_forward.1} parent=5 // pred_fallthru
        _
      %p312 = scmp.lt.s32.totalorder %s27, 2
      // Predicated region
      $region37: #{decoder_block_forward.1} parent=5 // pred_check
        %p313 = pneg %p312
      $region38: #{decoder_block_forward.1} parent=5 // pred_check_branch
        %315 = sbr.rel (%p313) target = $region40
      $region39: #{decoder_block_forward.1} parent=5 // pred_region
        // Predicated region
        $region41: #{decoder_block_forward.1} parent=39 // pred_check
          %p316 = pneg %p47
        $region42: #{decoder_block_forward.1} parent=39 // pred_check_branch
          %318 = sbr.rel (%p316) target = $region44
        $region43: #{decoder_block_forward.1} parent=39 // pred_region
          %s319 = sand.u32 %s37, 1
          %s320 = scalar_lea.sflag [#allocation5], %s319
          %s321 = sand.u32 %s37, 1
          %s322 = smul.addr %s321, 64
          %s323 = scalar_lea.vmem [#allocation4], %s322
          %s325 = ssub.s32 1024, 1024
          %326 = vsyncadd %s320, %s325
          %s327 = smul.addr %s27, 8
          %s328 = smul.addr %s327, 128
          %s329 = scalar_lea.hbm %s0, %s328
          %s330 = sshll.u32 %s323, 4
          %s331 = int_to_ptr.vmem [resolvable:$true] %s330
          %336 = dma.hbm_to_vmem [thread:$0]  %s329, 1024, %s331, %s320, 128, 128, 8
        $region44: #{decoder_block_forward.1} parent=39 // pred_fallthru
          _
        // Predicated region
        $region45: #{decoder_block_forward.1} parent=39 // pred_check
          %p337 = pneg %p73
        $region46: #{decoder_block_forward.1} parent=39 // pred_check_branch
          %339 = sbr.rel (%p337) target = $region48
        $region47: #{decoder_block_forward.1} parent=39 // pred_region
          %s340 = sand.u32 %s63, 1
          %s341 = scalar_lea.sflag [#allocation9], %s340
          %s342 = sand.u32 %s63, 1
          %s343 = smul.addr %s342, 64
          %s344 = scalar_lea.vmem [#allocation8], %s343
          %s346 = ssub.s32 1024, 1024
          %347 = vsyncadd %s341, %s346
          %s348 = smul.addr %s27, 8
          %s349 = smul.addr %s348, 128
          %s350 = scalar_lea.hbm %s1, %s349
          %s351 = sshll.u32 %s344, 4
          %s352 = int_to_ptr.vmem [resolvable:$true] %s351
          %357 = dma.hbm_to_vmem [thread:$0]  %s350, 1024, %s352, %s341, 128, 128, 8
        $region48: #{decoder_block_forward.1} parent=39 // pred_fallthru
          _
      $region40: #{decoder_block_forward.1} parent=5 // pred_fallthru
        _
      %p358 = scmp.le.s32.totalorder 1, %s27
      %p359 = scmp.lt.s32.totalorder %s27, 3
      %p360 = pnand %p358, %p359
      %p361 = pneg %p360
      // Predicated region
      $region49: #{decoder_block_forward.1} parent=5 // pred_check
        _
      $region50: #{decoder_block_forward.1} parent=5 // pred_check_branch
        %363 = sbr.rel (%p360) target = $region52
      $region51: #{decoder_block_forward.1} parent=5 // pred_region
        %s364 = ssub.s32 %s27, 1
        %s365 = sand.u32 %s40, 1
        %s366 = scalar_lea.sflag [#allocation5], %s365
        %s367 = sand.u32 %s40, 1
        %s368 = smul.addr %s367, 64
        %s369 = scalar_lea.vmem [#allocation4], %s368
        // Predicated region
        $region53: #{decoder_block_forward.1} parent=51 // pred_check
          %p370 = pneg %p53
        $region54: #{decoder_block_forward.1} parent=51 // pred_check_branch
          %372 = sbr.rel (%p370) target = $region56
        $region55: #{decoder_block_forward.1} parent=51 // pred_region
          %373 = dma.done %s366, 1024
        $region56: #{decoder_block_forward.1} parent=51 // pred_fallthru
          _
        %s374 = sand.u32 %s66, 1
        %s375 = scalar_lea.sflag [#allocation9], %s374
        %s376 = sand.u32 %s66, 1
        %s377 = smul.addr %s376, 64
        %s378 = scalar_lea.vmem [#allocation8], %s377
        // Predicated region
        $region57: #{decoder_block_forward.1} parent=51 // pred_check
          %p379 = pneg %p79
        $region58: #{decoder_block_forward.1} parent=51 // pred_check_branch
          %381 = sbr.rel (%p379) target = $region60
        $region59: #{decoder_block_forward.1} parent=51 // pred_region
          %382 = dma.done %s375, 1024
        $region60: #{decoder_block_forward.1} parent=51 // pred_fallthru
          _
        // Predicated region
        $region61: #{decoder_block_forward.1} parent=51 // pred_check
          %p383 = pneg %p100
        $region62: #{decoder_block_forward.1} parent=51 // pred_check_branch
          %385 = sbr.rel (%p383) target = $region64
        $region63: #{decoder_block_forward.1} parent=51 // pred_region
          %386 = dma.done [#allocation7], 16
        $region64: #{decoder_block_forward.1} parent=51 // pred_fallthru
          _
        // Predicated region
        $region65: #{decoder_block_forward.1} parent=51 // pred_check
          %p387 = pneg %p121
        $region66: #{decoder_block_forward.1} parent=51 // pred_check_branch
          %389 = sbr.rel (%p387) target = $region68
        $region67: #{decoder_block_forward.1} parent=51 // pred_region
          %390 = dma.done [#allocation12], 16
        $region68: #{decoder_block_forward.1} parent=51 // pred_fallthru
          _
        // Predicated region
        $region69: #{decoder_block_forward.1} parent=51 // pred_check
          %p391 = pneg %p142
        $region70: #{decoder_block_forward.1} parent=51 // pred_check_branch
          %393 = sbr.rel (%p391) target = $region72
        $region71: #{decoder_block_forward.1} parent=51 // pred_region
          %394 = dma.done [#allocation12], 16
        $region72: #{decoder_block_forward.1} parent=51 // pred_fallthru
          _
        // Predicated region
        $region73: #{decoder_block_forward.1} parent=51 // pred_check
          %p395 = pneg %p163
        $region74: #{decoder_block_forward.1} parent=51 // pred_check_branch
          %397 = sbr.rel (%p395) target = $region76
        $region75: #{decoder_block_forward.1} parent=51 // pred_region
          %398 = dma.done [#allocation15], 16
        $region76: #{decoder_block_forward.1} parent=51 // pred_fallthru
          _
        // Predicated region
        $region77: #{decoder_block_forward.1} parent=51 // pred_check
          %p399 = pneg %p184
        $region78: #{decoder_block_forward.1} parent=51 // pred_check_branch
          %401 = sbr.rel (%p399) target = $region80
        $region79: #{decoder_block_forward.1} parent=51 // pred_region
          %402 = dma.done [#allocation15], 16
        $region80: #{decoder_block_forward.1} parent=51 // pred_fallthru
          _
        // Predicated region
        $region81: #{decoder_block_forward.1} parent=51 // pred_check
          %p403 = pneg %p205
        $region82: #{decoder_block_forward.1} parent=51 // pred_check_branch
          %405 = sbr.rel (%p403) target = $region84
        $region83: #{decoder_block_forward.1} parent=51 // pred_region
          %406 = dma.done [#allocation18], 16
        $region84: #{decoder_block_forward.1} parent=51 // pred_fallthru
          _
        %407 = sfence
        %s408 = sand.u32 %s40, 1
        %s409 = scalar_lea.sflag [#allocation5], %s408
        %s410 = sand.u32 %s40, 1
        %s411 = smul.addr %s410, 64
        %s412 = scalar_lea.vmem [#allocation4], %s411
        %p413 = pneg %p53
        %p414 = pneg %p50
        %s415 = sand.u32 %s66, 1
        %s416 = scalar_lea.sflag [#allocation9], %s415
        %s417 = sand.u32 %s66, 1
        %s418 = smul.addr %s417, 64
        %s419 = scalar_lea.vmem [#allocation8], %s418
        %p420 = pneg %p79
        %p421 = pneg %p76
        %p422 = pneg %p100
        %p423 = pneg %p97
        %p424 = pneg %p121
        %p425 = pneg %p118
        %p426 = pneg %p142
        %p427 = pneg %p139
        %p428 = pneg %p163
        %p429 = pneg %p160
        %p430 = pneg %p184
        %p431 = pneg %p181
        %p432 = pneg %p205
        %p433 = pneg %p202
        %p434 = pneg %p231
        %p435 = pneg %p228
        %s436 = sand.u32 %s218, 1
        %s437 = scalar_lea.sflag [#allocation6], %s436
        %s438 = sand.u32 %s218, 1
        %s439 = smul.addr %s438, 64
        %s440 = scalar_lea.vmem [#allocation19], %s439
        %v441 = vlaneseq
        %v442 = vshrl.u32 %v441, 7
        %v443 = vadd.s32 %v442, 8
        %v444 = vlaneseq
        %v445 = vand.u32 %v444, 127
        %v446 = vmul.u32 %v442, 2
        %v447 = vmul.u32 %v443, 2
        %vm448 = vcmp.eq.s32.totalorder %v445, %v446
        %vm449 = vcmp.eq.s32.totalorder %v445, %v447
        %v450 = vsel %vm448, 1.0, 0.0
        %v451 = vsel %vm449, 1.0, 0.0
        %v452 = vadd.s32 %v446, 1
        %v453 = vadd.s32 %v447, 1
        %vm454 = vcmp.eq.s32.totalorder %v445, %v452
        %vm455 = vcmp.eq.s32.totalorder %v445, %v453
        %v456 = vsel %vm454, 1.0, 0.0
        %v457 = vsel %vm455, 1.0, 0.0
        %v458 = vadd.s32 %v442, 16
        %v459 = vadd.s32 %v442, 24
        %v460 = vmul.u32 %v445, 2
        %vm461 = vcmp.eq.s32.totalorder %v442, %v460
        %vm462 = vcmp.eq.s32.totalorder %v443, %v460
        %vm463 = vcmp.eq.s32.totalorder %v458, %v460
        %vm464 = vcmp.eq.s32.totalorder %v459, %v460
        %v465 = vsel %vm461, 1.0, 0.0
        %v466 = vsel %vm462, 1.0, 0.0
        %v467 = vsel %vm463, 1.0, 0.0
        %v468 = vsel %vm464, 1.0, 0.0
        %v469 = vadd.s32 %v460, 1
        %vm470 = vcmp.eq.s32.totalorder %v442, %v469
        %vm471 = vcmp.eq.s32.totalorder %v443, %v469
        %vm472 = vcmp.eq.s32.totalorder %v458, %v469
        %vm473 = vcmp.eq.s32.totalorder %v459, %v469
        %v474 = vsel %vm470, 1.0, 0.0
        %v475 = vsel %vm471, 1.0, 0.0
        %v476 = vsel %vm472, 1.0, 0.0
        %v477 = vsel %vm473, 1.0, 0.0
        %vm478 = vcmask 277504
        %479 = vst.msk [vmem:[#allocation2] sm:$0xff] %vm478, 0.0
        %480 = vst.msk [vmem:[#allocation2 + $0x8] sm:$0xff] %vm478, 0.0
        %481 = vst.msk [vmem:[#allocation2 + $0x10] sm:$0xff] %vm478, 0.0
        %482 = vst.msk [vmem:[#allocation2 + $0x18] sm:$0xff] %vm478, 0.0
        %vm483 = vcmask 271360
        %484 = vst.msk [vmem:[#allocation2 + $0x20] sm:$0x3] %vm483, 0.0
        %485 = vst.msk [vmem:[#allocation2 + $0x28] sm:$0xff] %vm478, 0.0
        %486 = vst.msk [vmem:[#allocation2 + $0x30] sm:$0xff] %vm478, 0.0
        %487 = vst.msk [vmem:[#allocation2 + $0x38] sm:$0xff] %vm478, 0.0
        %488 = vst.msk [vmem:[#allocation2 + $0x40] sm:$0xff] %vm478, 0.0
        %489 = vst.msk [vmem:[#allocation2 + $0x48] sm:$0x3] %vm483, 0.0
        %490 = vst.msk [vmem:[#allocation2 + $0x50] sm:$0xff] %vm478, 0.0
        %491 = vst.msk [vmem:[#allocation2 + $0x58] sm:$0xff] %vm478, 0.0
        %492 = vst.msk [vmem:[#allocation2 + $0x60] sm:$0xff] %vm478, 0.0
        %493 = vst.msk [vmem:[#allocation2 + $0x68] sm:$0xff] %vm478, 0.0
        %494 = vst.msk [vmem:[#allocation2 + $0x70] sm:$0x3] %vm483, 0.0
        %495 = vst.msk [vmem:[#allocation2 + $0x78] sm:$0xff] %vm478, 0.0
        %496 = vst.msk [vmem:[#allocation2 + $0x80] sm:$0xff] %vm478, 0.0
        %497 = vst.msk [vmem:[#allocation2 + $0x88] sm:$0xff] %vm478, 0.0
        %498 = vst.msk [vmem:[#allocation2 + $0x90] sm:$0xff] %vm478, 0.0
        %499 = vst.msk [vmem:[#allocation2 + $0x98] sm:$0x3] %vm483, 0.0
        %500 = vst.msk [vmem:[#allocation3] sm:$0xff] %vm478, 0.0
        %501 = vst.msk [vmem:[#allocation3 + $0x8] sm:$0xff] %vm478, 0.0
        %502 = vst.msk [vmem:[#allocation3 + $0x10] sm:$0xff] %vm478, 0.0
        %503 = vst.msk [vmem:[#allocation3 + $0x18] sm:$0xff] %vm478, 0.0
        %504 = vst.msk [vmem:[#allocation3 + $0x20] sm:$0x3] %vm483, 0.0
        %505 = vst.msk [vmem:[#allocation3 + $0x28] sm:$0xff] %vm478, 0.0
        %506 = vst.msk [vmem:[#allocation3 + $0x30] sm:$0xff] %vm478, 0.0
        %507 = vst.msk [vmem:[#allocation3 + $0x38] sm:$0xff] %vm478, 0.0
        %508 = vst.msk [vmem:[#allocation3 + $0x40] sm:$0xff] %vm478, 0.0
        %509 = vst.msk [vmem:[#allocation3 + $0x48] sm:$0x3] %vm483, 0.0
        %v510 = vld [vmem:[%s369] sm:$0xff]
        %v511 = vld [vmem:[%s369 + $0x8] sm:$0xff]
        %s512 = scalar_lea.vmem %s369, 16 [#allocation4]
        %v513 = vld [vmem:[%s512] sm:$0xff]
        %v514 = vld [vmem:[%s512 + $0x8] sm:$0xff]
        %s515 = scalar_lea.vmem %s369, 32 [#allocation4]
        %v516 = vld [vmem:[%s515] sm:$0xff]
        %v517 = vld [vmem:[%s515 + $0x8] sm:$0xff]
        %s518 = scalar_lea.vmem %s369, 48 [#allocation4]
        %v519 = vld [vmem:[%s518] sm:$0xff]
        %v520 = vld [vmem:[%s518 + $0x8] sm:$0xff]
        %s521 = sld [smem:[#allocation10]]
        %v522 = vstv %s521
        %v523 = vmul.f32 %v522, %v510
        %v524 = vmul.f32 %v522, %v511
        %v525 = vadd.f32 %v523, 0.0
        %v526 = vadd.f32 %v524, 0.0
        %s527 = sld [smem:[#allocation10 + $0x8]]
        %v528 = vstv %s527
        %v529 = vmul.f32 %v528, %v513
        %v530 = vmul.f32 %v528, %v514
        %v531 = vadd.f32 %v525, %v529
        %v532 = vadd.f32 %v526, %v530
        %s533 = sld [smem:[#allocation10 + $0x10]]
        %v534 = vstv %s533
        %v535 = vmul.f32 %v534, %v516
        %v536 = vmul.f32 %v534, %v517
        %v537 = vadd.f32 %v531, %v535
        %v538 = vadd.f32 %v532, %v536
        %s539 = sld [smem:[#allocation10 + $0x18]]
        %v540 = vstv %s539
        %v541 = vmul.f32 %v540, %v519
        %v542 = vmul.f32 %v540, %v520
        %v543 = vadd.f32 %v537, %v541
        %v544 = vadd.f32 %v538, %v542
        %s545 = sld [smem:[#allocation10 + $0x1]]
        %v546 = vstv %s545
        %v547 = vmul.f32 %v546, %v510
        %v548 = vmul.f32 %v546, %v511
        %v549 = vadd.f32 %v547, 0.0
        %v550 = vadd.f32 %v548, 0.0
        %s551 = sld [smem:[#allocation10 + $0x9]]
        %v552 = vstv %s551
        %v553 = vmul.f32 %v552, %v513
        %v554 = vmul.f32 %v552, %v514
        %v555 = vadd.f32 %v549, %v553
        %v556 = vadd.f32 %v550, %v554
        %s557 = sld [smem:[#allocation10 + $0x11]]
        %v558 = vstv %s557
        %v559 = vmul.f32 %v558, %v516
        %v560 = vmul.f32 %v558, %v517
        %v561 = vadd.f32 %v555, %v559
        %v562 = vadd.f32 %v556, %v560
        %s563 = sld [smem:[#allocation10 + $0x19]]
        %v564 = vstv %s563
        %v565 = vmul.f32 %v564, %v519
        %v566 = vmul.f32 %v564, %v520
        %v567 = vadd.f32 %v561, %v565
        %v568 = vadd.f32 %v562, %v566
        %vm569 = vcmask 130048
        %v571 = vsel %vm569, %v567, 0
        %v574 = vsel %vm569, %v568, 0
        %576 = vmatprep.subr.mxu0 0.0
        %577 = vmatpush1.msra.mxu0 %v456
        %578 = vmatprep.subr.mxu0 0.0
        %579 = vmatpush1.msra.mxu0 %v457
        %580 = vmatprep.subr.mxu0 0.0
        %581 = vmatpush1.msra.mxu0 0.0
        %582 = vmatprep.subr.mxu0 0.0
        %583 = vmatpush1.msra.mxu0 0.0
        %584 = vmatprep.subr.mxu0 0.0
        %585 = vmatpush1.msra.mxu0 0.0
        %586 = vmatprep.subr.mxu0 0.0
        %587 = vmatpush1.msra.mxu0 0.0
        %588 = vmatprep.subr.mxu0 0.0
        %589 = vmatpush1.msra.mxu0 0.0
        %590 = vmatprep.subr.mxu0 0.0
        %591 = vmatpush1.msra.mxu0 0.0
        %592 = vmatprep.subr.mxu0 0.0
        %593 = vmatpush1.msra.mxu0 0.0
        %594 = vmatprep.subr.mxu0 0.0
        %595 = vmatpush1.msra.mxu0 0.0
        %596 = vmatprep.subr.mxu0 0.0
        %597 = vmatpush1.msra.mxu0 0.0
        %598 = vmatprep.subr.mxu0 0.0
        %599 = vmatpush1.msra.mxu0 0.0
        %600 = vmatprep.subr.mxu0 0.0
        %601 = vmatpush1.msra.mxu0 0.0
        %602 = vmatprep.subr.mxu0 0.0
        %603 = vmatpush1.msra.mxu0 0.0
        %604 = vmatprep.subr.mxu0 0.0
        %605 = vmatpush1.msra.mxu0 0.0
        %606 = vmatprep.subr.mxu0 0.0
        %607 = vmatpush1.msra.mxu0 0.0
        %608 = vmatprep.subr.mxu0 0.0
        %609 = vmatpush1.msra.mxu0 0.0
        %610 = vmatprep.subr.mxu0 0.0
        %611 = vmatpush1.msra.mxu0 0.0
        %612 = vmatprep.subr.mxu0 0.0
        %613 = vmatpush1.msra.mxu0 0.0
        %614 = vmatprep.subr.mxu0 0.0
        %615 = vmatpush1.msra.mxu0 0.0
        %616 = vmatprep.subr.mxu0 0.0
        %617 = vmatpush1.msra.mxu0 0.0
        %618 = vmatprep.subr.mxu0 0.0
        %619 = vmatpush1.msra.mxu0 0.0
        %620 = vmatprep.subr.mxu0 0.0
        %621 = vmatpush1.msra.mxu0 0.0
        %622 = vmatprep.subr.mxu0 0.0
        %623 = vmatpush1.msra.mxu0 0.0
        %624 = vmatprep.subr.mxu0 0.0
        %625 = vmatpush1.msra.mxu0 0.0
        %626 = vmatprep.subr.mxu0 0.0
        %627 = vmatpush1.msra.mxu0 0.0
        %628 = vmatprep.subr.mxu0 0.0
        %629 = vmatpush1.msra.mxu0 0.0
        %630 = vmatprep.subr.mxu0 0.0
        %631 = vmatpush1.msra.mxu0 0.0
        %632 = vmatprep.subr.mxu0 0.0
        %633 = vmatpush1.msra.mxu0 0.0
        %634 = vmatprep.subr.mxu0 0.0
        %635 = vmatpush1.msra.mxu0 0.0
        %636 = vmatprep.subr.mxu0 0.0
        %637 = vmatpush1.msra.mxu0 0.0
        %638 = vmatprep.subr.mxu0 0.0
        %639 = vmatpush1.msra.mxu0 0.0
        %640 = vmatprep.mubr.f32.mxu0 0.0
        %641 = vmatmul.mubr.f32.gmra.mrb[0].mxu0 %v571
        %v642 = vpop.f32.mrb[0].mxu0
        %v643 = vadd.f32 0.0, %v642
        %v644 = vpop.f32.mrb[0].mxu0
        %645 = vmatprep.mubr.f32.mxu0 0.0
        %646 = vmatmul.mubr.f32.gmra.mrb[0].mxu0 %v574
        %v647 = vpop.f32.mrb[0].mxu0
        %v648 = vadd.f32 0.0, %v647
        %v649 = vpop.f32.mrb[0].mxu0
        %650 = vdwg.mxu0
        %v652 = vsel %vm569, %v543, 0
        %v655 = vsel %vm569, %v544, 0
        %657 = vmatprep.subr.mxu0 0.0
        %658 = vmatpush1.msra.mxu0 %v450
        %659 = vmatprep.subr.mxu0 0.0
        %660 = vmatpush1.msra.mxu0 %v451
        %661 = vmatprep.subr.mxu0 0.0
        %662 = vmatpush1.msra.mxu0 0.0
        %663 = vmatprep.subr.mxu0 0.0
        %664 = vmatpush1.msra.mxu0 0.0
        %665 = vmatprep.subr.mxu0 0.0
        %666 = vmatpush1.msra.mxu0 0.0
        %667 = vmatprep.subr.mxu0 0.0
        %668 = vmatpush1.msra.mxu0 0.0
        %669 = vmatprep.subr.mxu0 0.0
        %670 = vmatpush1.msra.mxu0 0.0
        %671 = vmatprep.subr.mxu0 0.0
        %672 = vmatpush1.msra.mxu0 0.0
        %673 = vmatprep.subr.mxu0 0.0
        %674 = vmatpush1.msra.mxu0 0.0
        %675 = vmatprep.subr.mxu0 0.0
        %676 = vmatpush1.msra.mxu0 0.0
        %677 = vmatprep.subr.mxu0 0.0
        %678 = vmatpush1.msra.mxu0 0.0
        %679 = vmatprep.subr.mxu0 0.0
        %680 = vmatpush1.msra.mxu0 0.0
        %681 = vmatprep.subr.mxu0 0.0
        %682 = vmatpush1.msra.mxu0 0.0
        %683 = vmatprep.subr.mxu0 0.0
        %684 = vmatpush1.msra.mxu0 0.0
        %685 = vmatprep.subr.mxu0 0.0
        %686 = vmatpush1.msra.mxu0 0.0
        %687 = vmatprep.subr.mxu0 0.0
        %688 = vmatpush1.msra.mxu0 0.0
        %689 = vmatprep.subr.mxu0 0.0
        %690 = vmatpush1.msra.mxu0 0.0
        %691 = vmatprep.subr.mxu0 0.0
        %692 = vmatpush1.msra.mxu0 0.0
        %693 = vmatprep.subr.mxu0 0.0
        %694 = vmatpush1.msra.mxu0 0.0
        %695 = vmatprep.subr.mxu0 0.0
        %696 = vmatpush1.msra.mxu0 0.0
        %697 = vmatprep.subr.mxu0 0.0
        %698 = vmatpush1.msra.mxu0 0.0
        %699 = vmatprep.subr.mxu0 0.0
        %700 = vmatpush1.msra.mxu0 0.0
        %701 = vmatprep.subr.mxu0 0.0
        %702 = vmatpush1.msra.mxu0 0.0
        %703 = vmatprep.subr.mxu0 0.0
        %704 = vmatpush1.msra.mxu0 0.0
        %705 = vmatprep.subr.mxu0 0.0
        %706 = vmatpush1.msra.mxu0 0.0
        %707 = vmatprep.subr.mxu0 0.0
        %708 = vmatpush1.msra.mxu0 0.0
        %709 = vmatprep.subr.mxu0 0.0
        %710 = vmatpush1.msra.mxu0 0.0
        %711 = vmatprep.subr.mxu0 0.0
        %712 = vmatpush1.msra.mxu0 0.0
        %713 = vmatprep.subr.mxu0 0.0
        %714 = vmatpush1.msra.mxu0 0.0
        %715 = vmatprep.subr.mxu0 0.0
        %716 = vmatpush1.msra.mxu0 0.0
        %717 = vmatprep.subr.mxu0 0.0
        %718 = vmatpush1.msra.mxu0 0.0
        %719 = vmatprep.subr.mxu0 0.0
        %720 = vmatpush1.msra.mxu0 0.0
        %721 = vmatprep.mubr.f32.mxu0 0.0
        %722 = vmatmul.mubr.f32.gmra.mrb[0].mxu0 %v652
        %v723 = vpop.f32.mrb[0].mxu0
        %v724 = vadd.f32 %v643, %v723
        %v725 = vpop.f32.mrb[0].mxu0
        %726 = vmatprep.mubr.f32.mxu0 0.0
        %727 = vmatmul.mubr.f32.gmra.mrb[0].mxu0 %v655
        %v728 = vpop.f32.mrb[0].mxu0
        %v729 = vadd.f32 %v648, %v728
        %v730 = vpop.f32.mrb[0].mxu0
        %731 = vdwg.mxu0
        %s732 = sld [smem:[#allocation10 + $0x2]]
        %v733 = vstv %s732
        %v734 = vmul.f32 %v733, %v510
        %v735 = vmul.f32 %v733, %v511
        %v736 = vadd.f32 %v734, 0.0
        %v737 = vadd.f32 %v735, 0.0
        %s738 = sld [smem:[#allocation10 + $0xa]]
        %v739 = vstv %s738
        %v740 = vmul.f32 %v739, %v513
        %v741 = vmul.f32 %v739, %v514
        %v742 = vadd.f32 %v736, %v740
        %v743 = vadd.f32 %v737, %v741
        %s744 = sld [smem:[#allocation10 + $0x12]]
        %v745 = vstv %s744
        %v746 = vmul.f32 %v745, %v516
        %v747 = vmul.f32 %v745, %v517
        %v748 = vadd.f32 %v742, %v746
        %v749 = vadd.f32 %v743, %v747
        %s750 = sld [smem:[#allocation10 + $0x1a]]
        %v751 = vstv %s750
        %v752 = vmul.f32 %v751, %v519
        %v753 = vmul.f32 %v751, %v520
        %v754 = vadd.f32 %v748, %v752
        %v755 = vadd.f32 %v749, %v753
        %s756 = sld [smem:[#allocation10 + $0x3]]
        %v757 = vstv %s756
        %v758 = vmul.f32 %v757, %v510
        %v759 = vmul.f32 %v757, %v511
        %v760 = vadd.f32 %v758, 0.0
        %v761 = vadd.f32 %v759, 0.0
        %s762 = sld [smem:[#allocation10 + $0xb]]
        %v763 = vstv %s762
        %v764 = vmul.f32 %v763, %v513
        %v765 = vmul.f32 %v763, %v514
        %v766 = vadd.f32 %v760, %v764
        %v767 = vadd.f32 %v761, %v765
        %s768 = sld [smem:[#allocation10 + $0x13]]
        %v769 = vstv %s768
        %v770 = vmul.f32 %v769, %v516
        %v771 = vmul.f32 %v769, %v517
        %v772 = vadd.f32 %v766, %v770
        %v773 = vadd.f32 %v767, %v771
        %s774 = sld [smem:[#allocation10 + $0x1b]]
        %v775 = vstv %s774
        %v776 = vmul.f32 %v775, %v519
        %v777 = vmul.f32 %v775, %v520
        %v778 = vadd.f32 %v772, %v776
        %v779 = vadd.f32 %v773, %v777
        %v781 = vsel %vm569, %v778, 0
        %v784 = vsel %vm569, %v779, 0
        %786 = vmatprep.subr.mxu0 0.0
        %787 = vmatpush1.msra.mxu0 %v456
        %788 = vmatprep.subr.mxu0 0.0
        %789 = vmatpush1.msra.mxu0 %v457
        %790 = vmatprep.subr.mxu0 0.0
        %791 = vmatpush1.msra.mxu0 0.0
        %792 = vmatprep.subr.mxu0 0.0
        %793 = vmatpush1.msra.mxu0 0.0
        %794 = vmatprep.subr.mxu0 0.0
        %795 = vmatpush1.msra.mxu0 0.0
        %796 = vmatprep.subr.mxu0 0.0
        %797 = vmatpush1.msra.mxu0 0.0
        %798 = vmatprep.subr.mxu0 0.0
        %799 = vmatpush1.msra.mxu0 0.0
        %800 = vmatprep.subr.mxu0 0.0
        %801 = vmatpush1.msra.mxu0 0.0
        %802 = vmatprep.subr.mxu0 0.0
        %803 = vmatpush1.msra.mxu0 0.0
        %804 = vmatprep.subr.mxu0 0.0
        %805 = vmatpush1.msra.mxu0 0.0
        %806 = vmatprep.subr.mxu0 0.0
        %807 = vmatpush1.msra.mxu0 0.0
        %808 = vmatprep.subr.mxu0 0.0
        %809 = vmatpush1.msra.mxu0 0.0
        %810 = vmatprep.subr.mxu0 0.0
        %811 = vmatpush1.msra.mxu0 0.0
        %812 = vmatprep.subr.mxu0 0.0
        %813 = vmatpush1.msra.mxu0 0.0
        %814 = vmatprep.subr.mxu0 0.0
        %815 = vmatpush1.msra.mxu0 0.0
        %816 = vmatprep.subr.mxu0 0.0
        %817 = vmatpush1.msra.mxu0 0.0
        %818 = vmatprep.subr.mxu0 0.0
        %819 = vmatpush1.msra.mxu0 0.0
        %820 = vmatprep.subr.mxu0 0.0
        %821 = vmatpush1.msra.mxu0 0.0
        %822 = vmatprep.subr.mxu0 0.0
        %823 = vmatpush1.msra.mxu0 0.0
        %824 = vmatprep.subr.mxu0 0.0
        %825 = vmatpush1.msra.mxu0 0.0
        %826 = vmatprep.subr.mxu0 0.0
        %827 = vmatpush1.msra.mxu0 0.0
        %828 = vmatprep.subr.mxu0 0.0
        %829 = vmatpush1.msra.mxu0 0.0
        %830 = vmatprep.subr.mxu0 0.0
        %831 = vmatpush1.msra.mxu0 0.0
        %832 = vmatprep.subr.mxu0 0.0
        %833 = vmatpush1.msra.mxu0 0.0
        %834 = vmatprep.subr.mxu0 0.0
        %835 = vmatpush1.msra.mxu0 0.0
        %836 = vmatprep.subr.mxu0 0.0
        %837 = vmatpush1.msra.mxu0 0.0
        %838 = vmatprep.subr.mxu0 0.0
        %839 = vmatpush1.msra.mxu0 0.0
        %840 = vmatprep.subr.mxu0 0.0
        %841 = vmatpush1.msra.mxu0 0.0
        %842 = vmatprep.subr.mxu0 0.0
        %843 = vmatpush1.msra.mxu0 0.0
        %844 = vmatprep.subr.mxu0 0.0
        %845 = vmatpush1.msra.mxu0 0.0
        %846 = vmatprep.subr.mxu0 0.0
        %847 = vmatpush1.msra.mxu0 0.0
        %848 = vmatprep.subr.mxu0 0.0
        %849 = vmatpush1.msra.mxu0 0.0
        %850 = vmatprep.mubr.f32.mxu0 0.0
        %851 = vmatmul.mubr.f32.gmra.mrb[0].mxu0 %v781
        %v852 = vpop.f32.mrb[0].mxu0
        %v853 = vadd.f32 0.0, %v852
        %v854 = vpop.f32.mrb[0].mxu0
        %855 = vmatprep.mubr.f32.mxu0 0.0
        %856 = vmatmul.mubr.f32.gmra.mrb[0].mxu0 %v784
        %v857 = vpop.f32.mrb[0].mxu0
        %v858 = vadd.f32 0.0, %v857
        %v859 = vpop.f32.mrb[0].mxu0
        %860 = vdwg.mxu0
        %v862 = vsel %vm569, %v754, 0
        %v865 = vsel %vm569, %v755, 0
        %867 = vmatprep.subr.mxu0 0.0
        %868 = vmatpush1.msra.mxu0 %v450
        %869 = vmatprep.subr.mxu0 0.0
        %870 = vmatpush1.msra.mxu0 %v451
        %871 = vmatprep.subr.mxu0 0.0
        %872 = vmatpush1.msra.mxu0 0.0
        %873 = vmatprep.subr.mxu0 0.0
        %874 = vmatpush1.msra.mxu0 0.0
        %875 = vmatprep.subr.mxu0 0.0
        %876 = vmatpush1.msra.mxu0 0.0
        %877 = vmatprep.subr.mxu0 0.0
        %878 = vmatpush1.msra.mxu0 0.0
        %879 = vmatprep.subr.mxu0 0.0
        %880 = vmatpush1.msra.mxu0 0.0
        %881 = vmatprep.subr.mxu0 0.0
        %882 = vmatpush1.msra.mxu0 0.0
        %883 = vmatprep.subr.mxu0 0.0
        %884 = vmatpush1.msra.mxu0 0.0
        %885 = vmatprep.subr.mxu0 0.0
        %886 = vmatpush1.msra.mxu0 0.0
        %887 = vmatprep.subr.mxu0 0.0
        %888 = vmatpush1.msra.mxu0 0.0
        %889 = vmatprep.subr.mxu0 0.0
        %890 = vmatpush1.msra.mxu0 0.0
        %891 = vmatprep.subr.mxu0 0.0
        %892 = vmatpush1.msra.mxu0 0.0
        %893 = vmatprep.subr.mxu0 0.0
        %894 = vmatpush1.msra.mxu0 0.0
        %895 = vmatprep.subr.mxu0 0.0
        %896 = vmatpush1.msra.mxu0 0.0
        %897 = vmatprep.subr.mxu0 0.0
        %898 = vmatpush1.msra.mxu0 0.0
        %899 = vmatprep.subr.mxu0 0.0
        %900 = vmatpush1.msra.mxu0 0.0
        %901 = vmatprep.subr.mxu0 0.0
        %902 = vmatpush1.msra.mxu0 0.0
        %903 = vmatprep.subr.mxu0 0.0
        %904 = vmatpush1.msra.mxu0 0.0
        %905 = vmatprep.subr.mxu0 0.0
        %906 = vmatpush1.msra.mxu0 0.0
        %907 = vmatprep.subr.mxu0 0.0
        %908 = vmatpush1.msra.mxu0 0.0
        %909 = vmatprep.subr.mxu0 0.0
        %910 = vmatpush1.msra.mxu0 0.0
        %911 = vmatprep.subr.mxu0 0.0
        %912 = vmatpush1.msra.mxu0 0.0
        %913 = vmatprep.subr.mxu0 0.0
        %914 = vmatpush1.msra.mxu0 0.0
        %915 = vmatprep.subr.mxu0 0.0
        %916 = vmatpush1.msra.mxu0 0.0
        %917 = vmatprep.subr.mxu0 0.0
        %918 = vmatpush1.msra.mxu0 0.0
        %919 = vmatprep.subr.mxu0 0.0
        %920 = vmatpush1.msra.mxu0 0.0
        %921 = vmatprep.subr.mxu0 0.0
        %922 = vmatpush1.msra.mxu0 0.0
        %923 = vmatprep.subr.mxu0 0.0
        %924 = vmatpush1.msra.mxu0 0.0
        %925 = vmatprep.subr.mxu0 0.0
        %926 = vmatpush1.msra.mxu0 0.0
        %927 = vmatprep.subr.mxu0 0.0
        %928 = vmatpush1.msra.mxu0 0.0
        %929 = vmatprep.subr.mxu0 0.0
        %930 = vmatpush1.msra.mxu0 0.0
        %931 = vmatprep.mubr.f32.mxu0 0.0
        %932 = vmatmul.mubr.f32.gmra.mrb[0].mxu0 %v862
        %v933 = vpop.f32.mrb[0].mxu0
        %v934 = vadd.f32 %v853, %v933
        %v935 = vpop.f32.mrb[0].mxu0
        %936 = vmatprep.mubr.f32.mxu0 0.0
        %937 = vmatmul.mubr.f32.gmra.mrb[0].mxu0 %v865
        %v938 = vpop.f32.mrb[0].mxu0
        %v939 = vadd.f32 %v858, %v938
        %v940 = vpop.f32.mrb[0].mxu0
        %941 = vdwg.mxu0
        %v943 = vsel %vm569, %v474, 0
        %v946 = vsel %vm569, %v475, 0
        %v949 = vsel %vm569, %v476, 0
        %v952 = vsel %vm569, %v477, 0
        %954 = vmatprep.subr.mxu0 0.0
        %955 = vmatpush1.msra.mxu0 %v934
        %956 = vmatprep.subr.mxu0 0.0
        %957 = vmatpush1.msra.mxu0 %v939
        %958 = vmatprep.subr.mxu0 0.0
        %959 = vmatpush1.msra.mxu0 0.0
        %960 = vmatprep.subr.mxu0 0.0
        %961 = vmatpush1.msra.mxu0 0.0
        %962 = vmatprep.subr.mxu0 0.0
        %963 = vmatpush1.msra.mxu0 0.0
        %964 = vmatprep.subr.mxu0 0.0
        %965 = vmatpush1.msra.mxu0 0.0
        %966 = vmatprep.subr.mxu0 0.0
        %967 = vmatpush1.msra.mxu0 0.0
        %968 = vmatprep.subr.mxu0 0.0
        %969 = vmatpush1.msra.mxu0 0.0
        %970 = vmatprep.subr.mxu0 0.0
        %971 = vmatpush1.msra.mxu0 0.0
        %972 = vmatprep.subr.mxu0 0.0
        %973 = vmatpush1.msra.mxu0 0.0
        %974 = vmatprep.subr.mxu0 0.0
        %975 = vmatpush1.msra.mxu0 0.0
        %976 = vmatprep.subr.mxu0 0.0
        %977 = vmatpush1.msra.mxu0 0.0
        %978 = vmatprep.subr.mxu0 0.0
        %979 = vmatpush1.msra.mxu0 0.0
        %980 = vmatprep.subr.mxu0 0.0
        %981 = vmatpush1.msra.mxu0 0.0
        %982 = vmatprep.subr.mxu0 0.0
        %983 = vmatpush1.msra.mxu0 0.0
        %984 = vmatprep.subr.mxu0 0.0
        %985 = vmatpush1.msra.mxu0 0.0
        %986 = vmatprep.subr.mxu0 0.0
        %987 = vmatpush1.msra.mxu0 0.0
        %988 = vmatprep.subr.mxu0 0.0
        %989 = vmatpush1.msra.mxu0 0.0
        %990 = vmatprep.subr.mxu0 0.0
        %991 = vmatpush1.msra.mxu0 0.0
        %992 = vmatprep.subr.mxu0 0.0
        %993 = vmatpush1.msra.mxu0 0.0
        %994 = vmatprep.subr.mxu0 0.0
        %995 = vmatpush1.msra.mxu0 0.0
        %996 = vmatprep.subr.mxu0 0.0
        %997 = vmatpush1.msra.mxu0 0.0
        %998 = vmatprep.subr.mxu0 0.0
        %999 = vmatpush1.msra.mxu0 0.0
        %1000 = vmatprep.subr.mxu0 0.0
        %1001 = vmatpush1.msra.mxu0 0.0
        %1002 = vmatprep.subr.mxu0 0.0
        %1003 = vmatpush1.msra.mxu0 0.0
        %1004 = vmatprep.subr.mxu0 0.0
        %1005 = vmatpush1.msra.mxu0 0.0
        %1006 = vmatprep.subr.mxu0 0.0
        %1007 = vmatpush1.msra.mxu0 0.0
        %1008 = vmatprep.subr.mxu0 0.0
        %1009 = vmatpush1.msra.mxu0 0.0
        %1010 = vmatprep.subr.mxu0 0.0
        %1011 = vmatpush1.msra.mxu0 0.0
        %1012 = vmatprep.subr.mxu0 0.0
        %1013 = vmatpush1.msra.mxu0 0.0
        %1014 = vmatprep.subr.mxu0 0.0
        %1015 = vmatpush1.msra.mxu0 0.0
        %1016 = vmatprep.subr.mxu0 0.0
        %1017 = vmatpush1.msra.mxu0 0.0
        %1018 = vmatprep.mubr.f32.mxu0 0.0
        %1019 = vmatmul.mubr.f32.gmra.mrb[0].mxu0 %v943
        %v1020 = vpop.f32.mrb[0].mxu0
        %v1021 = vadd.f32 0.0, %v1020
        %v1022 = vpop.f32.mrb[0].mxu0
        %1023 = vmatprep.mubr.f32.mxu0 0.0
        %1024 = vmatmul.mubr.f32.gmra.mrb[0].mxu0 %v946
        %v1025 = vpop.f32.mrb[0].mxu0
        %v1026 = vadd.f32 0.0, %v1025
        %v1027 = vpop.f32.mrb[0].mxu0
        %1028 = vmatprep.mubr.f32.mxu0 0.0
        %1029 = vmatmul.mubr.f32.gmra.mrb[0].mxu0 %v949
        %v1030 = vpop.f32.mrb[0].mxu0
        %v1031 = vadd.f32 0.0, %v1030
        %v1032 = vpop.f32.mrb[0].mxu0
        %1033 = vmatprep.mubr.f32.mxu0 0.0
        %1034 = vmatmul.mubr.f32.gmra.mrb[0].mxu0 %v952
        %v1035 = vpop.f32.mrb[0].mxu0
        %v1036 = vadd.f32 0.0, %v1035
        %v1037 = vpop.f32.mrb[0].mxu0
        %1038 = vdwg.mxu0
        %v1040 = vsel %vm569, %v465, 0
        %v1043 = vsel %vm569, %v466, 0
        %v1046 = vsel %vm569, %v467, 0
        %v1049 = vsel %vm569, %v468, 0
        %1051 = vmatprep.subr.mxu0 0.0
        %1052 = vmatpush1.msra.mxu0 %v724
        %1053 = vmatprep.subr.mxu0 0.0
        %1054 = vmatpush1.msra.mxu0 %v729
        %1055 = vmatprep.subr.mxu0 0.0
        %1056 = vmatpush1.msra.mxu0 0.0
        %1057 = vmatprep.subr.mxu0 0.0
        %1058 = vmatpush1.msra.mxu0 0.0
        %1059 = vmatprep.subr.mxu0 0.0
        %1060 = vmatpush1.msra.mxu0 0.0
        %1061 = vmatprep.subr.mxu0 0.0
        %1062 = vmatpush1.msra.mxu0 0.0
        %1063 = vmatprep.subr.mxu0 0.0
        %1064 = vmatpush1.msra.mxu0 0.0
        %1065 = vmatprep.subr.mxu0 0.0
        %1066 = vmatpush1.msra.mxu0 0.0
        %1067 = vmatprep.subr.mxu0 0.0
        %1068 = vmatpush1.msra.mxu0 0.0
        %1069 = vmatprep.subr.mxu0 0.0
        %1070 = vmatpush1.msra.mxu0 0.0
        %1071 = vmatprep.subr.mxu0 0.0
        %1072 = vmatpush1.msra.mxu0 0.0
        %1073 = vmatprep.subr.mxu0 0.0
        %1074 = vmatpush1.msra.mxu0 0.0
        %1075 = vmatprep.subr.mxu0 0.0
        %1076 = vmatpush1.msra.mxu0 0.0
        %1077 = vmatprep.subr.mxu0 0.0
        %1078 = vmatpush1.msra.mxu0 0.0
        %1079 = vmatprep.subr.mxu0 0.0
        %1080 = vmatpush1.msra.mxu0 0.0
        %1081 = vmatprep.subr.mxu0 0.0
        %1082 = vmatpush1.msra.mxu0 0.0
        %1083 = vmatprep.subr.mxu0 0.0
        %1084 = vmatpush1.msra.mxu0 0.0
        %1085 = vmatprep.subr.mxu0 0.0
        %1086 = vmatpush1.msra.mxu0 0.0
        %1087 = vmatprep.subr.mxu0 0.0
        %1088 = vmatpush1.msra.mxu0 0.0
        %1089 = vmatprep.subr.mxu0 0.0
        %1090 = vmatpush1.msra.mxu0 0.0
        %1091 = vmatprep.subr.mxu0 0.0
        %1092 = vmatpush1.msra.mxu0 0.0
        %1093 = vmatprep.subr.mxu0 0.0
        %1094 = vmatpush1.msra.mxu0 0.0
        %1095 = vmatprep.subr.mxu0 0.0
        %1096 = vmatpush1.msra.mxu0 0.0
        %1097 = vmatprep.subr.mxu0 0.0
        %1098 = vmatpush1.msra.mxu0 0.0
        %1099 = vmatprep.subr.mxu0 0.0
        %1100 = vmatpush1.msra.mxu0 0.0
        %1101 = vmatprep.subr.mxu0 0.0
        %1102 = vmatpush1.msra.mxu0 0.0
        %1103 = vmatprep.subr.mxu0 0.0
        %1104 = vmatpush1.msra.mxu0 0.0
        %1105 = vmatprep.subr.mxu0 0.0
        %1106 = vmatpush1.msra.mxu0 0.0
        %1107 = vmatprep.subr.mxu0 0.0
        %1108 = vmatpush1.msra.mxu0 0.0
        %1109 = vmatprep.subr.mxu0 0.0
        %1110 = vmatpush1.msra.mxu0 0.0
        %1111 = vmatprep.subr.mxu0 0.0
        %1112 = vmatpush1.msra.mxu0 0.0
        %1113 = vmatprep.subr.mxu0 0.0
        %1114 = vmatpush1.msra.mxu0 0.0
        %1115 = vmatprep.mubr.f32.mxu0 0.0
        %1116 = vmatmul.mubr.f32.gmra.mrb[0].mxu0 %v1040
        %v1117 = vpop.f32.mrb[0].mxu0
        %v1118 = vadd.f32 %v1021, %v1117
        %v1119 = vpop.f32.mrb[0].mxu0
        %1120 = vmatprep.mubr.f32.mxu0 0.0
        %1121 = vmatmul.mubr.f32.gmra.mrb[0].mxu0 %v1043
        %v1122 = vpop.f32.mrb[0].mxu0
        %v1123 = vadd.f32 %v1026, %v1122
        %v1124 = vpop.f32.mrb[0].mxu0
        %1125 = vmatprep.mubr.f32.mxu0 0.0
        %1126 = vmatmul.mubr.f32.gmra.mrb[0].mxu0 %v1046
        %v1127 = vpop.f32.mrb[0].mxu0
        %v1128 = vadd.f32 %v1031, %v1127
        %v1129 = vpop.f32.mrb[0].mxu0
        %1130 = vmatprep.mubr.f32.mxu0 0.0
        %1131 = vmatmul.mubr.f32.gmra.mrb[0].mxu0 %v1049
        %v1132 = vpop.f32.mrb[0].mxu0
        %v1133 = vadd.f32 %v1036, %v1132
        %v1134 = vpop.f32.mrb[0].mxu0
        %1135 = vdwg.mxu0
        %s1136 = sld [smem:[#allocation11]]
        %v1137 = vstv %s1136
        %v1138 = vadd.f32 %v1118, %v1137
        %v1139 = vadd.f32 %v1123, %v1137
        %v1140 = vadd.f32 %v1128, %v1137
        %v1141 = vadd.f32 %v1133, %v1137
        %1146 = vrot.lane.b32.xlu0 %v1138, 1
        %v1147 = vpop.permute.xlu0 %1146
        %1148 = vrot.lane.b32.xlu0 %v1139, 1
        %v1149 = vpop.permute.xlu0 %1148
        %1150 = vrot.lane.b32.xlu0 %v1140, 1
        %v1151 = vpop.permute.xlu0 %1150
        %1152 = vrot.lane.b32.xlu0 %v1141, 1
        %v1153 = vpop.permute.xlu0 %1152
        %vm1158 = vcmask 269320
        %1159 = vst.msk [vmem:[#allocation2 + $0x1] sm:$0xff] %vm1158, %v1147
        %1160 = vst.msk [vmem:[#allocation2 + $0x9] sm:$0xff] %vm1158, %v1149
        %1161 = vst.msk [vmem:[#allocation2 + $0x11] sm:$0xff] %vm1158, %v1151
        %1162 = vst.msk [vmem:[#allocation2 + $0x19] sm:$0xff] %vm1158, %v1153
        %s1163 = sld [smem:[#allocation10 + $0x4]]
        %v1164 = vstv %s1163
        %v1165 = vmul.f32 %v1164, %v510
        %v1166 = vmul.f32 %v1164, %v511
        %v1167 = vadd.f32 %v1165, 0.0
        %v1168 = vadd.f32 %v1166, 0.0
        %s1169 = sld [smem:[#allocation10 + $0xc]]
        %v1170 = vstv %s1169
        %v1171 = vmul.f32 %v1170, %v513
        %v1172 = vmul.f32 %v1170, %v514
        %v1173 = vadd.f32 %v1167, %v1171
        %v1174 = vadd.f32 %v1168, %v1172
        %s1175 = sld [smem:[#allocation10 + $0x14]]
        %v1176 = vstv %s1175
        %v1177 = vmul.f32 %v1176, %v516
        %v1178 = vmul.f32 %v1176, %v517
        %v1179 = vadd.f32 %v1173, %v1177
        %v1180 = vadd.f32 %v1174, %v1178
        %s1181 = sld [smem:[#allocation10 + $0x1c]]
        %v1182 = vstv %s1181
        %v1183 = vmul.f32 %v1182, %v519
        %v1184 = vmul.f32 %v1182, %v520
        %v1185 = vadd.f32 %v1179, %v1183
        %v1186 = vadd.f32 %v1180, %v1184
        %s1187 = sld [smem:[#allocation10 + $0x5]]
        %v1188 = vstv %s1187
        %v1189 = vmul.f32 %v1188, %v510
        %v1190 = vmul.f32 %v1188, %v511
        %v1191 = vadd.f32 %v1189, 0.0
        %v1192 = vadd.f32 %v1190, 0.0
        %s1193 = sld [smem:[#allocation10 + $0xd]]
        %v1194 = vstv %s1193
        %v1195 = vmul.f32 %v1194, %v513
        %v1196 = vmul.f32 %v1194, %v514
        %v1197 = vadd.f32 %v1191, %v1195
        %v1198 = vadd.f32 %v1192, %v1196
        %s1199 = sld [smem:[#allocation10 + $0x15]]
        %v1200 = vstv %s1199
        %v1201 = vmul.f32 %v1200, %v516
        %v1202 = vmul.f32 %v1200, %v517
        %v1203 = vadd.f32 %v1197, %v1201
        %v1204 = vadd.f32 %v1198, %v1202
        %s1205 = sld [smem:[#allocation10 + $0x1d]]
        %v1206 = vstv %s1205
        %v1207 = vmul.f32 %v1206, %v519
        %v1208 = vmul.f32 %v1206, %v520
        %v1209 = vadd.f32 %v1203, %v1207
        %v1210 = vadd.f32 %v1204, %v1208
        %v1212 = vsel %vm569, %v1209, 0
        %v1215 = vsel %vm569, %v1210, 0
        %1217 = vmatprep.subr.mxu0 0.0
        %1218 = vmatpush1.msra.mxu0 %v456
        %1219 = vmatprep.subr.mxu0 0.0
        %1220 = vmatpush1.msra.mxu0 %v457
        %1221 = vmatprep.subr.mxu0 0.0
        %1222 = vmatpush1.msra.mxu0 0.0
        %1223 = vmatprep.subr.mxu0 0.0
        %1224 = vmatpush1.msra.mxu0 0.0
        %1225 = vmatprep.subr.mxu0 0.0
        %1226 = vmatpush1.msra.mxu0 0.0
        %1227 = vmatprep.subr.mxu0 0.0
        %1228 = vmatpush1.msra.mxu0 0.0
        %1229 = vmatprep.subr.mxu0 0.0
        %1230 = vmatpush1.msra.mxu0 0.0
        %1231 = vmatprep.subr.mxu0 0.0
        %1232 = vmatpush1.msra.mxu0 0.0
        %1233 = vmatprep.subr.mxu0 0.0
        %1234 = vmatpush1.msra.mxu0 0.0
        %1235 = vmatprep.subr.mxu0 0.0
        %1236 = vmatpush1.msra.mxu0 0.0
        %1237 = vmatprep.subr.mxu0 0.0
        %1238 = vmatpush1.msra.mxu0 0.0
        %1239 = vmatprep.subr.mxu0 0.0
        %1240 = vmatpush1.msra.mxu0 0.0
        %1241 = vmatprep.subr.mxu0 0.0
        %1242 = vmatpush1.msra.mxu0 0.0
        %1243 = vmatprep.subr.mxu0 0.0
        %1244 = vmatpush1.msra.mxu0 0.0
        %1245 = vmatprep.subr.mxu0 0.0
        %1246 = vmatpush1.msra.mxu0 0.0
        %1247 = vmatprep.subr.mxu0 0.0
        %1248 = vmatpush1.msra.mxu0 0.0
        %1249 = vmatprep.subr.mxu0 0.0
        %1250 = vmatpush1.msra.mxu0 0.0
        %1251 = vmatprep.subr.mxu0 0.0
        %1252 = vmatpush1.msra.mxu0 0.0
        %1253 = vmatprep.subr.mxu0 0.0
        %1254 = vmatpush1.msra.mxu0 0.0
        %1255 = vmatprep.subr.mxu0 0.0
        %1256 = vmatpush1.msra.mxu0 0.0
        %1257 = vmatprep.subr.mxu0 0.0
        %1258 = vmatpush1.msra.mxu0 0.0
        %1259 = vmatprep.subr.mxu0 0.0
        %1260 = vmatpush1.msra.mxu0 0.0
        %1261 = vmatprep.subr.mxu0 0.0
        %1262 = vmatpush1.msra.mxu0 0.0
        %1263 = vmatprep.subr.mxu0 0.0
        %1264 = vmatpush1.msra.mxu0 0.0
        %1265 = vmatprep.subr.mxu0 0.0
        %1266 = vmatpush1.msra.mxu0 0.0
        %1267 = vmatprep.subr.mxu0 0.0
        %1268 = vmatpush1.msra.mxu0 0.0
        %1269 = vmatprep.subr.mxu0 0.0
        %1270 = vmatpush1.msra.mxu0 0.0
        %1271 = vmatprep.subr.mxu0 0.0
        %1272 = vmatpush1.msra.mxu0 0.0
        %1273 = vmatprep.subr.mxu0 0.0
        %1274 = vmatpush1.msra.mxu0 0.0
        %1275 = vmatprep.subr.mxu0 0.0
        %1276 = vmatpush1.msra.mxu0 0.0
        %1277 = vmatprep.subr.mxu0 0.0
        %1278 = vmatpush1.msra.mxu0 0.0
        %1279 = vmatprep.subr.mxu0 0.0
        %1280 = vmatpush1.msra.mxu0 0.0
        %1281 = vmatprep.mubr.f32.mxu0 0.0
        %1282 = vmatmul.mubr.f32.gmra.mrb[0].mxu0 %v1212
        %v1283 = vpop.f32.mrb[0].mxu0
        %v1284 = vadd.f32 0.0, %v1283
        %v1285 = vpop.f32.mrb[0].mxu0
        %1286 = vmatprep.mubr.f32.mxu0 0.0
        %1287 = vmatmul.mubr.f32.gmra.mrb[0].mxu0 %v1215
        %v1288 = vpop.f32.mrb[0].mxu0
        %v1289 = vadd.f32 0.0, %v1288
        %v1290 = vpop.f32.mrb[0].mxu0
        %1291 = vdwg.mxu0
        %v1293 = vsel %vm569, %v1185, 0
        %v1296 = vsel %vm569, %v1186, 0
        %1298 = vmatprep.subr.mxu0 0.0
        %1299 = vmatpush1.msra.mxu0 %v450
        %1300 = vmatprep.subr.mxu0 0.0
        %1301 = vmatpush1.msra.mxu0 %v451
        %1302 = vmatprep.subr.mxu0 0.0
        %1303 = vmatpush1.msra.mxu0 0.0
        %1304 = vmatprep.subr.mxu0 0.0
        %1305 = vmatpush1.msra.mxu0 0.0
        %1306 = vmatprep.subr.mxu0 0.0
        %1307 = vmatpush1.msra.mxu0 0.0
        %1308 = vmatprep.subr.mxu0 0.0
        %1309 = vmatpush1.msra.mxu0 0.0
        %1310 = vmatprep.subr.mxu0 0.0
        %1311 = vmatpush1.msra.mxu0 0.0
        %1312 = vmatprep.subr.mxu0 0.0
        %1313 = vmatpush1.msra.mxu0 0.0
        %1314 = vmatprep.subr.mxu0 0.0
        %1315 = vmatpush1.msra.mxu0 0.0
        %1316 = vmatprep.subr.mxu0 0.0
        %1317 = vmatpush1.msra.mxu0 0.0
        %1318 = vmatprep.subr.mxu0 0.0
        %1319 = vmatpush1.msra.mxu0 0.0
        %1320 = vmatprep.subr.mxu0 0.0
        %1321 = vmatpush1.msra.mxu0 0.0
        %1322 = vmatprep.subr.mxu0 0.0
        %1323 = vmatpush1.msra.mxu0 0.0
        %1324 = vmatprep.subr.mxu0 0.0
        %1325 = vmatpush1.msra.mxu0 0.0
        %1326 = vmatprep.subr.mxu0 0.0
        %1327 = vmatpush1.msra.mxu0 0.0
        %1328 = vmatprep.subr.mxu0 0.0
        %1329 = vmatpush1.msra.mxu0 0.0
        %1330 = vmatprep.subr.mxu0 0.0
        %1331 = vmatpush1.msra.mxu0 0.0
        %1332 = vmatprep.subr.mxu0 0.0
        %1333 = vmatpush1.msra.mxu0 0.0
        %1334 = vmatprep.subr.mxu0 0.0
        %1335 = vmatpush1.msra.mxu0 0.0
        %1336 = vmatprep.subr.mxu0 0.0
        %1337 = vmatpush1.msra.mxu0 0.0
        %1338 = vmatprep.subr.mxu0 0.0
        %1339 = vmatpush1.msra.mxu0 0.0
        %1340 = vmatprep.subr.mxu0 0.0
        %1341 = vmatpush1.msra.mxu0 0.0
        %1342 = vmatprep.subr.mxu0 0.0
        %1343 = vmatpush1.msra.mxu0 0.0
        %1344 = vmatprep.subr.mxu0 0.0
        %1345 = vmatpush1.msra.mxu0 0.0
        %1346 = vmatprep.subr.mxu0 0.0
        %1347 = vmatpush1.msra.mxu0 0.0
        %1348 = vmatprep.subr.mxu0 0.0
        %1349 = vmatpush1.msra.mxu0 0.0
        %1350 = vmatprep.subr.mxu0 0.0
        %1351 = vmatpush1.msra.mxu0 0.0
        %1352 = vmatprep.subr.mxu0 0.0
        %1353 = vmatpush1.msra.mxu0 0.0
        %1354 = vmatprep.subr.mxu0 0.0
        %1355 = vmatpush1.msra.mxu0 0.0
        %1356 = vmatprep.subr.mxu0 0.0
        %1357 = vmatpush1.msra.mxu0 0.0
        %1358 = vmatprep.subr.mxu0 0.0
        %1359 = vmatpush1.msra.mxu0 0.0
        %1360 = vmatprep.subr.mxu0 0.0
        %1361 = vmatpush1.msra.mxu0 0.0
        %1362 = vmatprep.mubr.f32.mxu0 0.0
        %1363 = vmatmul.mubr.f32.gmra.mrb[0].mxu0 %v1293
        %v1364 = vpop.f32.mrb[0].mxu0
        %v1365 = vadd.f32 %v1284, %v1364
        %v1366 = vpop.f32.mrb[0].mxu0
        %1367 = vmatprep.mubr.f32.mxu0 0.0
        %1368 = vmatmul.mubr.f32.gmra.mrb[0].mxu0 %v1296
        %v1369 = vpop.f32.mrb[0].mxu0
        %v1370 = vadd.f32 %v1289, %v1369
        %v1371 = vpop.f32.mrb[0].mxu0
        %1372 = vdwg.mxu0
        %s1373 = sld [smem:[#allocation10 + $0x6]]
        %v1374 = vstv %s1373
        %v1375 = vmul.f32 %v1374, %v510
        %v1376 = vmul.f32 %v1374, %v511
        %v1377 = vadd.f32 %v1375, 0.0
        %v1378 = vadd.f32 %v1376, 0.0
        %s1379 = sld [smem:[#allocation10 + $0xe]]
        %v1380 = vstv %s1379
        %v1381 = vmul.f32 %v1380, %v513
        %v1382 = vmul.f32 %v1380, %v514
        %v1383 = vadd.f32 %v1377, %v1381
        %v1384 = vadd.f32 %v1378, %v1382
        %s1385 = sld [smem:[#allocation10 + $0x16]]
        %v1386 = vstv %s1385
        %v1387 = vmul.f32 %v1386, %v516
        %v1388 = vmul.f32 %v1386, %v517
        %v1389 = vadd.f32 %v1383, %v1387
        %v1390 = vadd.f32 %v1384, %v1388
        %s1391 = sld [smem:[#allocation10 + $0x1e]]
        %v1392 = vstv %s1391
        %v1393 = vmul.f32 %v1392, %v519
        %v1394 = vmul.f32 %v1392, %v520
        %v1395 = vadd.f32 %v1389, %v1393
        %v1396 = vadd.f32 %v1390, %v1394
        %s1397 = sld [smem:[#allocation10 + $0x7]]
        %v1398 = vstv %s1397
        %v1399 = vmul.f32 %v1398, %v510
        %v1400 = vmul.f32 %v1398, %v511
        %v1401 = vadd.f32 %v1399, 0.0
        %v1402 = vadd.f32 %v1400, 0.0
        %s1403 = sld [smem:[#allocation10 + $0xf]]
        %v1404 = vstv %s1403
        %v1405 = vmul.f32 %v1404, %v513
        %v1406 = vmul.f32 %v1404, %v514
        %v1407 = vadd.f32 %v1401, %v1405
        %v1408 = vadd.f32 %v1402, %v1406
        %s1409 = sld [smem:[#allocation10 + $0x17]]
        %v1410 = vstv %s1409
        %v1411 = vmul.f32 %v1410, %v516
        %v1412 = vmul.f32 %v1410, %v517
        %v1413 = vadd.f32 %v1407, %v1411
        %v1414 = vadd.f32 %v1408, %v1412
        %s1415 = sld [smem:[#allocation10 + $0x1f]]
        %v1416 = vstv %s1415
        %v1417 = vmul.f32 %v1416, %v519
        %v1418 = vmul.f32 %v1416, %v520
        %v1419 = vadd.f32 %v1413, %v1417
        %v1420 = vadd.f32 %v1414, %v1418
        %v1422 = vsel %vm569, %v1419, 0
        %v1425 = vsel %vm569, %v1420, 0
        %1427 = vmatprep.subr.mxu0 0.0
        %1428 = vmatpush1.msra.mxu0 %v456
        %1429 = vmatprep.subr.mxu0 0.0
        %1430 = vmatpush1.msra.mxu0 %v457
        %1431 = vmatprep.subr.mxu0 0.0
        %1432 = vmatpush1.msra.mxu0 0.0
        %1433 = vmatprep.subr.mxu0 0.0
        %1434 = vmatpush1.msra.mxu0 0.0
        %1435 = vmatprep.subr.mxu0 0.0
        %1436 = vmatpush1.msra.mxu0 0.0
        %1437 = vmatprep.subr.mxu0 0.0
        %1438 = vmatpush1.msra.mxu0 0.0
        %1439 = vmatprep.subr.mxu0 0.0
        %1440 = vmatpush1.msra.mxu0 0.0
        %1441 = vmatprep.subr.mxu0 0.0
        %1442 = vmatpush1.msra.mxu0 0.0
        %1443 = vmatprep.subr.mxu0 0.0
        %1444 = vmatpush1.msra.mxu0 0.0
        %1445 = vmatprep.subr.mxu0 0.0
        %1446 = vmatpush1.msra.mxu0 0.0
        %1447 = vmatprep.subr.mxu0 0.0
        %1448 = vmatpush1.msra.mxu0 0.0
        %1449 = vmatprep.subr.mxu0 0.0
        %1450 = vmatpush1.msra.mxu0 0.0
        %1451 = vmatprep.subr.mxu0 0.0
        %1452 = vmatpush1.msra.mxu0 0.0
        %1453 = vmatprep.subr.mxu0 0.0
        %1454 = vmatpush1.msra.mxu0 0.0
        %1455 = vmatprep.subr.mxu0 0.0
        %1456 = vmatpush1.msra.mxu0 0.0
        %1457 = vmatprep.subr.mxu0 0.0
        %1458 = vmatpush1.msra.mxu0 0.0
        %1459 = vmatprep.subr.mxu0 0.0
        %1460 = vmatpush1.msra.mxu0 0.0
        %1461 = vmatprep.subr.mxu0 0.0
        %1462 = vmatpush1.msra.mxu0 0.0
        %1463 = vmatprep.subr.mxu0 0.0
        %1464 = vmatpush1.msra.mxu0 0.0
        %1465 = vmatprep.subr.mxu0 0.0
        %1466 = vmatpush1.msra.mxu0 0.0
        %1467 = vmatprep.subr.mxu0 0.0
        %1468 = vmatpush1.msra.mxu0 0.0
        %1469 = vmatprep.subr.mxu0 0.0
        %1470 = vmatpush1.msra.mxu0 0.0
        %1471 = vmatprep.subr.mxu0 0.0
        %1472 = vmatpush1.msra.mxu0 0.0
        %1473 = vmatprep.subr.mxu0 0.0
        %1474 = vmatpush1.msra.mxu0 0.0
        %1475 = vmatprep.subr.mxu0 0.0
        %1476 = vmatpush1.msra.mxu0 0.0
        %1477 = vmatprep.subr.mxu0 0.0
        %1478 = vmatpush1.msra.mxu0 0.0
        %1479 = vmatprep.subr.mxu0 0.0
        %1480 = vmatpush1.msra.mxu0 0.0
        %1481 = vmatprep.subr.mxu0 0.0
        %1482 = vmatpush1.msra.mxu0 0.0
        %1483 = vmatprep.subr.mxu0 0.0
        %1484 = vmatpush1.msra.mxu0 0.0
        %1485 = vmatprep.subr.mxu0 0.0
        %1486 = vmatpush1.msra.mxu0 0.0
        %1487 = vmatprep.subr.mxu0 0.0
        %1488 = vmatpush1.msra.mxu0 0.0
        %1489 = vmatprep.subr.mxu0 0.0
        %1490 = vmatpush1.msra.mxu0 0.0
        %1491 = vmatprep.mubr.f32.mxu0 0.0
        %1492 = vmatmul.mubr.f32.gmra.mrb[0].mxu0 %v1422
        %v1493 = vpop.f32.mrb[0].mxu0
        %v1494 = vadd.f32 0.0, %v1493
        %v1495 = vpop.f32.mrb[0].mxu0
        %1496 = vmatprep.mubr.f32.mxu0 0.0
        %1497 = vmatmul.mubr.f32.gmra.mrb[0].mxu0 %v1425
        %v1498 = vpop.f32.mrb[0].mxu0
        %v1499 = vadd.f32 0.0, %v1498
        %v1500 = vpop.f32.mrb[0].mxu0
        %1501 = vdwg.mxu0
        %v1503 = vsel %vm569, %v1395, 0
        %v1506 = vsel %vm569, %v1396, 0
        %1508 = vmatprep.subr.mxu0 0.0
        %1509 = vmatpush1.msra.mxu0 %v450
        %1510 = vmatprep.subr.mxu0 0.0
        %1511 = vmatpush1.msra.mxu0 %v451
        %1512 = vmatprep.subr.mxu0 0.0
        %1513 = vmatpush1.msra.mxu0 0.0
        %1514 = vmatprep.subr.mxu0 0.0
        %1515 = vmatpush1.msra.mxu0 0.0
        %1516 = vmatprep.subr.mxu0 0.0
        %1517 = vmatpush1.msra.mxu0 0.0
        %1518 = vmatprep.subr.mxu0 0.0
        %1519 = vmatpush1.msra.mxu0 0.0
        %1520 = vmatprep.subr.mxu0 0.0
        %1521 = vmatpush1.msra.mxu0 0.0
        %1522 = vmatprep.subr.mxu0 0.0
        %1523 = vmatpush1.msra.mxu0 0.0
        %1524 = vmatprep.subr.mxu0 0.0
        %1525 = vmatpush1.msra.mxu0 0.0
        %1526 = vmatprep.subr.mxu0 0.0
        %1527 = vmatpush1.msra.mxu0 0.0
        %1528 = vmatprep.subr.mxu0 0.0
        %1529 = vmatpush1.msra.mxu0 0.0
        %1530 = vmatprep.subr.mxu0 0.0
        %1531 = vmatpush1.msra.mxu0 0.0
        %1532 = vmatprep.subr.mxu0 0.0
        %1533 = vmatpush1.msra.mxu0 0.0
        %1534 = vmatprep.subr.mxu0 0.0
        %1535 = vmatpush1.msra.mxu0 0.0
        %1536 = vmatprep.subr.mxu0 0.0
        %1537 = vmatpush1.msra.mxu0 0.0
        %1538 = vmatprep.subr.mxu0 0.0
        %1539 = vmatpush1.msra.mxu0 0.0
        %1540 = vmatprep.subr.mxu0 0.0
        %1541 = vmatpush1.msra.mxu0 0.0
        %1542 = vmatprep.subr.mxu0 0.0
        %1543 = vmatpush1.msra.mxu0 0.0
        %1544 = vmatprep.subr.mxu0 0.0
        %1545 = vmatpush1.msra.mxu0 0.0
        %1546 = vmatprep.subr.mxu0 0.0
        %1547 = vmatpush1.msra.mxu0 0.0
        %1548 = vmatprep.subr.mxu0 0.0
        %1549 = vmatpush1.msra.mxu0 0.0
        %1550 = vmatprep.subr.mxu0 0.0
        %1551 = vmatpush1.msra.mxu0 0.0
        %1552 = vmatprep.subr.mxu0 0.0
        %1553 = vmatpush1.msra.mxu0 0.0
        %1554 = vmatprep.subr.mxu0 0.0
        %1555 = vmatpush1.msra.mxu0 0.0
        %1556 = vmatprep.subr.mxu0 0.0
        %1557 = vmatpush1.msra.mxu0 0.0
        %1558 = vmatprep.subr.mxu0 0.0
        %1559 = vmatpush1.msra.mxu0 0.0
        %1560 = vmatprep.subr.mxu0 0.0
        %1561 = vmatpush1.msra.mxu0 0.0
        %1562 = vmatprep.subr.mxu0 0.0
        %1563 = vmatpush1.msra.mxu0 0.0
        %1564 = vmatprep.subr.mxu0 0.0
        %1565 = vmatpush1.msra.mxu0 0.0
        %1566 = vmatprep.subr.mxu0 0.0
        %1567 = vmatpush1.msra.mxu0 0.0
        %1568 = vmatprep.subr.mxu0 0.0
        %1569 = vmatpush1.msra.mxu0 0.0
        %1570 = vmatprep.subr.mxu0 0.0
        %1571 = vmatpush1.msra.mxu0 0.0
        %1572 = vmatprep.mubr.f32.mxu0 0.0
        %1573 = vmatmul.mubr.f32.gmra.mrb[0].mxu0 %v1503
        %v1574 = vpop.f32.mrb[0].mxu0
        %v1575 = vadd.f32 %v1494, %v1574
        %v1576 = vpop.f32.mrb[0].mxu0
        %1577 = vmatprep.mubr.f32.mxu0 0.0
        %1578 = vmatmul.mubr.f32.gmra.mrb[0].mxu0 %v1506
        %v1579 = vpop.f32.mrb[0].mxu0
        %v1580 = vadd.f32 %v1499, %v1579
        %v1581 = vpop.f32.mrb[0].mxu0
        %1582 = vdwg.mxu0
        %1583 = vmatprep.subr.mxu0 0.0
        %1584 = vmatpush1.msra.mxu0 %v1575
        %1585 = vmatprep.subr.mxu0 0.0
        %1586 = vmatpush1.msra.mxu0 %v1580
        %1587 = vmatprep.subr.mxu0 0.0
        %1588 = vmatpush1.msra.mxu0 0.0
        %1589 = vmatprep.subr.mxu0 0.0
        %1590 = vmatpush1.msra.mxu0 0.0
        %1591 = vmatprep.subr.mxu0 0.0
        %1592 = vmatpush1.msra.mxu0 0.0
        %1593 = vmatprep.subr.mxu0 0.0
        %1594 = vmatpush1.msra.mxu0 0.0
        %1595 = vmatprep.subr.mxu0 0.0
        %1596 = vmatpush1.msra.mxu0 0.0
        %1597 = vmatprep.subr.mxu0 0.0
        %1598 = vmatpush1.msra.mxu0 0.0
        %1599 = vmatprep.subr.mxu0 0.0
        %1600 = vmatpush1.msra.mxu0 0.0
        %1601 = vmatprep.subr.mxu0 0.0
        %1602 = vmatpush1.msra.mxu0 0.0
        %1603 = vmatprep.subr.mxu0 0.0
        %1604 = vmatpush1.msra.mxu0 0.0
        %1605 = vmatprep.subr.mxu0 0.0
        %1606 = vmatpush1.msra.mxu0 0.0
        %1607 = vmatprep.subr.mxu0 0.0
        %1608 = vmatpush1.msra.mxu0 0.0
        %1609 = vmatprep.subr.mxu0 0.0
        %1610 = vmatpush1.msra.mxu0 0.0
        %1611 = vmatprep.subr.mxu0 0.0
        %1612 = vmatpush1.msra.mxu0 0.0
        %1613 = vmatprep.subr.mxu0 0.0
        %1614 = vmatpush1.msra.mxu0 0.0
        %1615 = vmatprep.subr.mxu0 0.0
        %1616 = vmatpush1.msra.mxu0 0.0
        %1617 = vmatprep.subr.mxu0 0.0
        %1618 = vmatpush1.msra.mxu0 0.0
        %1619 = vmatprep.subr.mxu0 0.0
        %1620 = vmatpush1.msra.mxu0 0.0
        %1621 = vmatprep.subr.mxu0 0.0
        %1622 = vmatpush1.msra.mxu0 0.0
        %1623 = vmatprep.subr.mxu0 0.0
        %1624 = vmatpush1.msra.mxu0 0.0
        %1625 = vmatprep.subr.mxu0 0.0
        %1626 = vmatpush1.msra.mxu0 0.0
        %1627 = vmatprep.subr.mxu0 0.0
        %1628 = vmatpush1.msra.mxu0 0.0
        %1629 = vmatprep.subr.mxu0 0.0
        %1630 = vmatpush1.msra.mxu0 0.0
        %1631 = vmatprep.subr.mxu0 0.0
        %1632 = vmatpush1.msra.mxu0 0.0
        %1633 = vmatprep.subr.mxu0 0.0
        %1634 = vmatpush1.msra.mxu0 0.0
        %1635 = vmatprep.subr.mxu0 0.0
        %1636 = vmatpush1.msra.mxu0 0.0
        %1637 = vmatprep.subr.mxu0 0.0
        %1638 = vmatpush1.msra.mxu0 0.0
        %1639 = vmatprep.subr.mxu0 0.0
        %1640 = vmatpush1.msra.mxu0 0.0
        %1641 = vmatprep.subr.mxu0 0.0
        %1642 = vmatpush1.msra.mxu0 0.0
        %1643 = vmatprep.subr.mxu0 0.0
        %1644 = vmatpush1.msra.mxu0 0.0
        %1645 = vmatprep.subr.mxu0 0.0
        %1646 = vmatpush1.msra.mxu0 0.0
        %1647 = vmatprep.mubr.f32.mxu0 0.0
        %1648 = vmatmul.mubr.f32.gmra.mrb[0].mxu0 %v943
        %v1649 = vpop.f32.mrb[0].mxu0
        %v1650 = vadd.f32 0.0, %v1649
        %v1651 = vpop.f32.mrb[0].mxu0
        %1652 = vmatprep.mubr.f32.mxu0 0.0
        %1653 = vmatmul.mubr.f32.gmra.mrb[0].mxu0 %v946
        %v1654 = vpop.f32.mrb[0].mxu0
        %v1655 = vadd.f32 0.0, %v1654
        %v1656 = vpop.f32.mrb[0].mxu0
        %1657 = vmatprep.mubr.f32.mxu0 0.0
        %1658 = vmatmul.mubr.f32.gmra.mrb[0].mxu0 %v949
        %v1659 = vpop.f32.mrb[0].mxu0
        %v1660 = vadd.f32 0.0, %v1659
        %v1661 = vpop.f32.mrb[0].mxu0
        %1662 = vmatprep.mubr.f32.mxu0 0.0
        %1663 = vmatmul.mubr.f32.gmra.mrb[0].mxu0 %v952
        %v1664 = vpop.f32.mrb[0].mxu0
        %v1665 = vadd.f32 0.0, %v1664
        %v1666 = vpop.f32.mrb[0].mxu0
        %1667 = vdwg.mxu0
        %1668 = vmatprep.subr.mxu0 0.0
        %1669 = vmatpush1.msra.mxu0 %v1365
        %1670 = vmatprep.subr.mxu0 0.0
        %1671 = vmatpush1.msra.mxu0 %v1370
        %1672 = vmatprep.subr.mxu0 0.0
        %1673 = vmatpush1.msra.mxu0 0.0
        %1674 = vmatprep.subr.mxu0 0.0
        %1675 = vmatpush1.msra.mxu0 0.0
        %1676 = vmatprep.subr.mxu0 0.0
        %1677 = vmatpush1.msra.mxu0 0.0
        %1678 = vmatprep.subr.mxu0 0.0
        %1679 = vmatpush1.msra.mxu0 0.0
        %1680 = vmatprep.subr.mxu0 0.0
        %1681 = vmatpush1.msra.mxu0 0.0
        %1682 = vmatprep.subr.mxu0 0.0
        %1683 = vmatpush1.msra.mxu0 0.0
        %1684 = vmatprep.subr.mxu0 0.0
        %1685 = vmatpush1.msra.mxu0 0.0
        %1686 = vmatprep.subr.mxu0 0.0
        %1687 = vmatpush1.msra.mxu0 0.0
        %1688 = vmatprep.subr.mxu0 0.0
        %1689 = vmatpush1.msra.mxu0 0.0
        %1690 = vmatprep.subr.mxu0 0.0
        %1691 = vmatpush1.msra.mxu0 0.0
        %1692 = vmatprep.subr.mxu0 0.0
        %1693 = vmatpush1.msra.mxu0 0.0
        %1694 = vmatprep.subr.mxu0 0.0
        %1695 = vmatpush1.msra.mxu0 0.0
        %1696 = vmatprep.subr.mxu0 0.0
        %1697 = vmatpush1.msra.mxu0 0.0
        %1698 = vmatprep.subr.mxu0 0.0
        %1699 = vmatpush1.msra.mxu0 0.0
        %1700 = vmatprep.subr.mxu0 0.0
        %1701 = vmatpush1.msra.mxu0 0.0
        %1702 = vmatprep.subr.mxu0 0.0
        %1703 = vmatpush1.msra.mxu0 0.0
        %1704 = vmatprep.subr.mxu0 0.0
        %1705 = vmatpush1.msra.mxu0 0.0
        %1706 = vmatprep.subr.mxu0 0.0
        %1707 = vmatpush1.msra.mxu0 0.0
        %1708 = vmatprep.subr.mxu0 0.0
        %1709 = vmatpush1.msra.mxu0 0.0
        %1710 = vmatprep.subr.mxu0 0.0
        %1711 = vmatpush1.msra.mxu0 0.0
        %1712 = vmatprep.subr.mxu0 0.0
        %1713 = vmatpush1.msra.mxu0 0.0
        %1714 = vmatprep.subr.mxu0 0.0
        %1715 = vmatpush1.msra.mxu0 0.0
        %1716 = vmatprep.subr.mxu0 0.0
        %1717 = vmatpush1.msra.mxu0 0.0
        %1718 = vmatprep.subr.mxu0 0.0
        %1719 = vmatpush1.msra.mxu0 0.0
        %1720 = vmatprep.subr.mxu0 0.0
        %1721 = vmatpush1.msra.mxu0 0.0
        %1722 = vmatprep.subr.mxu0 0.0
        %1723 = vmatpush1.msra.mxu0 0.0
        %1724 = vmatprep.subr.mxu0 0.0
        %1725 = vmatpush1.msra.mxu0 0.0
        %1726 = vmatprep.subr.mxu0 0.0
        %1727 = vmatpush1.msra.mxu0 0.0
        %1728 = vmatprep.subr.mxu0 0.0
        %1729 = vmatpush1.msra.mxu0 0.0
        %1730 = vmatprep.subr.mxu0 0.0
        %1731 = vmatpush1.msra.mxu0 0.0
        %1732 = vmatprep.mubr.f32.mxu0 0.0
        %1733 = vmatmul.mubr.f32.gmra.mrb[0].mxu0 %v1040
        %v1734 = vpop.f32.mrb[0].mxu0
        %v1735 = vadd.f32 %v1650, %v1734
        %v1736 = vpop.f32.mrb[0].mxu0
        %1737 = vmatprep.mubr.f32.mxu0 0.0
        %1738 = vmatmul.mubr.f32.gmra.mrb[0].mxu0 %v1043
        %v1739 = vpop.f32.mrb[0].mxu0
        %v1740 = vadd.f32 %v1655, %v1739
        %v1741 = vpop.f32.mrb[0].mxu0
        %1742 = vmatprep.mubr.f32.mxu0 0.0
        %1743 = vmatmul.mubr.f32.gmra.mrb[0].mxu0 %v1046
        %v1744 = vpop.f32.mrb[0].mxu0
        %v1745 = vadd.f32 %v1660, %v1744
        %v1746 = vpop.f32.mrb[0].mxu0
        %1747 = vmatprep.mubr.f32.mxu0 0.0
        %1748 = vmatmul.mubr.f32.gmra.mrb[0].mxu0 %v1049
        %v1749 = vpop.f32.mrb[0].mxu0
        %v1750 = vadd.f32 %v1665, %v1749
        %v1751 = vpop.f32.mrb[0].mxu0
        %1752 = vdwg.mxu0
        %s1753 = sld [smem:[#allocation11 + $0x1]]
        %v1754 = vstv %s1753
        %v1755 = vadd.f32 %v1735, %v1754
        %v1756 = vadd.f32 %v1740, %v1754
        %v1757 = vadd.f32 %v1745, %v1754
        %v1758 = vadd.f32 %v1750, %v1754
        %1763 = vrot.lane.b32.xlu0 %v1755, 1
        %v1764 = vpop.permute.xlu0 %1763
        %1765 = vrot.lane.b32.xlu0 %v1756, 1
        %v1766 = vpop.permute.xlu0 %1765
        %1767 = vrot.lane.b32.xlu0 %v1757, 1
        %v1768 = vpop.permute.xlu0 %1767
        %1769 = vrot.lane.b32.xlu0 %v1758, 1
        %v1770 = vpop.permute.xlu0 %1769
        %s1775 = scalar_lea.vmem [#allocation2], 40
        %1776 = vst.msk [vmem:[%s1775 + $0x1] sm:$0xff] %vm1158, %v1764
        %1777 = vst.msk [vmem:[%s1775 + $0x9] sm:$0xff] %vm1158, %v1766
        %1778 = vst.msk [vmem:[%s1775 + $0x11] sm:$0xff] %vm1158, %v1768
        %1779 = vst.msk [vmem:[%s1775 + $0x19] sm:$0xff] %vm1158, %v1770
        %v1780 = vld [vmem:[%s378] sm:$0xff]
        %v1781 = vld [vmem:[%s378 + $0x8] sm:$0xff]
        %v1782 = vld [vmem:[%s378 + $0x10] sm:$0xff]
        %v1783 = vld [vmem:[%s378 + $0x18] sm:$0xff]
        %1788 = vrot.lane.b32.xlu0 %v1780, 1
        %v1789 = vpop.permute.xlu0 %1788
        %1790 = vrot.lane.b32.xlu0 %v1781, 1
        %v1791 = vpop.permute.xlu0 %1790
        %1792 = vrot.lane.b32.xlu0 %v1782, 1
        %v1793 = vpop.permute.xlu0 %1792
        %1794 = vrot.lane.b32.xlu0 %v1783, 1
        %v1795 = vpop.permute.xlu0 %1794
        %s1800 = scalar_lea.vmem [#allocation2], 80
        %1801 = vst.msk [vmem:[%s1800 + $0x1] sm:$0xff] %vm1158, %v1789
        %1802 = vst.msk [vmem:[%s1800 + $0x9] sm:$0xff] %vm1158, %v1791
        %1803 = vst.msk [vmem:[%s1800 + $0x11] sm:$0xff] %vm1158, %v1793
        %1804 = vst.msk [vmem:[%s1800 + $0x19] sm:$0xff] %vm1158, %v1795
        %s1805 = scalar_lea.vmem %s378, 32 [#allocation8]
        %v1806 = vld [vmem:[%s1805] sm:$0xff]
        %v1807 = vld [vmem:[%s1805 + $0x8] sm:$0xff]
        %v1808 = vld [vmem:[%s1805 + $0x10] sm:$0xff]
        %v1809 = vld [vmem:[%s1805 + $0x18] sm:$0xff]
        %1814 = vrot.lane.b32.xlu0 %v1806, 1
        %v1815 = vpop.permute.xlu0 %1814
        %1816 = vrot.lane.b32.xlu0 %v1807, 1
        %v1817 = vpop.permute.xlu0 %1816
        %1818 = vrot.lane.b32.xlu0 %v1808, 1
        %v1819 = vpop.permute.xlu0 %1818
        %1820 = vrot.lane.b32.xlu0 %v1809, 1
        %v1821 = vpop.permute.xlu0 %1820
        %s1826 = scalar_lea.vmem [#allocation2], 120
        %1827 = vst.msk [vmem:[%s1826 + $0x1] sm:$0xff] %vm1158, %v1815
        %1828 = vst.msk [vmem:[%s1826 + $0x9] sm:$0xff] %vm1158, %v1817
        %1829 = vst.msk [vmem:[%s1826 + $0x11] sm:$0xff] %vm1158, %v1819
        %1830 = vst.msk [vmem:[%s1826 + $0x19] sm:$0xff] %vm1158, %v1821
        %s1831 = sld [smem:[#allocation14]]
        %v1832 = vstv %s1831
        %v1833 = vadd.f32 %v1832, 0.0
        %s1834 = sld [smem:[#allocation13]]
        %v1835 = vld [vmem:[#allocation2] sm:$0xff]
        %v1836 = vld [vmem:[#allocation2 + $0x8] sm:$0xff]
        %v1837 = vld [vmem:[#allocation2 + $0x10] sm:$0xff]
        %v1838 = vld [vmem:[#allocation2 + $0x18] sm:$0xff]
        %v1839 = vstv %s1834
        %v1840 = vmul.f32 %v1839, %v1835
        %v1841 = vmul.f32 %v1839, %v1836
        %v1842 = vmul.f32 %v1839, %v1837
        %v1843 = vmul.f32 %v1839, %v1838
        %v1844 = vadd.f32 %v1833, %v1840
        %v1845 = vadd.f32 %v1833, %v1841
        %v1846 = vadd.f32 %v1833, %v1842
        %v1847 = vadd.f32 %v1833, %v1843
        %s1848 = sld [smem:[#allocation13 + $0x1]]
        %v1849 = vstv %s1848
        %v1850 = vmul.f32 %v1849, %v1835
        %v1851 = vmul.f32 %v1849, %v1836
        %v1852 = vmul.f32 %v1849, %v1837
        %v1853 = vmul.f32 %v1849, %v1838
        %1858 = vrot.lane.b32.xlu0 %v1850, 127
        %v1859 = vpop.permute.xlu0 %1858
        %1860 = vrot.lane.b32.xlu0 %v1851, 127
        %v1861 = vpop.permute.xlu0 %1860
        %1862 = vrot.lane.b32.xlu0 %v1852, 127
        %v1863 = vpop.permute.xlu0 %1862
        %1864 = vrot.lane.b32.xlu0 %v1853, 127
        %v1865 = vpop.permute.xlu0 %1864
        %v1870 = vadd.f32 %v1844, %v1859
        %v1871 = vadd.f32 %v1845, %v1861
        %v1872 = vadd.f32 %v1846, %v1863
        %v1873 = vadd.f32 %v1847, %v1865
        %s1874 = sld [smem:[#allocation13 + $0x2]]
        %v1875 = vstv %s1874
        %v1876 = vmul.f32 %v1875, %v1835
        %v1877 = vmul.f32 %v1875, %v1836
        %v1878 = vmul.f32 %v1875, %v1837
        %v1879 = vmul.f32 %v1875, %v1838
        %1884 = vrot.lane.b32.xlu0 %v1876, 126
        %v1885 = vpop.permute.xlu0 %1884
        %1886 = vrot.lane.b32.xlu0 %v1877, 126
        %v1887 = vpop.permute.xlu0 %1886
        %1888 = vrot.lane.b32.xlu0 %v1878, 126
        %v1889 = vpop.permute.xlu0 %1888
        %1890 = vrot.lane.b32.xlu0 %v1879, 126
        %v1891 = vpop.permute.xlu0 %1890
        %v1896 = vadd.f32 %v1870, %v1885
        %v1897 = vadd.f32 %v1871, %v1887
        %v1898 = vadd.f32 %v1872, %v1889
        %v1899 = vadd.f32 %v1873, %v1891
        %s1900 = sld [smem:[#allocation13 + $0x3]]
        %v1901 = vld [vmem:[#allocation2 + $0x1] sm:$0xff]
        %v1902 = vld [vmem:[#allocation2 + $0x9] sm:$0xff]
        %v1903 = vld [vmem:[#allocation2 + $0x11] sm:$0xff]
        %v1904 = vld [vmem:[#allocation2 + $0x19] sm:$0xff]
        %v1905 = vstv %s1900
        %v1906 = vmul.f32 %v1905, %v1901
        %v1907 = vmul.f32 %v1905, %v1902
        %v1908 = vmul.f32 %v1905, %v1903
        %v1909 = vmul.f32 %v1905, %v1904
        %v1910 = vadd.f32 %v1896, %v1906
        %v1911 = vadd.f32 %v1897, %v1907
        %v1912 = vadd.f32 %v1898, %v1908
        %v1913 = vadd.f32 %v1899, %v1909
        %s1914 = sld [smem:[#allocation13 + $0x4]]
        %v1915 = vstv %s1914
        %v1916 = vmul.f32 %v1915, %v1901
        %v1917 = vmul.f32 %v1915, %v1902
        %v1918 = vmul.f32 %v1915, %v1903
        %v1919 = vmul.f32 %v1915, %v1904
        %1924 = vrot.lane.b32.xlu0 %v1916, 127
        %v1925 = vpop.permute.xlu0 %1924
        %1926 = vrot.lane.b32.xlu0 %v1917, 127
        %v1927 = vpop.permute.xlu0 %1926
        %1928 = vrot.lane.b32.xlu0 %v1918, 127
        %v1929 = vpop.permute.xlu0 %1928
        %1930 = vrot.lane.b32.xlu0 %v1919, 127
        %v1931 = vpop.permute.xlu0 %1930
        %v1936 = vadd.f32 %v1910, %v1925
        %v1937 = vadd.f32 %v1911, %v1927
        %v1938 = vadd.f32 %v1912, %v1929
        %v1939 = vadd.f32 %v1913, %v1931
        %s1940 = sld [smem:[#allocation13 + $0x5]]
        %v1941 = vstv %s1940
        %v1942 = vmul.f32 %v1941, %v1901
        %v1943 = vmul.f32 %v1941, %v1902
        %v1944 = vmul.f32 %v1941, %v1903
        %v1945 = vmul.f32 %v1941, %v1904
        %1950 = vrot.lane.b32.xlu0 %v1942, 126
        %v1951 = vpop.permute.xlu0 %1950
        %1952 = vrot.lane.b32.xlu0 %v1943, 126
        %v1953 = vpop.permute.xlu0 %1952
        %1954 = vrot.lane.b32.xlu0 %v1944, 126
        %v1955 = vpop.permute.xlu0 %1954
        %1956 = vrot.lane.b32.xlu0 %v1945, 126
        %v1957 = vpop.permute.xlu0 %1956
        %v1962 = vadd.f32 %v1936, %v1951
        %v1963 = vadd.f32 %v1937, %v1953
        %v1964 = vadd.f32 %v1938, %v1955
        %v1965 = vadd.f32 %v1939, %v1957
        %s1966 = sld [smem:[#allocation13 + $0x6]]
        %v1967 = vld [vmem:[#allocation2 + $0x2] sm:$0xff]
        %v1968 = vld [vmem:[#allocation2 + $0xa] sm:$0xff]
        %v1969 = vld [vmem:[#allocation2 + $0x12] sm:$0xff]
        %v1970 = vld [vmem:[#allocation2 + $0x1a] sm:$0xff]
        %v1971 = vstv %s1966
        %v1972 = vmul.f32 %v1971, %v1967
        %v1973 = vmul.f32 %v1971, %v1968
        %v1974 = vmul.f32 %v1971, %v1969
        %v1975 = vmul.f32 %v1971, %v1970
        %v1976 = vadd.f32 %v1962, %v1972
        %v1977 = vadd.f32 %v1963, %v1973
        %v1978 = vadd.f32 %v1964, %v1974
        %v1979 = vadd.f32 %v1965, %v1975
        %s1980 = sld [smem:[#allocation13 + $0x7]]
        %v1981 = vstv %s1980
        %v1982 = vmul.f32 %v1981, %v1967
        %v1983 = vmul.f32 %v1981, %v1968
        %v1984 = vmul.f32 %v1981, %v1969
        %v1985 = vmul.f32 %v1981, %v1970
        %1990 = vrot.lane.b32.xlu0 %v1982, 127
        %v1991 = vpop.permute.xlu0 %1990
        %1992 = vrot.lane.b32.xlu0 %v1983, 127
        %v1993 = vpop.permute.xlu0 %1992
        %1994 = vrot.lane.b32.xlu0 %v1984, 127
        %v1995 = vpop.permute.xlu0 %1994
        %1996 = vrot.lane.b32.xlu0 %v1985, 127
        %v1997 = vpop.permute.xlu0 %1996
        %v2002 = vadd.f32 %v1976, %v1991
        %v2003 = vadd.f32 %v1977, %v1993
        %v2004 = vadd.f32 %v1978, %v1995
        %v2005 = vadd.f32 %v1979, %v1997
        %s2006 = sld [smem:[#allocation13 + $0x8]]
        %v2007 = vstv %s2006
        %v2008 = vmul.f32 %v2007, %v1967
        %v2009 = vmul.f32 %v2007, %v1968
        %v2010 = vmul.f32 %v2007, %v1969
        %v2011 = vmul.f32 %v2007, %v1970
        %2016 = vrot.lane.b32.xlu0 %v2008, 126
        %v2017 = vpop.permute.xlu0 %2016
        %2018 = vrot.lane.b32.xlu0 %v2009, 126
        %v2019 = vpop.permute.xlu0 %2018
        %2020 = vrot.lane.b32.xlu0 %v2010, 126
        %v2021 = vpop.permute.xlu0 %2020
        %2022 = vrot.lane.b32.xlu0 %v2011, 126
        %v2023 = vpop.permute.xlu0 %2022
        %v2028 = vadd.f32 %v2002, %v2017
        %v2029 = vadd.f32 %v2003, %v2019
        %v2030 = vadd.f32 %v2004, %v2021
        %v2031 = vadd.f32 %v2005, %v2023
        %s2032 = sld [smem:[#allocation13 + $0x9]]
        %v2033 = vld [vmem:[%s1775] sm:$0xff]
        %v2034 = vld [vmem:[%s1775 + $0x8] sm:$0xff]
        %v2035 = vld [vmem:[%s1775 + $0x10] sm:$0xff]
        %v2036 = vld [vmem:[%s1775 + $0x18] sm:$0xff]
        %v2037 = vstv %s2032
        %v2038 = vmul.f32 %v2037, %v2033
        %v2039 = vmul.f32 %v2037, %v2034
        %v2040 = vmul.f32 %v2037, %v2035
        %v2041 = vmul.f32 %v2037, %v2036
        %v2042 = vadd.f32 %v2028, %v2038
        %v2043 = vadd.f32 %v2029, %v2039
        %v2044 = vadd.f32 %v2030, %v2040
        %v2045 = vadd.f32 %v2031, %v2041
        %s2046 = sld [smem:[#allocation13 + $0xa]]
        %v2047 = vstv %s2046
        %v2048 = vmul.f32 %v2047, %v2033
        %v2049 = vmul.f32 %v2047, %v2034
        %v2050 = vmul.f32 %v2047, %v2035
        %v2051 = vmul.f32 %v2047, %v2036
        %2056 = vrot.lane.b32.xlu0 %v2048, 127
        %v2057 = vpop.permute.xlu0 %2056
        %2058 = vrot.lane.b32.xlu0 %v2049, 127
        %v2059 = vpop.permute.xlu0 %2058
        %2060 = vrot.lane.b32.xlu0 %v2050, 127
        %v2061 = vpop.permute.xlu0 %2060
        %2062 = vrot.lane.b32.xlu0 %v2051, 127
        %v2063 = vpop.permute.xlu0 %2062
        %v2068 = vadd.f32 %v2042, %v2057
        %v2069 = vadd.f32 %v2043, %v2059
        %v2070 = vadd.f32 %v2044, %v2061
        %v2071 = vadd.f32 %v2045, %v2063
        %s2072 = sld [smem:[#allocation13 + $0xb]]
        %v2073 = vstv %s2072
        %v2074 = vmul.f32 %v2073, %v2033
        %v2075 = vmul.f32 %v2073, %v2034
        %v2076 = vmul.f32 %v2073, %v2035
        %v2077 = vmul.f32 %v2073, %v2036
        %2082 = vrot.lane.b32.xlu0 %v2074, 126
        %v2083 = vpop.permute.xlu0 %2082
        %2084 = vrot.lane.b32.xlu0 %v2075, 126
        %v2085 = vpop.permute.xlu0 %2084
        %2086 = vrot.lane.b32.xlu0 %v2076, 126
        %v2087 = vpop.permute.xlu0 %2086
        %2088 = vrot.lane.b32.xlu0 %v2077, 126
        %v2089 = vpop.permute.xlu0 %2088
        %v2094 = vadd.f32 %v2068, %v2083
        %v2095 = vadd.f32 %v2069, %v2085
        %v2096 = vadd.f32 %v2070, %v2087
        %v2097 = vadd.f32 %v2071, %v2089
        %s2098 = sld [smem:[#allocation13 + $0xc]]
        %v2099 = vld [vmem:[%s1775 + $0x1] sm:$0xff]
        %v2100 = vld [vmem:[%s1775 + $0x9] sm:$0xff]
        %v2101 = vld [vmem:[%s1775 + $0x11] sm:$0xff]
        %v2102 = vld [vmem:[%s1775 + $0x19] sm:$0xff]
        %v2103 = vstv %s2098
        %v2104 = vmul.f32 %v2103, %v2099
        %v2105 = vmul.f32 %v2103, %v2100
        %v2106 = vmul.f32 %v2103, %v2101
        %v2107 = vmul.f32 %v2103, %v2102
        %v2108 = vadd.f32 %v2094, %v2104
        %v2109 = vadd.f32 %v2095, %v2105
        %v2110 = vadd.f32 %v2096, %v2106
        %v2111 = vadd.f32 %v2097, %v2107
        %s2112 = sld [smem:[#allocation13 + $0xd]]
        %v2113 = vstv %s2112
        %v2114 = vmul.f32 %v2113, %v2099
        %v2115 = vmul.f32 %v2113, %v2100
        %v2116 = vmul.f32 %v2113, %v2101
        %v2117 = vmul.f32 %v2113, %v2102
        %2122 = vrot.lane.b32.xlu0 %v2114, 127
        %v2123 = vpop.permute.xlu0 %2122
        %2124 = vrot.lane.b32.xlu0 %v2115, 127
        %v2125 = vpop.permute.xlu0 %2124
        %2126 = vrot.lane.b32.xlu0 %v2116, 127
        %v2127 = vpop.permute.xlu0 %2126
        %2128 = vrot.lane.b32.xlu0 %v2117, 127
        %v2129 = vpop.permute.xlu0 %2128
        %v2134 = vadd.f32 %v2108, %v2123
        %v2135 = vadd.f32 %v2109, %v2125
        %v2136 = vadd.f32 %v2110, %v2127
        %v2137 = vadd.f32 %v2111, %v2129
        %s2138 = sld [smem:[#allocation13 + $0xe]]
        %v2139 = vstv %s2138
        %v2140 = vmul.f32 %v2139, %v2099
        %v2141 = vmul.f32 %v2139, %v2100
        %v2142 = vmul.f32 %v2139, %v2101
        %v2143 = vmul.f32 %v2139, %v2102
        %2148 = vrot.lane.b32.xlu0 %v2140, 126
        %v2149 = vpop.permute.xlu0 %2148
        %2150 = vrot.lane.b32.xlu0 %v2141, 126
        %v2151 = vpop.permute.xlu0 %2150
        %2152 = vrot.lane.b32.xlu0 %v2142, 126
        %v2153 = vpop.permute.xlu0 %2152
        %2154 = vrot.lane.b32.xlu0 %v2143, 126
        %v2155 = vpop.permute.xlu0 %2154
        %v2160 = vadd.f32 %v2134, %v2149
        %v2161 = vadd.f32 %v2135, %v2151
        %v2162 = vadd.f32 %v2136, %v2153
        %v2163 = vadd.f32 %v2137, %v2155
        %s2164 = sld [smem:[#allocation13 + $0xf]]
        %v2165 = vld [vmem:[%s1775 + $0x2] sm:$0xff]
        %v2166 = vld [vmem:[%s1775 + $0xa] sm:$0xff]
        %v2167 = vld [vmem:[%s1775 + $0x12] sm:$0xff]
        %v2168 = vld [vmem:[%s1775 + $0x1a] sm:$0xff]
        %v2169 = vstv %s2164
        %v2170 = vmul.f32 %v2169, %v2165
        %v2171 = vmul.f32 %v2169, %v2166
        %v2172 = vmul.f32 %v2169, %v2167
        %v2173 = vmul.f32 %v2169, %v2168
        %v2174 = vadd.f32 %v2160, %v2170
        %v2175 = vadd.f32 %v2161, %v2171
        %v2176 = vadd.f32 %v2162, %v2172
        %v2177 = vadd.f32 %v2163, %v2173
        %s2178 = sld [smem:[#allocation13 + $0x10]]
        %v2179 = vstv %s2178
        %v2180 = vmul.f32 %v2179, %v2165
        %v2181 = vmul.f32 %v2179, %v2166
        %v2182 = vmul.f32 %v2179, %v2167
        %v2183 = vmul.f32 %v2179, %v2168
        %2188 = vrot.lane.b32.xlu0 %v2180, 127
        %v2189 = vpop.permute.xlu0 %2188
        %2190 = vrot.lane.b32.xlu0 %v2181, 127
        %v2191 = vpop.permute.xlu0 %2190
        %2192 = vrot.lane.b32.xlu0 %v2182, 127
        %v2193 = vpop.permute.xlu0 %2192
        %2194 = vrot.lane.b32.xlu0 %v2183, 127
        %v2195 = vpop.permute.xlu0 %2194
        %v2200 = vadd.f32 %v2174, %v2189
        %v2201 = vadd.f32 %v2175, %v2191
        %v2202 = vadd.f32 %v2176, %v2193
        %v2203 = vadd.f32 %v2177, %v2195
        %s2204 = sld [smem:[#allocation13 + $0x11]]
        %v2205 = vstv %s2204
        %v2206 = vmul.f32 %v2205, %v2165
        %v2207 = vmul.f32 %v2205, %v2166
        %v2208 = vmul.f32 %v2205, %v2167
        %v2209 = vmul.f32 %v2205, %v2168
        %2214 = vrot.lane.b32.xlu0 %v2206, 126
        %v2215 = vpop.permute.xlu0 %2214
        %2216 = vrot.lane.b32.xlu0 %v2207, 126
        %v2217 = vpop.permute.xlu0 %2216
        %2218 = vrot.lane.b32.xlu0 %v2208, 126
        %v2219 = vpop.permute.xlu0 %2218
        %2220 = vrot.lane.b32.xlu0 %v2209, 126
        %v2221 = vpop.permute.xlu0 %2220
        %v2226 = vadd.f32 %v2200, %v2215
        %v2227 = vadd.f32 %v2201, %v2217
        %v2228 = vadd.f32 %v2202, %v2219
        %v2229 = vadd.f32 %v2203, %v2221
        %s2230 = sld [smem:[#allocation13 + $0x12]]
        %v2231 = vld [vmem:[%s1800] sm:$0xff]
        %v2232 = vld [vmem:[%s1800 + $0x8] sm:$0xff]
        %v2233 = vld [vmem:[%s1800 + $0x10] sm:$0xff]
        %v2234 = vld [vmem:[%s1800 + $0x18] sm:$0xff]
        %v2235 = vstv %s2230
        %v2236 = vmul.f32 %v2235, %v2231
        %v2237 = vmul.f32 %v2235, %v2232
        %v2238 = vmul.f32 %v2235, %v2233
        %v2239 = vmul.f32 %v2235, %v2234
        %v2240 = vadd.f32 %v2226, %v2236
        %v2241 = vadd.f32 %v2227, %v2237
        %v2242 = vadd.f32 %v2228, %v2238
        %v2243 = vadd.f32 %v2229, %v2239
        %s2244 = sld [smem:[#allocation13 + $0x13]]
        %v2245 = vstv %s2244
        %v2246 = vmul.f32 %v2245, %v2231
        %v2247 = vmul.f32 %v2245, %v2232
        %v2248 = vmul.f32 %v2245, %v2233
        %v2249 = vmul.f32 %v2245, %v2234
        %2254 = vrot.lane.b32.xlu0 %v2246, 127
        %v2255 = vpop.permute.xlu0 %2254
        %2256 = vrot.lane.b32.xlu0 %v2247, 127
        %v2257 = vpop.permute.xlu0 %2256
        %2258 = vrot.lane.b32.xlu0 %v2248, 127
        %v2259 = vpop.permute.xlu0 %2258
        %2260 = vrot.lane.b32.xlu0 %v2249, 127
        %v2261 = vpop.permute.xlu0 %2260
        %v2266 = vadd.f32 %v2240, %v2255
        %v2267 = vadd.f32 %v2241, %v2257
        %v2268 = vadd.f32 %v2242, %v2259
        %v2269 = vadd.f32 %v2243, %v2261
        %s2270 = sld [smem:[#allocation13 + $0x14]]
        %v2271 = vstv %s2270
        %v2272 = vmul.f32 %v2271, %v2231
        %v2273 = vmul.f32 %v2271, %v2232
        %v2274 = vmul.f32 %v2271, %v2233
        %v2275 = vmul.f32 %v2271, %v2234
        %2280 = vrot.lane.b32.xlu0 %v2272, 126
        %v2281 = vpop.permute.xlu0 %2280
        %2282 = vrot.lane.b32.xlu0 %v2273, 126
        %v2283 = vpop.permute.xlu0 %2282
        %2284 = vrot.lane.b32.xlu0 %v2274, 126
        %v2285 = vpop.permute.xlu0 %2284
        %2286 = vrot.lane.b32.xlu0 %v2275, 126
        %v2287 = vpop.permute.xlu0 %2286
        %v2292 = vadd.f32 %v2266, %v2281
        %v2293 = vadd.f32 %v2267, %v2283
        %v2294 = vadd.f32 %v2268, %v2285
        %v2295 = vadd.f32 %v2269, %v2287
        %s2296 = sld [smem:[#allocation13 + $0x15]]
        %v2297 = vld [vmem:[%s1800 + $0x1] sm:$0xff]
        %v2298 = vld [vmem:[%s1800 + $0x9] sm:$0xff]
        %v2299 = vld [vmem:[%s1800 + $0x11] sm:$0xff]
        %v2300 = vld [vmem:[%s1800 + $0x19] sm:$0xff]
        %v2301 = vstv %s2296
        %v2302 = vmul.f32 %v2301, %v2297
        %v2303 = vmul.f32 %v2301, %v2298
        %v2304 = vmul.f32 %v2301, %v2299
        %v2305 = vmul.f32 %v2301, %v2300
        %v2306 = vadd.f32 %v2292, %v2302
        %v2307 = vadd.f32 %v2293, %v2303
        %v2308 = vadd.f32 %v2294, %v2304
        %v2309 = vadd.f32 %v2295, %v2305
        %s2310 = sld [smem:[#allocation13 + $0x16]]
        %v2311 = vstv %s2310
        %v2312 = vmul.f32 %v2311, %v2297
        %v2313 = vmul.f32 %v2311, %v2298
        %v2314 = vmul.f32 %v2311, %v2299
        %v2315 = vmul.f32 %v2311, %v2300
        %2320 = vrot.lane.b32.xlu0 %v2312, 127
        %v2321 = vpop.permute.xlu0 %2320
        %2322 = vrot.lane.b32.xlu0 %v2313, 127
        %v2323 = vpop.permute.xlu0 %2322
        %2324 = vrot.lane.b32.xlu0 %v2314, 127
        %v2325 = vpop.permute.xlu0 %2324
        %2326 = vrot.lane.b32.xlu0 %v2315, 127
        %v2327 = vpop.permute.xlu0 %2326
        %v2332 = vadd.f32 %v2306, %v2321
        %v2333 = vadd.f32 %v2307, %v2323
        %v2334 = vadd.f32 %v2308, %v2325
        %v2335 = vadd.f32 %v2309, %v2327
        %s2336 = sld [smem:[#allocation13 + $0x17]]
        %v2337 = vstv %s2336
        %v2338 = vmul.f32 %v2337, %v2297
        %v2339 = vmul.f32 %v2337, %v2298
        %v2340 = vmul.f32 %v2337, %v2299
        %v2341 = vmul.f32 %v2337, %v2300
        %2346 = vrot.lane.b32.xlu0 %v2338, 126
        %v2347 = vpop.permute.xlu0 %2346
        %2348 = vrot.lane.b32.xlu0 %v2339, 126
        %v2349 = vpop.permute.xlu0 %2348
        %2350 = vrot.lane.b32.xlu0 %v2340, 126
        %v2351 = vpop.permute.xlu0 %2350
        %2352 = vrot.lane.b32.xlu0 %v2341, 126
        %v2353 = vpop.permute.xlu0 %2352
        %v2358 = vadd.f32 %v2332, %v2347
        %v2359 = vadd.f32 %v2333, %v2349
        %v2360 = vadd.f32 %v2334, %v2351
        %v2361 = vadd.f32 %v2335, %v2353
        %s2362 = sld [smem:[#allocation13 + $0x18]]
        %v2363 = vld [vmem:[%s1800 + $0x2] sm:$0xff]
        %v2364 = vld [vmem:[%s1800 + $0xa] sm:$0xff]
        %v2365 = vld [vmem:[%s1800 + $0x12] sm:$0xff]
        %v2366 = vld [vmem:[%s1800 + $0x1a] sm:$0xff]
        %v2367 = vstv %s2362
        %v2368 = vmul.f32 %v2367, %v2363
        %v2369 = vmul.f32 %v2367, %v2364
        %v2370 = vmul.f32 %v2367, %v2365
        %v2371 = vmul.f32 %v2367, %v2366
        %v2372 = vadd.f32 %v2358, %v2368
        %v2373 = vadd.f32 %v2359, %v2369
        %v2374 = vadd.f32 %v2360, %v2370
        %v2375 = vadd.f32 %v2361, %v2371
        %s2376 = sld [smem:[#allocation13 + $0x19]]
        %v2377 = vstv %s2376
        %v2378 = vmul.f32 %v2377, %v2363
        %v2379 = vmul.f32 %v2377, %v2364
        %v2380 = vmul.f32 %v2377, %v2365
        %v2381 = vmul.f32 %v2377, %v2366
        %2386 = vrot.lane.b32.xlu0 %v2378, 127
        %v2387 = vpop.permute.xlu0 %2386
        %2388 = vrot.lane.b32.xlu0 %v2379, 127
        %v2389 = vpop.permute.xlu0 %2388
        %2390 = vrot.lane.b32.xlu0 %v2380, 127
        %v2391 = vpop.permute.xlu0 %2390
        %2392 = vrot.lane.b32.xlu0 %v2381, 127
        %v2393 = vpop.permute.xlu0 %2392
        %v2398 = vadd.f32 %v2372, %v2387
        %v2399 = vadd.f32 %v2373, %v2389
        %v2400 = vadd.f32 %v2374, %v2391
        %v2401 = vadd.f32 %v2375, %v2393
        %s2402 = sld [smem:[#allocation13 + $0x1a]]
        %v2403 = vstv %s2402
        %v2404 = vmul.f32 %v2403, %v2363
        %v2405 = vmul.f32 %v2403, %v2364
        %v2406 = vmul.f32 %v2403, %v2365
        %v2407 = vmul.f32 %v2403, %v2366
        %2412 = vrot.lane.b32.xlu0 %v2404, 126
        %v2413 = vpop.permute.xlu0 %2412
        %2414 = vrot.lane.b32.xlu0 %v2405, 126
        %v2415 = vpop.permute.xlu0 %2414
        %2416 = vrot.lane.b32.xlu0 %v2406, 126
        %v2417 = vpop.permute.xlu0 %2416
        %2418 = vrot.lane.b32.xlu0 %v2407, 126
        %v2419 = vpop.permute.xlu0 %2418
        %v2424 = vadd.f32 %v2398, %v2413
        %v2425 = vadd.f32 %v2399, %v2415
        %v2426 = vadd.f32 %v2400, %v2417
        %v2427 = vadd.f32 %v2401, %v2419
        %s2428 = sld [smem:[#allocation13 + $0x1b]]
        %v2429 = vld [vmem:[%s1826] sm:$0xff]
        %v2430 = vld [vmem:[%s1826 + $0x8] sm:$0xff]
        %v2431 = vld [vmem:[%s1826 + $0x10] sm:$0xff]
        %v2432 = vld [vmem:[%s1826 + $0x18] sm:$0xff]
        %v2433 = vstv %s2428
        %v2434 = vmul.f32 %v2433, %v2429
        %v2435 = vmul.f32 %v2433, %v2430
        %v2436 = vmul.f32 %v2433, %v2431
        %v2437 = vmul.f32 %v2433, %v2432
        %v2438 = vadd.f32 %v2424, %v2434
        %v2439 = vadd.f32 %v2425, %v2435
        %v2440 = vadd.f32 %v2426, %v2436
        %v2441 = vadd.f32 %v2427, %v2437
        %s2442 = sld [smem:[#allocation13 + $0x1c]]
        %v2443 = vstv %s2442
        %v2444 = vmul.f32 %v2443, %v2429
        %v2445 = vmul.f32 %v2443, %v2430
        %v2446 = vmul.f32 %v2443, %v2431
        %v2447 = vmul.f32 %v2443, %v2432
        %2452 = vrot.lane.b32.xlu0 %v2444, 127
        %v2453 = vpop.permute.xlu0 %2452
        %2454 = vrot.lane.b32.xlu0 %v2445, 127
        %v2455 = vpop.permute.xlu0 %2454
        %2456 = vrot.lane.b32.xlu0 %v2446, 127
        %v2457 = vpop.permute.xlu0 %2456
        %2458 = vrot.lane.b32.xlu0 %v2447, 127
        %v2459 = vpop.permute.xlu0 %2458
        %v2464 = vadd.f32 %v2438, %v2453
        %v2465 = vadd.f32 %v2439, %v2455
        %v2466 = vadd.f32 %v2440, %v2457
        %v2467 = vadd.f32 %v2441, %v2459
        %s2468 = sld [smem:[#allocation13 + $0x1d]]
        %v2469 = vstv %s2468
        %v2470 = vmul.f32 %v2469, %v2429
        %v2471 = vmul.f32 %v2469, %v2430
        %v2472 = vmul.f32 %v2469, %v2431
        %v2473 = vmul.f32 %v2469, %v2432
        %2478 = vrot.lane.b32.xlu0 %v2470, 126
        %v2479 = vpop.permute.xlu0 %2478
        %2480 = vrot.lane.b32.xlu0 %v2471, 126
        %v2481 = vpop.permute.xlu0 %2480
        %2482 = vrot.lane.b32.xlu0 %v2472, 126
        %v2483 = vpop.permute.xlu0 %2482
        %2484 = vrot.lane.b32.xlu0 %v2473, 126
        %v2485 = vpop.permute.xlu0 %2484
        %v2490 = vadd.f32 %v2464, %v2479
        %v2491 = vadd.f32 %v2465, %v2481
        %v2492 = vadd.f32 %v2466, %v2483
        %v2493 = vadd.f32 %v2467, %v2485
        %s2494 = sld [smem:[#allocation13 + $0x1e]]
        %v2495 = vld [vmem:[%s1826 + $0x1] sm:$0xff]
        %v2496 = vld [vmem:[%s1826 + $0x9] sm:$0xff]
        %v2497 = vld [vmem:[%s1826 + $0x11] sm:$0xff]
        %v2498 = vld [vmem:[%s1826 + $0x19] sm:$0xff]
        %v2499 = vstv %s2494
        %v2500 = vmul.f32 %v2499, %v2495
        %v2501 = vmul.f32 %v2499, %v2496
        %v2502 = vmul.f32 %v2499, %v2497
        %v2503 = vmul.f32 %v2499, %v2498
        %v2504 = vadd.f32 %v2490, %v2500
        %v2505 = vadd.f32 %v2491, %v2501
        %v2506 = vadd.f32 %v2492, %v2502
        %v2507 = vadd.f32 %v2493, %v2503
        %s2508 = sld [smem:[#allocation13 + $0x1f]]
        %v2509 = vstv %s2508
        %v2510 = vmul.f32 %v2509, %v2495
        %v2511 = vmul.f32 %v2509, %v2496
        %v2512 = vmul.f32 %v2509, %v2497
        %v2513 = vmul.f32 %v2509, %v2498
        %2518 = vrot.lane.b32.xlu0 %v2510, 127
        %v2519 = vpop.permute.xlu0 %2518
        %2520 = vrot.lane.b32.xlu0 %v2511, 127
        %v2521 = vpop.permute.xlu0 %2520
        %2522 = vrot.lane.b32.xlu0 %v2512, 127
        %v2523 = vpop.permute.xlu0 %2522
        %2524 = vrot.lane.b32.xlu0 %v2513, 127
        %v2525 = vpop.permute.xlu0 %2524
        %v2530 = vadd.f32 %v2504, %v2519
        %v2531 = vadd.f32 %v2505, %v2521
        %v2532 = vadd.f32 %v2506, %v2523
        %v2533 = vadd.f32 %v2507, %v2525
        %s2534 = sld [smem:[#allocation13 + $0x20]]
        %v2535 = vstv %s2534
        %v2536 = vmul.f32 %v2535, %v2495
        %v2537 = vmul.f32 %v2535, %v2496
        %v2538 = vmul.f32 %v2535, %v2497
        %v2539 = vmul.f32 %v2535, %v2498
        %2544 = vrot.lane.b32.xlu0 %v2536, 126
        %v2545 = vpop.permute.xlu0 %2544
        %2546 = vrot.lane.b32.xlu0 %v2537, 126
        %v2547 = vpop.permute.xlu0 %2546
        %2548 = vrot.lane.b32.xlu0 %v2538, 126
        %v2549 = vpop.permute.xlu0 %2548
        %2550 = vrot.lane.b32.xlu0 %v2539, 126
        %v2551 = vpop.permute.xlu0 %2550
        %v2556 = vadd.f32 %v2530, %v2545
        %v2557 = vadd.f32 %v2531, %v2547
        %v2558 = vadd.f32 %v2532, %v2549
        %v2559 = vadd.f32 %v2533, %v2551
        %s2560 = sld [smem:[#allocation13 + $0x21]]
        %v2561 = vld [vmem:[%s1826 + $0x2] sm:$0xff]
        %v2562 = vld [vmem:[%s1826 + $0xa] sm:$0xff]
        %v2563 = vld [vmem:[%s1826 + $0x12] sm:$0xff]
        %v2564 = vld [vmem:[%s1826 + $0x1a] sm:$0xff]
        %v2565 = vstv %s2560
        %v2566 = vmul.f32 %v2565, %v2561
        %v2567 = vmul.f32 %v2565, %v2562
        %v2568 = vmul.f32 %v2565, %v2563
        %v2569 = vmul.f32 %v2565, %v2564
        %v2570 = vadd.f32 %v2556, %v2566
        %v2571 = vadd.f32 %v2557, %v2567
        %v2572 = vadd.f32 %v2558, %v2568
        %v2573 = vadd.f32 %v2559, %v2569
        %s2574 = sld [smem:[#allocation13 + $0x22]]
        %v2575 = vstv %s2574
        %v2576 = vmul.f32 %v2575, %v2561
        %v2577 = vmul.f32 %v2575, %v2562
        %v2578 = vmul.f32 %v2575, %v2563
        %v2579 = vmul.f32 %v2575, %v2564
        %2584 = vrot.lane.b32.xlu0 %v2576, 127
        %v2585 = vpop.permute.xlu0 %2584
        %2586 = vrot.lane.b32.xlu0 %v2577, 127
        %v2587 = vpop.permute.xlu0 %2586
        %2588 = vrot.lane.b32.xlu0 %v2578, 127
        %v2589 = vpop.permute.xlu0 %2588
        %2590 = vrot.lane.b32.xlu0 %v2579, 127
        %v2591 = vpop.permute.xlu0 %2590
        %v2596 = vadd.f32 %v2570, %v2585
        %v2597 = vadd.f32 %v2571, %v2587
        %v2598 = vadd.f32 %v2572, %v2589
        %v2599 = vadd.f32 %v2573, %v2591
        %s2600 = sld [smem:[#allocation13 + $0x23]]
        %v2601 = vstv %s2600
        %v2602 = vmul.f32 %v2601, %v2561
        %v2603 = vmul.f32 %v2601, %v2562
        %v2604 = vmul.f32 %v2601, %v2563
        %v2605 = vmul.f32 %v2601, %v2564
        %2610 = vrot.lane.b32.xlu0 %v2602, 126
        %v2611 = vpop.permute.xlu0 %2610
        %2612 = vrot.lane.b32.xlu0 %v2603, 126
        %v2613 = vpop.permute.xlu0 %2612
        %2614 = vrot.lane.b32.xlu0 %v2604, 126
        %v2615 = vpop.permute.xlu0 %2614
        %2616 = vrot.lane.b32.xlu0 %v2605, 126
        %v2617 = vpop.permute.xlu0 %2616
        %v2622 = vadd.f32 %v2596, %v2611
        %v2623 = vadd.f32 %v2597, %v2613
        %v2624 = vadd.f32 %v2598, %v2615
        %v2625 = vadd.f32 %v2599, %v2617
        %v2626 = vmax.f32 %v2622, 0.0
        %v2627 = vmax.f32 %v2623, 0.0
        %v2628 = vmax.f32 %v2624, 0.0
        %v2629 = vmax.f32 %v2625, 0.0
        %2634 = vrot.lane.b32.xlu0 %v2626, 1
        %v2635 = vpop.permute.xlu0 %2634
        %2636 = vrot.lane.b32.xlu0 %v2627, 1
        %v2637 = vpop.permute.xlu0 %2636
        %2638 = vrot.lane.b32.xlu0 %v2628, 1
        %v2639 = vpop.permute.xlu0 %2638
        %2640 = vrot.lane.b32.xlu0 %v2629, 1
        %v2641 = vpop.permute.xlu0 %2640
        %2646 = vst.msk [vmem:[#allocation3 + $0x1] sm:$0xff] %vm1158, %v2635
        %2647 = vst.msk [vmem:[#allocation3 + $0x9] sm:$0xff] %vm1158, %v2637
        %2648 = vst.msk [vmem:[#allocation3 + $0x11] sm:$0xff] %vm1158, %v2639
        %2649 = vst.msk [vmem:[#allocation3 + $0x19] sm:$0xff] %vm1158, %v2641
        %s2650 = sld [smem:[#allocation14 + $0x1]]
        %v2651 = vstv %s2650
        %v2652 = vadd.f32 %v2651, 0.0
        %s2653 = sld [smem:[#allocation13 + $0x24]]
        %v2654 = vld [vmem:[#allocation2] sm:$0xff]
        %v2655 = vld [vmem:[#allocation2 + $0x8] sm:$0xff]
        %v2656 = vld [vmem:[#allocation2 + $0x10] sm:$0xff]
        %v2657 = vld [vmem:[#allocation2 + $0x18] sm:$0xff]
        %v2658 = vstv %s2653
        %v2659 = vmul.f32 %v2658, %v2654
        %v2660 = vmul.f32 %v2658, %v2655
        %v2661 = vmul.f32 %v2658, %v2656
        %v2662 = vmul.f32 %v2658, %v2657
        %v2663 = vadd.f32 %v2652, %v2659
        %v2664 = vadd.f32 %v2652, %v2660
        %v2665 = vadd.f32 %v2652, %v2661
        %v2666 = vadd.f32 %v2652, %v2662
        %s2667 = sld [smem:[#allocation13 + $0x25]]
        %v2668 = vstv %s2667
        %v2669 = vmul.f32 %v2668, %v2654
        %v2670 = vmul.f32 %v2668, %v2655
        %v2671 = vmul.f32 %v2668, %v2656
        %v2672 = vmul.f32 %v2668, %v2657
        %2677 = vrot.lane.b32.xlu0 %v2669, 127
        %v2678 = vpop.permute.xlu0 %2677
        %2679 = vrot.lane.b32.xlu0 %v2670, 127
        %v2680 = vpop.permute.xlu0 %2679
        %2681 = vrot.lane.b32.xlu0 %v2671, 127
        %v2682 = vpop.permute.xlu0 %2681
        %2683 = vrot.lane.b32.xlu0 %v2672, 127
        %v2684 = vpop.permute.xlu0 %2683
        %v2689 = vadd.f32 %v2663, %v2678
        %v2690 = vadd.f32 %v2664, %v2680
        %v2691 = vadd.f32 %v2665, %v2682
        %v2692 = vadd.f32 %v2666, %v2684
        %s2693 = sld [smem:[#allocation13 + $0x26]]
        %v2694 = vstv %s2693
        %v2695 = vmul.f32 %v2694, %v2654
        %v2696 = vmul.f32 %v2694, %v2655
        %v2697 = vmul.f32 %v2694, %v2656
        %v2698 = vmul.f32 %v2694, %v2657
        %2703 = vrot.lane.b32.xlu0 %v2695, 126
        %v2704 = vpop.permute.xlu0 %2703
        %2705 = vrot.lane.b32.xlu0 %v2696, 126
        %v2706 = vpop.permute.xlu0 %2705
        %2707 = vrot.lane.b32.xlu0 %v2697, 126
        %v2708 = vpop.permute.xlu0 %2707
        %2709 = vrot.lane.b32.xlu0 %v2698, 126
        %v2710 = vpop.permute.xlu0 %2709
        %v2715 = vadd.f32 %v2689, %v2704
        %v2716 = vadd.f32 %v2690, %v2706
        %v2717 = vadd.f32 %v2691, %v2708
        %v2718 = vadd.f32 %v2692, %v2710
        %s2719 = sld [smem:[#allocation13 + $0x27]]
        %v2720 = vld [vmem:[#allocation2 + $0x1] sm:$0xff]
        %v2721 = vld [vmem:[#allocation2 + $0x9] sm:$0xff]
        %v2722 = vld [vmem:[#allocation2 + $0x11] sm:$0xff]
        %v2723 = vld [vmem:[#allocation2 + $0x19] sm:$0xff]
        %v2724 = vstv %s2719
        %v2725 = vmul.f32 %v2724, %v2720
        %v2726 = vmul.f32 %v2724, %v2721
        %v2727 = vmul.f32 %v2724, %v2722
        %v2728 = vmul.f32 %v2724, %v2723
        %v2729 = vadd.f32 %v2715, %v2725
        %v2730 = vadd.f32 %v2716, %v2726
        %v2731 = vadd.f32 %v2717, %v2727
        %v2732 = vadd.f32 %v2718, %v2728
        %s2733 = sld [smem:[#allocation13 + $0x28]]
        %v2734 = vstv %s2733
        %v2735 = vmul.f32 %v2734, %v2720
        %v2736 = vmul.f32 %v2734, %v2721
        %v2737 = vmul.f32 %v2734, %v2722
        %v2738 = vmul.f32 %v2734, %v2723
        %2743 = vrot.lane.b32.xlu0 %v2735, 127
        %v2744 = vpop.permute.xlu0 %2743
        %2745 = vrot.lane.b32.xlu0 %v2736, 127
        %v2746 = vpop.permute.xlu0 %2745
        %2747 = vrot.lane.b32.xlu0 %v2737, 127
        %v2748 = vpop.permute.xlu0 %2747
        %2749 = vrot.lane.b32.xlu0 %v2738, 127
        %v2750 = vpop.permute.xlu0 %2749
        %v2755 = vadd.f32 %v2729, %v2744
        %v2756 = vadd.f32 %v2730, %v2746
        %v2757 = vadd.f32 %v2731, %v2748
        %v2758 = vadd.f32 %v2732, %v2750
        %s2759 = sld [smem:[#allocation13 + $0x29]]
        %v2760 = vstv %s2759
        %v2761 = vmul.f32 %v2760, %v2720
        %v2762 = vmul.f32 %v2760, %v2721
        %v2763 = vmul.f32 %v2760, %v2722
        %v2764 = vmul.f32 %v2760, %v2723
        %2769 = vrot.lane.b32.xlu0 %v2761, 126
        %v2770 = vpop.permute.xlu0 %2769
        %2771 = vrot.lane.b32.xlu0 %v2762, 126
        %v2772 = vpop.permute.xlu0 %2771
        %2773 = vrot.lane.b32.xlu0 %v2763, 126
        %v2774 = vpop.permute.xlu0 %2773
        %2775 = vrot.lane.b32.xlu0 %v2764, 126
        %v2776 = vpop.permute.xlu0 %2775
        %v2781 = vadd.f32 %v2755, %v2770
        %v2782 = vadd.f32 %v2756, %v2772
        %v2783 = vadd.f32 %v2757, %v2774
        %v2784 = vadd.f32 %v2758, %v2776
        %s2785 = sld [smem:[#allocation13 + $0x2a]]
        %v2786 = vld [vmem:[#allocation2 + $0x2] sm:$0xff]
        %v2787 = vld [vmem:[#allocation2 + $0xa] sm:$0xff]
        %v2788 = vld [vmem:[#allocation2 + $0x12] sm:$0xff]
        %v2789 = vld [vmem:[#allocation2 + $0x1a] sm:$0xff]
        %v2790 = vstv %s2785
        %v2791 = vmul.f32 %v2790, %v2786
        %v2792 = vmul.f32 %v2790, %v2787
        %v2793 = vmul.f32 %v2790, %v2788
        %v2794 = vmul.f32 %v2790, %v2789
        %v2795 = vadd.f32 %v2781, %v2791
        %v2796 = vadd.f32 %v2782, %v2792
        %v2797 = vadd.f32 %v2783, %v2793
        %v2798 = vadd.f32 %v2784, %v2794
        %s2799 = sld [smem:[#allocation13 + $0x2b]]
        %v2800 = vstv %s2799
        %v2801 = vmul.f32 %v2800, %v2786
        %v2802 = vmul.f32 %v2800, %v2787
        %v2803 = vmul.f32 %v2800, %v2788
        %v2804 = vmul.f32 %v2800, %v2789
        %2809 = vrot.lane.b32.xlu0 %v2801, 127
        %v2810 = vpop.permute.xlu0 %2809
        %2811 = vrot.lane.b32.xlu0 %v2802, 127
        %v2812 = vpop.permute.xlu0 %2811
        %2813 = vrot.lane.b32.xlu0 %v2803, 127
        %v2814 = vpop.permute.xlu0 %2813
        %2815 = vrot.lane.b32.xlu0 %v2804, 127
        %v2816 = vpop.permute.xlu0 %2815
        %v2821 = vadd.f32 %v2795, %v2810
        %v2822 = vadd.f32 %v2796, %v2812
        %v2823 = vadd.f32 %v2797, %v2814
        %v2824 = vadd.f32 %v2798, %v2816
        %s2825 = sld [smem:[#allocation13 + $0x2c]]
        %v2826 = vstv %s2825
        %v2827 = vmul.f32 %v2826, %v2786
        %v2828 = vmul.f32 %v2826, %v2787
        %v2829 = vmul.f32 %v2826, %v2788
        %v2830 = vmul.f32 %v2826, %v2789
        %2835 = vrot.lane.b32.xlu0 %v2827, 126
        %v2836 = vpop.permute.xlu0 %2835
        %2837 = vrot.lane.b32.xlu0 %v2828, 126
        %v2838 = vpop.permute.xlu0 %2837
        %2839 = vrot.lane.b32.xlu0 %v2829, 126
        %v2840 = vpop.permute.xlu0 %2839
        %2841 = vrot.lane.b32.xlu0 %v2830, 126
        %v2842 = vpop.permute.xlu0 %2841
        %v2847 = vadd.f32 %v2821, %v2836
        %v2848 = vadd.f32 %v2822, %v2838
        %v2849 = vadd.f32 %v2823, %v2840
        %v2850 = vadd.f32 %v2824, %v2842
        %s2851 = sld [smem:[#allocation13 + $0x2d]]
        %v2852 = vld [vmem:[%s1775] sm:$0xff]
        %v2853 = vld [vmem:[%s1775 + $0x8] sm:$0xff]
        %v2854 = vld [vmem:[%s1775 + $0x10] sm:$0xff]
        %v2855 = vld [vmem:[%s1775 + $0x18] sm:$0xff]
        %v2856 = vstv %s2851
        %v2857 = vmul.f32 %v2856, %v2852
        %v2858 = vmul.f32 %v2856, %v2853
        %v2859 = vmul.f32 %v2856, %v2854
        %v2860 = vmul.f32 %v2856, %v2855
        %v2861 = vadd.f32 %v2847, %v2857
        %v2862 = vadd.f32 %v2848, %v2858
        %v2863 = vadd.f32 %v2849, %v2859
        %v2864 = vadd.f32 %v2850, %v2860
        %s2865 = sld [smem:[#allocation13 + $0x2e]]
        %v2866 = vstv %s2865
        %v2867 = vmul.f32 %v2866, %v2852
        %v2868 = vmul.f32 %v2866, %v2853
        %v2869 = vmul.f32 %v2866, %v2854
        %v2870 = vmul.f32 %v2866, %v2855
        %2875 = vrot.lane.b32.xlu0 %v2867, 127
        %v2876 = vpop.permute.xlu0 %2875
        %2877 = vrot.lane.b32.xlu0 %v2868, 127
        %v2878 = vpop.permute.xlu0 %2877
        %2879 = vrot.lane.b32.xlu0 %v2869, 127
        %v2880 = vpop.permute.xlu0 %2879
        %2881 = vrot.lane.b32.xlu0 %v2870, 127
        %v2882 = vpop.permute.xlu0 %2881
        %v2887 = vadd.f32 %v2861, %v2876
        %v2888 = vadd.f32 %v2862, %v2878
        %v2889 = vadd.f32 %v2863, %v2880
        %v2890 = vadd.f32 %v2864, %v2882
        %s2891 = sld [smem:[#allocation13 + $0x2f]]
        %v2892 = vstv %s2891
        %v2893 = vmul.f32 %v2892, %v2852
        %v2894 = vmul.f32 %v2892, %v2853
        %v2895 = vmul.f32 %v2892, %v2854
        %v2896 = vmul.f32 %v2892, %v2855
        %2901 = vrot.lane.b32.xlu0 %v2893, 126
        %v2902 = vpop.permute.xlu0 %2901
        %2903 = vrot.lane.b32.xlu0 %v2894, 126
        %v2904 = vpop.permute.xlu0 %2903
        %2905 = vrot.lane.b32.xlu0 %v2895, 126
        %v2906 = vpop.permute.xlu0 %2905
        %2907 = vrot.lane.b32.xlu0 %v2896, 126
        %v2908 = vpop.permute.xlu0 %2907
        %v2913 = vadd.f32 %v2887, %v2902
        %v2914 = vadd.f32 %v2888, %v2904
        %v2915 = vadd.f32 %v2889, %v2906
        %v2916 = vadd.f32 %v2890, %v2908
        %s2917 = sld [smem:[#allocation13 + $0x30]]
        %v2918 = vld [vmem:[%s1775 + $0x1] sm:$0xff]
        %v2919 = vld [vmem:[%s1775 + $0x9] sm:$0xff]
        %v2920 = vld [vmem:[%s1775 + $0x11] sm:$0xff]
        %v2921 = vld [vmem:[%s1775 + $0x19] sm:$0xff]
        %v2922 = vstv %s2917
        %v2923 = vmul.f32 %v2922, %v2918
        %v2924 = vmul.f32 %v2922, %v2919
        %v2925 = vmul.f32 %v2922, %v2920
        %v2926 = vmul.f32 %v2922, %v2921
        %v2927 = vadd.f32 %v2913, %v2923
        %v2928 = vadd.f32 %v2914, %v2924
        %v2929 = vadd.f32 %v2915, %v2925
        %v2930 = vadd.f32 %v2916, %v2926
        %s2931 = sld [smem:[#allocation13 + $0x31]]
        %v2932 = vstv %s2931
        %v2933 = vmul.f32 %v2932, %v2918
        %v2934 = vmul.f32 %v2932, %v2919
        %v2935 = vmul.f32 %v2932, %v2920
        %v2936 = vmul.f32 %v2932, %v2921
        %2941 = vrot.lane.b32.xlu0 %v2933, 127
        %v2942 = vpop.permute.xlu0 %2941
        %2943 = vrot.lane.b32.xlu0 %v2934, 127
        %v2944 = vpop.permute.xlu0 %2943
        %2945 = vrot.lane.b32.xlu0 %v2935, 127
        %v2946 = vpop.permute.xlu0 %2945
        %2947 = vrot.lane.b32.xlu0 %v2936, 127
        %v2948 = vpop.permute.xlu0 %2947
        %v2953 = vadd.f32 %v2927, %v2942
        %v2954 = vadd.f32 %v2928, %v2944
        %v2955 = vadd.f32 %v2929, %v2946
        %v2956 = vadd.f32 %v2930, %v2948
        %s2957 = sld [smem:[#allocation13 + $0x32]]
        %v2958 = vstv %s2957
        %v2959 = vmul.f32 %v2958, %v2918
        %v2960 = vmul.f32 %v2958, %v2919
        %v2961 = vmul.f32 %v2958, %v2920
        %v2962 = vmul.f32 %v2958, %v2921
        %2967 = vrot.lane.b32.xlu0 %v2959, 126
        %v2968 = vpop.permute.xlu0 %2967
        %2969 = vrot.lane.b32.xlu0 %v2960, 126
        %v2970 = vpop.permute.xlu0 %2969
        %2971 = vrot.lane.b32.xlu0 %v2961, 126
        %v2972 = vpop.permute.xlu0 %2971
        %2973 = vrot.lane.b32.xlu0 %v2962, 126
        %v2974 = vpop.permute.xlu0 %2973
        %v2979 = vadd.f32 %v2953, %v2968
        %v2980 = vadd.f32 %v2954, %v2970
        %v2981 = vadd.f32 %v2955, %v2972
        %v2982 = vadd.f32 %v2956, %v2974
        %s2983 = sld [smem:[#allocation13 + $0x33]]
        %v2984 = vld [vmem:[%s1775 + $0x2] sm:$0xff]
        %v2985 = vld [vmem:[%s1775 + $0xa] sm:$0xff]
        %v2986 = vld [vmem:[%s1775 + $0x12] sm:$0xff]
        %v2987 = vld [vmem:[%s1775 + $0x1a] sm:$0xff]
        %v2988 = vstv %s2983
        %v2989 = vmul.f32 %v2988, %v2984
        %v2990 = vmul.f32 %v2988, %v2985
        %v2991 = vmul.f32 %v2988, %v2986
        %v2992 = vmul.f32 %v2988, %v2987
        %v2993 = vadd.f32 %v2979, %v2989
        %v2994 = vadd.f32 %v2980, %v2990
        %v2995 = vadd.f32 %v2981, %v2991
        %v2996 = vadd.f32 %v2982, %v2992
        %s2997 = sld [smem:[#allocation13 + $0x34]]
        %v2998 = vstv %s2997
        %v2999 = vmul.f32 %v2998, %v2984
        %v3000 = vmul.f32 %v2998, %v2985
        %v3001 = vmul.f32 %v2998, %v2986
        %v3002 = vmul.f32 %v2998, %v2987
        %3007 = vrot.lane.b32.xlu0 %v2999, 127
        %v3008 = vpop.permute.xlu0 %3007
        %3009 = vrot.lane.b32.xlu0 %v3000, 127
        %v3010 = vpop.permute.xlu0 %3009
        %3011 = vrot.lane.b32.xlu0 %v3001, 127
        %v3012 = vpop.permute.xlu0 %3011
        %3013 = vrot.lane.b32.xlu0 %v3002, 127
        %v3014 = vpop.permute.xlu0 %3013
        %v3019 = vadd.f32 %v2993, %v3008
        %v3020 = vadd.f32 %v2994, %v3010
        %v3021 = vadd.f32 %v2995, %v3012
        %v3022 = vadd.f32 %v2996, %v3014
        %s3023 = sld [smem:[#allocation13 + $0x35]]
        %v3024 = vstv %s3023
        %v3025 = vmul.f32 %v3024, %v2984
        %v3026 = vmul.f32 %v3024, %v2985
        %v3027 = vmul.f32 %v3024, %v2986
        %v3028 = vmul.f32 %v3024, %v2987
        %3033 = vrot.lane.b32.xlu0 %v3025, 126
        %v3034 = vpop.permute.xlu0 %3033
        %3035 = vrot.lane.b32.xlu0 %v3026, 126
        %v3036 = vpop.permute.xlu0 %3035
        %3037 = vrot.lane.b32.xlu0 %v3027, 126
        %v3038 = vpop.permute.xlu0 %3037
        %3039 = vrot.lane.b32.xlu0 %v3028, 126
        %v3040 = vpop.permute.xlu0 %3039
        %v3045 = vadd.f32 %v3019, %v3034
        %v3046 = vadd.f32 %v3020, %v3036
        %v3047 = vadd.f32 %v3021, %v3038
        %v3048 = vadd.f32 %v3022, %v3040
        %s3049 = sld [smem:[#allocation13 + $0x36]]
        %v3050 = vld [vmem:[%s1800] sm:$0xff]
        %v3051 = vld [vmem:[%s1800 + $0x8] sm:$0xff]
        %v3052 = vld [vmem:[%s1800 + $0x10] sm:$0xff]
        %v3053 = vld [vmem:[%s1800 + $0x18] sm:$0xff]
        %v3054 = vstv %s3049
        %v3055 = vmul.f32 %v3054, %v3050
        %v3056 = vmul.f32 %v3054, %v3051
        %v3057 = vmul.f32 %v3054, %v3052
        %v3058 = vmul.f32 %v3054, %v3053
        %v3059 = vadd.f32 %v3045, %v3055
        %v3060 = vadd.f32 %v3046, %v3056
        %v3061 = vadd.f32 %v3047, %v3057
        %v3062 = vadd.f32 %v3048, %v3058
        %s3063 = sld [smem:[#allocation13 + $0x37]]
        %v3064 = vstv %s3063
        %v3065 = vmul.f32 %v3064, %v3050
        %v3066 = vmul.f32 %v3064, %v3051
        %v3067 = vmul.f32 %v3064, %v3052
        %v3068 = vmul.f32 %v3064, %v3053
        %3073 = vrot.lane.b32.xlu0 %v3065, 127
        %v3074 = vpop.permute.xlu0 %3073
        %3075 = vrot.lane.b32.xlu0 %v3066, 127
        %v3076 = vpop.permute.xlu0 %3075
        %3077 = vrot.lane.b32.xlu0 %v3067, 127
        %v3078 = vpop.permute.xlu0 %3077
        %3079 = vrot.lane.b32.xlu0 %v3068, 127
        %v3080 = vpop.permute.xlu0 %3079
        %v3085 = vadd.f32 %v3059, %v3074
        %v3086 = vadd.f32 %v3060, %v3076
        %v3087 = vadd.f32 %v3061, %v3078
        %v3088 = vadd.f32 %v3062, %v3080
        %s3089 = sld [smem:[#allocation13 + $0x38]]
        %v3090 = vstv %s3089
        %v3091 = vmul.f32 %v3090, %v3050
        %v3092 = vmul.f32 %v3090, %v3051
        %v3093 = vmul.f32 %v3090, %v3052
        %v3094 = vmul.f32 %v3090, %v3053
        %3099 = vrot.lane.b32.xlu0 %v3091, 126
        %v3100 = vpop.permute.xlu0 %3099
        %3101 = vrot.lane.b32.xlu0 %v3092, 126
        %v3102 = vpop.permute.xlu0 %3101
        %3103 = vrot.lane.b32.xlu0 %v3093, 126
        %v3104 = vpop.permute.xlu0 %3103
        %3105 = vrot.lane.b32.xlu0 %v3094, 126
        %v3106 = vpop.permute.xlu0 %3105
        %v3111 = vadd.f32 %v3085, %v3100
        %v3112 = vadd.f32 %v3086, %v3102
        %v3113 = vadd.f32 %v3087, %v3104
        %v3114 = vadd.f32 %v3088, %v3106
        %s3115 = sld [smem:[#allocation13 + $0x39]]
        %v3116 = vld [vmem:[%s1800 + $0x1] sm:$0xff]
        %v3117 = vld [vmem:[%s1800 + $0x9] sm:$0xff]
        %v3118 = vld [vmem:[%s1800 + $0x11] sm:$0xff]
        %v3119 = vld [vmem:[%s1800 + $0x19] sm:$0xff]
        %v3120 = vstv %s3115
        %v3121 = vmul.f32 %v3120, %v3116
        %v3122 = vmul.f32 %v3120, %v3117
        %v3123 = vmul.f32 %v3120, %v3118
        %v3124 = vmul.f32 %v3120, %v3119
        %v3125 = vadd.f32 %v3111, %v3121
        %v3126 = vadd.f32 %v3112, %v3122
        %v3127 = vadd.f32 %v3113, %v3123
        %v3128 = vadd.f32 %v3114, %v3124
        %s3129 = sld [smem:[#allocation13 + $0x3a]]
        %v3130 = vstv %s3129
        %v3131 = vmul.f32 %v3130, %v3116
        %v3132 = vmul.f32 %v3130, %v3117
        %v3133 = vmul.f32 %v3130, %v3118
        %v3134 = vmul.f32 %v3130, %v3119
        %3139 = vrot.lane.b32.xlu0 %v3131, 127
        %v3140 = vpop.permute.xlu0 %3139
        %3141 = vrot.lane.b32.xlu0 %v3132, 127
        %v3142 = vpop.permute.xlu0 %3141
        %3143 = vrot.lane.b32.xlu0 %v3133, 127
        %v3144 = vpop.permute.xlu0 %3143
        %3145 = vrot.lane.b32.xlu0 %v3134, 127
        %v3146 = vpop.permute.xlu0 %3145
        %v3151 = vadd.f32 %v3125, %v3140
        %v3152 = vadd.f32 %v3126, %v3142
        %v3153 = vadd.f32 %v3127, %v3144
        %v3154 = vadd.f32 %v3128, %v3146
        %s3155 = sld [smem:[#allocation13 + $0x3b]]
        %v3156 = vstv %s3155
        %v3157 = vmul.f32 %v3156, %v3116
        %v3158 = vmul.f32 %v3156, %v3117
        %v3159 = vmul.f32 %v3156, %v3118
        %v3160 = vmul.f32 %v3156, %v3119
        %3165 = vrot.lane.b32.xlu0 %v3157, 126
        %v3166 = vpop.permute.xlu0 %3165
        %3167 = vrot.lane.b32.xlu0 %v3158, 126
        %v3168 = vpop.permute.xlu0 %3167
        %3169 = vrot.lane.b32.xlu0 %v3159, 126
        %v3170 = vpop.permute.xlu0 %3169
        %3171 = vrot.lane.b32.xlu0 %v3160, 126
        %v3172 = vpop.permute.xlu0 %3171
        %v3177 = vadd.f32 %v3151, %v3166
        %v3178 = vadd.f32 %v3152, %v3168
        %v3179 = vadd.f32 %v3153, %v3170
        %v3180 = vadd.f32 %v3154, %v3172
        %s3181 = sld [smem:[#allocation13 + $0x3c]]
        %v3182 = vld [vmem:[%s1800 + $0x2] sm:$0xff]
        %v3183 = vld [vmem:[%s1800 + $0xa] sm:$0xff]
        %v3184 = vld [vmem:[%s1800 + $0x12] sm:$0xff]
        %v3185 = vld [vmem:[%s1800 + $0x1a] sm:$0xff]
        %v3186 = vstv %s3181
        %v3187 = vmul.f32 %v3186, %v3182
        %v3188 = vmul.f32 %v3186, %v3183
        %v3189 = vmul.f32 %v3186, %v3184
        %v3190 = vmul.f32 %v3186, %v3185
        %v3191 = vadd.f32 %v3177, %v3187
        %v3192 = vadd.f32 %v3178, %v3188
        %v3193 = vadd.f32 %v3179, %v3189
        %v3194 = vadd.f32 %v3180, %v3190
        %s3195 = sld [smem:[#allocation13 + $0x3d]]
        %v3196 = vstv %s3195
        %v3197 = vmul.f32 %v3196, %v3182
        %v3198 = vmul.f32 %v3196, %v3183
        %v3199 = vmul.f32 %v3196, %v3184
        %v3200 = vmul.f32 %v3196, %v3185
        %3205 = vrot.lane.b32.xlu0 %v3197, 127
        %v3206 = vpop.permute.xlu0 %3205
        %3207 = vrot.lane.b32.xlu0 %v3198, 127
        %v3208 = vpop.permute.xlu0 %3207
        %3209 = vrot.lane.b32.xlu0 %v3199, 127
        %v3210 = vpop.permute.xlu0 %3209
        %3211 = vrot.lane.b32.xlu0 %v3200, 127
        %v3212 = vpop.permute.xlu0 %3211
        %v3217 = vadd.f32 %v3191, %v3206
        %v3218 = vadd.f32 %v3192, %v3208
        %v3219 = vadd.f32 %v3193, %v3210
        %v3220 = vadd.f32 %v3194, %v3212
        %s3221 = sld [smem:[#allocation13 + $0x3e]]
        %v3222 = vstv %s3221
        %v3223 = vmul.f32 %v3222, %v3182
        %v3224 = vmul.f32 %v3222, %v3183
        %v3225 = vmul.f32 %v3222, %v3184
        %v3226 = vmul.f32 %v3222, %v3185
        %3231 = vrot.lane.b32.xlu0 %v3223, 126
        %v3232 = vpop.permute.xlu0 %3231
        %3233 = vrot.lane.b32.xlu0 %v3224, 126
        %v3234 = vpop.permute.xlu0 %3233
        %3235 = vrot.lane.b32.xlu0 %v3225, 126
        %v3236 = vpop.permute.xlu0 %3235
        %3237 = vrot.lane.b32.xlu0 %v3226, 126
        %v3238 = vpop.permute.xlu0 %3237
        %v3243 = vadd.f32 %v3217, %v3232
        %v3244 = vadd.f32 %v3218, %v3234
        %v3245 = vadd.f32 %v3219, %v3236
        %v3246 = vadd.f32 %v3220, %v3238
        %s3247 = sld [smem:[#allocation13 + $0x3f]]
        %v3248 = vld [vmem:[%s1826] sm:$0xff]
        %v3249 = vld [vmem:[%s1826 + $0x8] sm:$0xff]
        %v3250 = vld [vmem:[%s1826 + $0x10] sm:$0xff]
        %v3251 = vld [vmem:[%s1826 + $0x18] sm:$0xff]
        %v3252 = vstv %s3247
        %v3253 = vmul.f32 %v3252, %v3248
        %v3254 = vmul.f32 %v3252, %v3249
        %v3255 = vmul.f32 %v3252, %v3250
        %v3256 = vmul.f32 %v3252, %v3251
        %v3257 = vadd.f32 %v3243, %v3253
        %v3258 = vadd.f32 %v3244, %v3254
        %v3259 = vadd.f32 %v3245, %v3255
        %v3260 = vadd.f32 %v3246, %v3256
        %s3261 = sld [smem:[#allocation13 + $0x40]]
        %v3262 = vstv %s3261
        %v3263 = vmul.f32 %v3262, %v3248
        %v3264 = vmul.f32 %v3262, %v3249
        %v3265 = vmul.f32 %v3262, %v3250
        %v3266 = vmul.f32 %v3262, %v3251
        %3271 = vrot.lane.b32.xlu0 %v3263, 127
        %v3272 = vpop.permute.xlu0 %3271
        %3273 = vrot.lane.b32.xlu0 %v3264, 127
        %v3274 = vpop.permute.xlu0 %3273
        %3275 = vrot.lane.b32.xlu0 %v3265, 127
        %v3276 = vpop.permute.xlu0 %3275
        %3277 = vrot.lane.b32.xlu0 %v3266, 127
        %v3278 = vpop.permute.xlu0 %3277
        %v3283 = vadd.f32 %v3257, %v3272
        %v3284 = vadd.f32 %v3258, %v3274
        %v3285 = vadd.f32 %v3259, %v3276
        %v3286 = vadd.f32 %v3260, %v3278
        %s3287 = sld [smem:[#allocation13 + $0x41]]
        %v3288 = vstv %s3287
        %v3289 = vmul.f32 %v3288, %v3248
        %v3290 = vmul.f32 %v3288, %v3249
        %v3291 = vmul.f32 %v3288, %v3250
        %v3292 = vmul.f32 %v3288, %v3251
        %3297 = vrot.lane.b32.xlu0 %v3289, 126
        %v3298 = vpop.permute.xlu0 %3297
        %3299 = vrot.lane.b32.xlu0 %v3290, 126
        %v3300 = vpop.permute.xlu0 %3299
        %3301 = vrot.lane.b32.xlu0 %v3291, 126
        %v3302 = vpop.permute.xlu0 %3301
        %3303 = vrot.lane.b32.xlu0 %v3292, 126
        %v3304 = vpop.permute.xlu0 %3303
        %v3309 = vadd.f32 %v3283, %v3298
        %v3310 = vadd.f32 %v3284, %v3300
        %v3311 = vadd.f32 %v3285, %v3302
        %v3312 = vadd.f32 %v3286, %v3304
        %s3313 = sld [smem:[#allocation13 + $0x42]]
        %v3314 = vld [vmem:[%s1826 + $0x1] sm:$0xff]
        %v3315 = vld [vmem:[%s1826 + $0x9] sm:$0xff]
        %v3316 = vld [vmem:[%s1826 + $0x11] sm:$0xff]
        %v3317 = vld [vmem:[%s1826 + $0x19] sm:$0xff]
        %v3318 = vstv %s3313
        %v3319 = vmul.f32 %v3318, %v3314
        %v3320 = vmul.f32 %v3318, %v3315
        %v3321 = vmul.f32 %v3318, %v3316
        %v3322 = vmul.f32 %v3318, %v3317
        %v3323 = vadd.f32 %v3309, %v3319
        %v3324 = vadd.f32 %v3310, %v3320
        %v3325 = vadd.f32 %v3311, %v3321
        %v3326 = vadd.f32 %v3312, %v3322
        %s3327 = sld [smem:[#allocation13 + $0x43]]
        %v3328 = vstv %s3327
        %v3329 = vmul.f32 %v3328, %v3314
        %v3330 = vmul.f32 %v3328, %v3315
        %v3331 = vmul.f32 %v3328, %v3316
        %v3332 = vmul.f32 %v3328, %v3317
        %3337 = vrot.lane.b32.xlu0 %v3329, 127
        %v3338 = vpop.permute.xlu0 %3337
        %3339 = vrot.lane.b32.xlu0 %v3330, 127
        %v3340 = vpop.permute.xlu0 %3339
        %3341 = vrot.lane.b32.xlu0 %v3331, 127
        %v3342 = vpop.permute.xlu0 %3341
        %3343 = vrot.lane.b32.xlu0 %v3332, 127
        %v3344 = vpop.permute.xlu0 %3343
        %v3349 = vadd.f32 %v3323, %v3338
        %v3350 = vadd.f32 %v3324, %v3340
        %v3351 = vadd.f32 %v3325, %v3342
        %v3352 = vadd.f32 %v3326, %v3344
        %s3353 = sld [smem:[#allocation13 + $0x44]]
        %v3354 = vstv %s3353
        %v3355 = vmul.f32 %v3354, %v3314
        %v3356 = vmul.f32 %v3354, %v3315
        %v3357 = vmul.f32 %v3354, %v3316
        %v3358 = vmul.f32 %v3354, %v3317
        %3363 = vrot.lane.b32.xlu0 %v3355, 126
        %v3364 = vpop.permute.xlu0 %3363
        %3365 = vrot.lane.b32.xlu0 %v3356, 126
        %v3366 = vpop.permute.xlu0 %3365
        %3367 = vrot.lane.b32.xlu0 %v3357, 126
        %v3368 = vpop.permute.xlu0 %3367
        %3369 = vrot.lane.b32.xlu0 %v3358, 126
        %v3370 = vpop.permute.xlu0 %3369
        %v3375 = vadd.f32 %v3349, %v3364
        %v3376 = vadd.f32 %v3350, %v3366
        %v3377 = vadd.f32 %v3351, %v3368
        %v3378 = vadd.f32 %v3352, %v3370
        %s3379 = sld [smem:[#allocation13 + $0x45]]
        %v3380 = vld [vmem:[%s1826 + $0x2] sm:$0xff]
        %v3381 = vld [vmem:[%s1826 + $0xa] sm:$0xff]
        %v3382 = vld [vmem:[%s1826 + $0x12] sm:$0xff]
        %v3383 = vld [vmem:[%s1826 + $0x1a] sm:$0xff]
        %v3384 = vstv %s3379
        %v3385 = vmul.f32 %v3384, %v3380
        %v3386 = vmul.f32 %v3384, %v3381
        %v3387 = vmul.f32 %v3384, %v3382
        %v3388 = vmul.f32 %v3384, %v3383
        %v3389 = vadd.f32 %v3375, %v3385
        %v3390 = vadd.f32 %v3376, %v3386
        %v3391 = vadd.f32 %v3377, %v3387
        %v3392 = vadd.f32 %v3378, %v3388
        %s3393 = sld [smem:[#allocation13 + $0x46]]
        %v3394 = vstv %s3393
        %v3395 = vmul.f32 %v3394, %v3380
        %v3396 = vmul.f32 %v3394, %v3381
        %v3397 = vmul.f32 %v3394, %v3382
        %v3398 = vmul.f32 %v3394, %v3383
        %3403 = vrot.lane.b32.xlu0 %v3395, 127
        %v3404 = vpop.permute.xlu0 %3403
        %3405 = vrot.lane.b32.xlu0 %v3396, 127
        %v3406 = vpop.permute.xlu0 %3405
        %3407 = vrot.lane.b32.xlu0 %v3397, 127
        %v3408 = vpop.permute.xlu0 %3407
        %3409 = vrot.lane.b32.xlu0 %v3398, 127
        %v3410 = vpop.permute.xlu0 %3409
        %v3415 = vadd.f32 %v3389, %v3404
        %v3416 = vadd.f32 %v3390, %v3406
        %v3417 = vadd.f32 %v3391, %v3408
        %v3418 = vadd.f32 %v3392, %v3410
        %s3419 = sld [smem:[#allocation13 + $0x47]]
        %v3420 = vstv %s3419
        %v3421 = vmul.f32 %v3420, %v3380
        %v3422 = vmul.f32 %v3420, %v3381
        %v3423 = vmul.f32 %v3420, %v3382
        %v3424 = vmul.f32 %v3420, %v3383
        %3429 = vrot.lane.b32.xlu0 %v3421, 126
        %v3430 = vpop.permute.xlu0 %3429
        %3431 = vrot.lane.b32.xlu0 %v3422, 126
        %v3432 = vpop.permute.xlu0 %3431
        %3433 = vrot.lane.b32.xlu0 %v3423, 126
        %v3434 = vpop.permute.xlu0 %3433
        %3435 = vrot.lane.b32.xlu0 %v3424, 126
        %v3436 = vpop.permute.xlu0 %3435
        %v3441 = vadd.f32 %v3415, %v3430
        %v3442 = vadd.f32 %v3416, %v3432
        %v3443 = vadd.f32 %v3417, %v3434
        %v3444 = vadd.f32 %v3418, %v3436
        %v3445 = vmax.f32 %v3441, 0.0
        %v3446 = vmax.f32 %v3442, 0.0
        %v3447 = vmax.f32 %v3443, 0.0
        %v3448 = vmax.f32 %v3444, 0.0
        %3453 = vrot.lane.b32.xlu0 %v3445, 1
        %v3454 = vpop.permute.xlu0 %3453
        %3455 = vrot.lane.b32.xlu0 %v3446, 1
        %v3456 = vpop.permute.xlu0 %3455
        %3457 = vrot.lane.b32.xlu0 %v3447, 1
        %v3458 = vpop.permute.xlu0 %3457
        %3459 = vrot.lane.b32.xlu0 %v3448, 1
        %v3460 = vpop.permute.xlu0 %3459
        %s3465 = scalar_lea.vmem [#allocation3], 40
        %3466 = vst.msk [vmem:[%s3465 + $0x1] sm:$0xff] %vm1158, %v3454
        %3467 = vst.msk [vmem:[%s3465 + $0x9] sm:$0xff] %vm1158, %v3456
        %3468 = vst.msk [vmem:[%s3465 + $0x11] sm:$0xff] %vm1158, %v3458
        %3469 = vst.msk [vmem:[%s3465 + $0x19] sm:$0xff] %vm1158, %v3460
        %s3470 = sld [smem:[#allocation17]]
        %v3471 = vstv %s3470
        %v3472 = vadd.f32 %v3471, 0.0
        %s3473 = sld [smem:[#allocation16]]
        %v3474 = vld [vmem:[#allocation3] sm:$0xff]
        %v3475 = vld [vmem:[#allocation3 + $0x8] sm:$0xff]
        %v3476 = vld [vmem:[#allocation3 + $0x10] sm:$0xff]
        %v3477 = vld [vmem:[#allocation3 + $0x18] sm:$0xff]
        %v3478 = vstv %s3473
        %v3479 = vmul.f32 %v3478, %v3474
        %v3480 = vmul.f32 %v3478, %v3475
        %v3481 = vmul.f32 %v3478, %v3476
        %v3482 = vmul.f32 %v3478, %v3477
        %v3483 = vadd.f32 %v3472, %v3479
        %v3484 = vadd.f32 %v3472, %v3480
        %v3485 = vadd.f32 %v3472, %v3481
        %v3486 = vadd.f32 %v3472, %v3482
        %s3487 = sld [smem:[#allocation16 + $0x1]]
        %v3488 = vstv %s3487
        %v3489 = vmul.f32 %v3488, %v3474
        %v3490 = vmul.f32 %v3488, %v3475
        %v3491 = vmul.f32 %v3488, %v3476
        %v3492 = vmul.f32 %v3488, %v3477
        %3497 = vrot.lane.b32.xlu0 %v3489, 127
        %v3498 = vpop.permute.xlu0 %3497
        %3499 = vrot.lane.b32.xlu0 %v3490, 127
        %v3500 = vpop.permute.xlu0 %3499
        %3501 = vrot.lane.b32.xlu0 %v3491, 127
        %v3502 = vpop.permute.xlu0 %3501
        %3503 = vrot.lane.b32.xlu0 %v3492, 127
        %v3504 = vpop.permute.xlu0 %3503
        %v3509 = vadd.f32 %v3483, %v3498
        %v3510 = vadd.f32 %v3484, %v3500
        %v3511 = vadd.f32 %v3485, %v3502
        %v3512 = vadd.f32 %v3486, %v3504
        %s3513 = sld [smem:[#allocation16 + $0x2]]
        %v3514 = vstv %s3513
        %v3515 = vmul.f32 %v3514, %v3474
        %v3516 = vmul.f32 %v3514, %v3475
        %v3517 = vmul.f32 %v3514, %v3476
        %v3518 = vmul.f32 %v3514, %v3477
        %3523 = vrot.lane.b32.xlu0 %v3515, 126
        %v3524 = vpop.permute.xlu0 %3523
        %3525 = vrot.lane.b32.xlu0 %v3516, 126
        %v3526 = vpop.permute.xlu0 %3525
        %3527 = vrot.lane.b32.xlu0 %v3517, 126
        %v3528 = vpop.permute.xlu0 %3527
        %3529 = vrot.lane.b32.xlu0 %v3518, 126
        %v3530 = vpop.permute.xlu0 %3529
        %v3535 = vadd.f32 %v3509, %v3524
        %v3536 = vadd.f32 %v3510, %v3526
        %v3537 = vadd.f32 %v3511, %v3528
        %v3538 = vadd.f32 %v3512, %v3530
        %s3539 = sld [smem:[#allocation16 + $0x3]]
        %v3540 = vld [vmem:[#allocation3 + $0x1] sm:$0xff]
        %v3541 = vld [vmem:[#allocation3 + $0x9] sm:$0xff]
        %v3542 = vld [vmem:[#allocation3 + $0x11] sm:$0xff]
        %v3543 = vld [vmem:[#allocation3 + $0x19] sm:$0xff]
        %v3544 = vstv %s3539
        %v3545 = vmul.f32 %v3544, %v3540
        %v3546 = vmul.f32 %v3544, %v3541
        %v3547 = vmul.f32 %v3544, %v3542
        %v3548 = vmul.f32 %v3544, %v3543
        %v3549 = vadd.f32 %v3535, %v3545
        %v3550 = vadd.f32 %v3536, %v3546
        %v3551 = vadd.f32 %v3537, %v3547
        %v3552 = vadd.f32 %v3538, %v3548
        %s3553 = sld [smem:[#allocation16 + $0x4]]
        %v3554 = vstv %s3553
        %v3555 = vmul.f32 %v3554, %v3540
        %v3556 = vmul.f32 %v3554, %v3541
        %v3557 = vmul.f32 %v3554, %v3542
        %v3558 = vmul.f32 %v3554, %v3543
        %3563 = vrot.lane.b32.xlu0 %v3555, 127
        %v3564 = vpop.permute.xlu0 %3563
        %3565 = vrot.lane.b32.xlu0 %v3556, 127
        %v3566 = vpop.permute.xlu0 %3565
        %3567 = vrot.lane.b32.xlu0 %v3557, 127
        %v3568 = vpop.permute.xlu0 %3567
        %3569 = vrot.lane.b32.xlu0 %v3558, 127
        %v3570 = vpop.permute.xlu0 %3569
        %v3575 = vadd.f32 %v3549, %v3564
        %v3576 = vadd.f32 %v3550, %v3566
        %v3577 = vadd.f32 %v3551, %v3568
        %v3578 = vadd.f32 %v3552, %v3570
        %s3579 = sld [smem:[#allocation16 + $0x5]]
        %v3580 = vstv %s3579
        %v3581 = vmul.f32 %v3580, %v3540
        %v3582 = vmul.f32 %v3580, %v3541
        %v3583 = vmul.f32 %v3580, %v3542
        %v3584 = vmul.f32 %v3580, %v3543
        %3589 = vrot.lane.b32.xlu0 %v3581, 126
        %v3590 = vpop.permute.xlu0 %3589
        %3591 = vrot.lane.b32.xlu0 %v3582, 126
        %v3592 = vpop.permute.xlu0 %3591
        %3593 = vrot.lane.b32.xlu0 %v3583, 126
        %v3594 = vpop.permute.xlu0 %3593
        %3595 = vrot.lane.b32.xlu0 %v3584, 126
        %v3596 = vpop.permute.xlu0 %3595
        %v3601 = vadd.f32 %v3575, %v3590
        %v3602 = vadd.f32 %v3576, %v3592
        %v3603 = vadd.f32 %v3577, %v3594
        %v3604 = vadd.f32 %v3578, %v3596
        %s3605 = sld [smem:[#allocation16 + $0x6]]
        %v3606 = vld [vmem:[#allocation3 + $0x2] sm:$0xff]
        %v3607 = vld [vmem:[#allocation3 + $0xa] sm:$0xff]
        %v3608 = vld [vmem:[#allocation3 + $0x12] sm:$0xff]
        %v3609 = vld [vmem:[#allocation3 + $0x1a] sm:$0xff]
        %v3610 = vstv %s3605
        %v3611 = vmul.f32 %v3610, %v3606
        %v3612 = vmul.f32 %v3610, %v3607
        %v3613 = vmul.f32 %v3610, %v3608
        %v3614 = vmul.f32 %v3610, %v3609
        %v3615 = vadd.f32 %v3601, %v3611
        %v3616 = vadd.f32 %v3602, %v3612
        %v3617 = vadd.f32 %v3603, %v3613
        %v3618 = vadd.f32 %v3604, %v3614
        %s3619 = sld [smem:[#allocation16 + $0x7]]
        %v3620 = vstv %s3619
        %v3621 = vmul.f32 %v3620, %v3606
        %v3622 = vmul.f32 %v3620, %v3607
        %v3623 = vmul.f32 %v3620, %v3608
        %v3624 = vmul.f32 %v3620, %v3609
        %3629 = vrot.lane.b32.xlu0 %v3621, 127
        %v3630 = vpop.permute.xlu0 %3629
        %3631 = vrot.lane.b32.xlu0 %v3622, 127
        %v3632 = vpop.permute.xlu0 %3631
        %3633 = vrot.lane.b32.xlu0 %v3623, 127
        %v3634 = vpop.permute.xlu0 %3633
        %3635 = vrot.lane.b32.xlu0 %v3624, 127
        %v3636 = vpop.permute.xlu0 %3635
        %v3641 = vadd.f32 %v3615, %v3630
        %v3642 = vadd.f32 %v3616, %v3632
        %v3643 = vadd.f32 %v3617, %v3634
        %v3644 = vadd.f32 %v3618, %v3636
        %s3645 = sld [smem:[#allocation16 + $0x8]]
        %v3646 = vstv %s3645
        %v3647 = vmul.f32 %v3646, %v3606
        %v3648 = vmul.f32 %v3646, %v3607
        %v3649 = vmul.f32 %v3646, %v3608
        %v3650 = vmul.f32 %v3646, %v3609
        %3655 = vrot.lane.b32.xlu0 %v3647, 126
        %v3656 = vpop.permute.xlu0 %3655
        %3657 = vrot.lane.b32.xlu0 %v3648, 126
        %v3658 = vpop.permute.xlu0 %3657
        %3659 = vrot.lane.b32.xlu0 %v3649, 126
        %v3660 = vpop.permute.xlu0 %3659
        %3661 = vrot.lane.b32.xlu0 %v3650, 126
        %v3662 = vpop.permute.xlu0 %3661
        %v3667 = vadd.f32 %v3641, %v3656
        %v3668 = vadd.f32 %v3642, %v3658
        %v3669 = vadd.f32 %v3643, %v3660
        %v3670 = vadd.f32 %v3644, %v3662
        %s3671 = sld [smem:[#allocation16 + $0x9]]
        %v3672 = vld [vmem:[%s3465] sm:$0xff]
        %v3673 = vld [vmem:[%s3465 + $0x8] sm:$0xff]
        %v3674 = vld [vmem:[%s3465 + $0x10] sm:$0xff]
        %v3675 = vld [vmem:[%s3465 + $0x18] sm:$0xff]
        %v3676 = vstv %s3671
        %v3677 = vmul.f32 %v3676, %v3672
        %v3678 = vmul.f32 %v3676, %v3673
        %v3679 = vmul.f32 %v3676, %v3674
        %v3680 = vmul.f32 %v3676, %v3675
        %v3681 = vadd.f32 %v3667, %v3677
        %v3682 = vadd.f32 %v3668, %v3678
        %v3683 = vadd.f32 %v3669, %v3679
        %v3684 = vadd.f32 %v3670, %v3680
        %s3685 = sld [smem:[#allocation16 + $0xa]]
        %v3686 = vstv %s3685
        %v3687 = vmul.f32 %v3686, %v3672
        %v3688 = vmul.f32 %v3686, %v3673
        %v3689 = vmul.f32 %v3686, %v3674
        %v3690 = vmul.f32 %v3686, %v3675
        %3695 = vrot.lane.b32.xlu0 %v3687, 127
        %v3696 = vpop.permute.xlu0 %3695
        %3697 = vrot.lane.b32.xlu0 %v3688, 127
        %v3698 = vpop.permute.xlu0 %3697
        %3699 = vrot.lane.b32.xlu0 %v3689, 127
        %v3700 = vpop.permute.xlu0 %3699
        %3701 = vrot.lane.b32.xlu0 %v3690, 127
        %v3702 = vpop.permute.xlu0 %3701
        %v3707 = vadd.f32 %v3681, %v3696
        %v3708 = vadd.f32 %v3682, %v3698
        %v3709 = vadd.f32 %v3683, %v3700
        %v3710 = vadd.f32 %v3684, %v3702
        %s3711 = sld [smem:[#allocation16 + $0xb]]
        %v3712 = vstv %s3711
        %v3713 = vmul.f32 %v3712, %v3672
        %v3714 = vmul.f32 %v3712, %v3673
        %v3715 = vmul.f32 %v3712, %v3674
        %v3716 = vmul.f32 %v3712, %v3675
        %3721 = vrot.lane.b32.xlu0 %v3713, 126
        %v3722 = vpop.permute.xlu0 %3721
        %3723 = vrot.lane.b32.xlu0 %v3714, 126
        %v3724 = vpop.permute.xlu0 %3723
        %3725 = vrot.lane.b32.xlu0 %v3715, 126
        %v3726 = vpop.permute.xlu0 %3725
        %3727 = vrot.lane.b32.xlu0 %v3716, 126
        %v3728 = vpop.permute.xlu0 %3727
        %v3733 = vadd.f32 %v3707, %v3722
        %v3734 = vadd.f32 %v3708, %v3724
        %v3735 = vadd.f32 %v3709, %v3726
        %v3736 = vadd.f32 %v3710, %v3728
        %s3737 = sld [smem:[#allocation16 + $0xc]]
        %v3738 = vld [vmem:[%s3465 + $0x1] sm:$0xff]
        %v3739 = vld [vmem:[%s3465 + $0x9] sm:$0xff]
        %v3740 = vld [vmem:[%s3465 + $0x11] sm:$0xff]
        %v3741 = vld [vmem:[%s3465 + $0x19] sm:$0xff]
        %v3742 = vstv %s3737
        %v3743 = vmul.f32 %v3742, %v3738
        %v3744 = vmul.f32 %v3742, %v3739
        %v3745 = vmul.f32 %v3742, %v3740
        %v3746 = vmul.f32 %v3742, %v3741
        %v3747 = vadd.f32 %v3733, %v3743
        %v3748 = vadd.f32 %v3734, %v3744
        %v3749 = vadd.f32 %v3735, %v3745
        %v3750 = vadd.f32 %v3736, %v3746
        %s3751 = sld [smem:[#allocation16 + $0xd]]
        %v3752 = vstv %s3751
        %v3753 = vmul.f32 %v3752, %v3738
        %v3754 = vmul.f32 %v3752, %v3739
        %v3755 = vmul.f32 %v3752, %v3740
        %v3756 = vmul.f32 %v3752, %v3741
        %3761 = vrot.lane.b32.xlu0 %v3753, 127
        %v3762 = vpop.permute.xlu0 %3761
        %3763 = vrot.lane.b32.xlu0 %v3754, 127
        %v3764 = vpop.permute.xlu0 %3763
        %3765 = vrot.lane.b32.xlu0 %v3755, 127
        %v3766 = vpop.permute.xlu0 %3765
        %3767 = vrot.lane.b32.xlu0 %v3756, 127
        %v3768 = vpop.permute.xlu0 %3767
        %v3773 = vadd.f32 %v3747, %v3762
        %v3774 = vadd.f32 %v3748, %v3764
        %v3775 = vadd.f32 %v3749, %v3766
        %v3776 = vadd.f32 %v3750, %v3768
        %s3777 = sld [smem:[#allocation16 + $0xe]]
        %v3778 = vstv %s3777
        %v3779 = vmul.f32 %v3778, %v3738
        %v3780 = vmul.f32 %v3778, %v3739
        %v3781 = vmul.f32 %v3778, %v3740
        %v3782 = vmul.f32 %v3778, %v3741
        %3787 = vrot.lane.b32.xlu0 %v3779, 126
        %v3788 = vpop.permute.xlu0 %3787
        %3789 = vrot.lane.b32.xlu0 %v3780, 126
        %v3790 = vpop.permute.xlu0 %3789
        %3791 = vrot.lane.b32.xlu0 %v3781, 126
        %v3792 = vpop.permute.xlu0 %3791
        %3793 = vrot.lane.b32.xlu0 %v3782, 126
        %v3794 = vpop.permute.xlu0 %3793
        %v3799 = vadd.f32 %v3773, %v3788
        %v3800 = vadd.f32 %v3774, %v3790
        %v3801 = vadd.f32 %v3775, %v3792
        %v3802 = vadd.f32 %v3776, %v3794
        %s3803 = sld [smem:[#allocation16 + $0xf]]
        %v3804 = vld [vmem:[%s3465 + $0x2] sm:$0xff]
        %v3805 = vld [vmem:[%s3465 + $0xa] sm:$0xff]
        %v3806 = vld [vmem:[%s3465 + $0x12] sm:$0xff]
        %v3807 = vld [vmem:[%s3465 + $0x1a] sm:$0xff]
        %v3808 = vstv %s3803
        %v3809 = vmul.f32 %v3808, %v3804
        %v3810 = vmul.f32 %v3808, %v3805
        %v3811 = vmul.f32 %v3808, %v3806
        %v3812 = vmul.f32 %v3808, %v3807
        %v3813 = vadd.f32 %v3799, %v3809
        %v3814 = vadd.f32 %v3800, %v3810
        %v3815 = vadd.f32 %v3801, %v3811
        %v3816 = vadd.f32 %v3802, %v3812
        %s3817 = sld [smem:[#allocation16 + $0x10]]
        %v3818 = vstv %s3817
        %v3819 = vmul.f32 %v3818, %v3804
        %v3820 = vmul.f32 %v3818, %v3805
        %v3821 = vmul.f32 %v3818, %v3806
        %v3822 = vmul.f32 %v3818, %v3807
        %3827 = vrot.lane.b32.xlu0 %v3819, 127
        %v3828 = vpop.permute.xlu0 %3827
        %3829 = vrot.lane.b32.xlu0 %v3820, 127
        %v3830 = vpop.permute.xlu0 %3829
        %3831 = vrot.lane.b32.xlu0 %v3821, 127
        %v3832 = vpop.permute.xlu0 %3831
        %3833 = vrot.lane.b32.xlu0 %v3822, 127
        %v3834 = vpop.permute.xlu0 %3833
        %v3839 = vadd.f32 %v3813, %v3828
        %v3840 = vadd.f32 %v3814, %v3830
        %v3841 = vadd.f32 %v3815, %v3832
        %v3842 = vadd.f32 %v3816, %v3834
        %s3843 = sld [smem:[#allocation16 + $0x11]]
        %v3844 = vstv %s3843
        %v3845 = vmul.f32 %v3844, %v3804
        %v3846 = vmul.f32 %v3844, %v3805
        %v3847 = vmul.f32 %v3844, %v3806
        %v3848 = vmul.f32 %v3844, %v3807
        %3853 = vrot.lane.b32.xlu0 %v3845, 126
        %v3854 = vpop.permute.xlu0 %3853
        %3855 = vrot.lane.b32.xlu0 %v3846, 126
        %v3856 = vpop.permute.xlu0 %3855
        %3857 = vrot.lane.b32.xlu0 %v3847, 126
        %v3858 = vpop.permute.xlu0 %3857
        %3859 = vrot.lane.b32.xlu0 %v3848, 126
        %v3860 = vpop.permute.xlu0 %3859
        %v3865 = vadd.f32 %v3839, %v3854
        %v3866 = vadd.f32 %v3840, %v3856
        %v3867 = vadd.f32 %v3841, %v3858
        %v3868 = vadd.f32 %v3842, %v3860
        %v3869 = vmax.f32 %v3865, 0.0
        %v3870 = vmax.f32 %v3866, 0.0
        %v3871 = vmax.f32 %v3867, 0.0
        %v3872 = vmax.f32 %v3868, 0.0
        %vm3873 = vcmask 261120
        %3874 = vst.msk [vmem:[%s440] sm:$0xff] %vm3873, %v3869
        %3875 = vst.msk [vmem:[%s440 + $0x8] sm:$0xff] %vm3873, %v3870
        %3876 = vst.msk [vmem:[%s440 + $0x10] sm:$0xff] %vm3873, %v3871
        %3877 = vst.msk [vmem:[%s440 + $0x18] sm:$0xff] %vm3873, %v3872
        %s3878 = sld [smem:[#allocation17 + $0x1]]
        %v3879 = vstv %s3878
        %v3880 = vadd.f32 %v3879, 0.0
        %s3881 = sld [smem:[#allocation16 + $0x12]]
        %v3882 = vld [vmem:[#allocation3] sm:$0xff]
        %v3883 = vld [vmem:[#allocation3 + $0x8] sm:$0xff]
        %v3884 = vld [vmem:[#allocation3 + $0x10] sm:$0xff]
        %v3885 = vld [vmem:[#allocation3 + $0x18] sm:$0xff]
        %v3886 = vstv %s3881
        %v3887 = vmul.f32 %v3886, %v3882
        %v3888 = vmul.f32 %v3886, %v3883
        %v3889 = vmul.f32 %v3886, %v3884
        %v3890 = vmul.f32 %v3886, %v3885
        %v3891 = vadd.f32 %v3880, %v3887
        %v3892 = vadd.f32 %v3880, %v3888
        %v3893 = vadd.f32 %v3880, %v3889
        %v3894 = vadd.f32 %v3880, %v3890
        %s3895 = sld [smem:[#allocation16 + $0x13]]
        %v3896 = vstv %s3895
        %v3897 = vmul.f32 %v3896, %v3882
        %v3898 = vmul.f32 %v3896, %v3883
        %v3899 = vmul.f32 %v3896, %v3884
        %v3900 = vmul.f32 %v3896, %v3885
        %3905 = vrot.lane.b32.xlu0 %v3897, 127
        %v3906 = vpop.permute.xlu0 %3905
        %3907 = vrot.lane.b32.xlu0 %v3898, 127
        %v3908 = vpop.permute.xlu0 %3907
        %3909 = vrot.lane.b32.xlu0 %v3899, 127
        %v3910 = vpop.permute.xlu0 %3909
        %3911 = vrot.lane.b32.xlu0 %v3900, 127
        %v3912 = vpop.permute.xlu0 %3911
        %v3917 = vadd.f32 %v3891, %v3906
        %v3918 = vadd.f32 %v3892, %v3908
        %v3919 = vadd.f32 %v3893, %v3910
        %v3920 = vadd.f32 %v3894, %v3912
        %s3921 = sld [smem:[#allocation16 + $0x14]]
        %v3922 = vstv %s3921
        %v3923 = vmul.f32 %v3922, %v3882
        %v3924 = vmul.f32 %v3922, %v3883
        %v3925 = vmul.f32 %v3922, %v3884
        %v3926 = vmul.f32 %v3922, %v3885
        %3931 = vrot.lane.b32.xlu0 %v3923, 126
        %v3932 = vpop.permute.xlu0 %3931
        %3933 = vrot.lane.b32.xlu0 %v3924, 126
        %v3934 = vpop.permute.xlu0 %3933
        %3935 = vrot.lane.b32.xlu0 %v3925, 126
        %v3936 = vpop.permute.xlu0 %3935
        %3937 = vrot.lane.b32.xlu0 %v3926, 126
        %v3938 = vpop.permute.xlu0 %3937
        %v3943 = vadd.f32 %v3917, %v3932
        %v3944 = vadd.f32 %v3918, %v3934
        %v3945 = vadd.f32 %v3919, %v3936
        %v3946 = vadd.f32 %v3920, %v3938
        %s3947 = sld [smem:[#allocation16 + $0x15]]
        %v3948 = vld [vmem:[#allocation3 + $0x1] sm:$0xff]
        %v3949 = vld [vmem:[#allocation3 + $0x9] sm:$0xff]
        %v3950 = vld [vmem:[#allocation3 + $0x11] sm:$0xff]
        %v3951 = vld [vmem:[#allocation3 + $0x19] sm:$0xff]
        %v3952 = vstv %s3947
        %v3953 = vmul.f32 %v3952, %v3948
        %v3954 = vmul.f32 %v3952, %v3949
        %v3955 = vmul.f32 %v3952, %v3950
        %v3956 = vmul.f32 %v3952, %v3951
        %v3957 = vadd.f32 %v3943, %v3953
        %v3958 = vadd.f32 %v3944, %v3954
        %v3959 = vadd.f32 %v3945, %v3955
        %v3960 = vadd.f32 %v3946, %v3956
        %s3961 = sld [smem:[#allocation16 + $0x16]]
        %v3962 = vstv %s3961
        %v3963 = vmul.f32 %v3962, %v3948
        %v3964 = vmul.f32 %v3962, %v3949
        %v3965 = vmul.f32 %v3962, %v3950
        %v3966 = vmul.f32 %v3962, %v3951
        %3971 = vrot.lane.b32.xlu0 %v3963, 127
        %v3972 = vpop.permute.xlu0 %3971
        %3973 = vrot.lane.b32.xlu0 %v3964, 127
        %v3974 = vpop.permute.xlu0 %3973
        %3975 = vrot.lane.b32.xlu0 %v3965, 127
        %v3976 = vpop.permute.xlu0 %3975
        %3977 = vrot.lane.b32.xlu0 %v3966, 127
        %v3978 = vpop.permute.xlu0 %3977
        %v3983 = vadd.f32 %v3957, %v3972
        %v3984 = vadd.f32 %v3958, %v3974
        %v3985 = vadd.f32 %v3959, %v3976
        %v3986 = vadd.f32 %v3960, %v3978
        %s3987 = sld [smem:[#allocation16 + $0x17]]
        %v3988 = vstv %s3987
        %v3989 = vmul.f32 %v3988, %v3948
        %v3990 = vmul.f32 %v3988, %v3949
        %v3991 = vmul.f32 %v3988, %v3950
        %v3992 = vmul.f32 %v3988, %v3951
        %3997 = vrot.lane.b32.xlu0 %v3989, 126
        %v3998 = vpop.permute.xlu0 %3997
        %3999 = vrot.lane.b32.xlu0 %v3990, 126
        %v4000 = vpop.permute.xlu0 %3999
        %4001 = vrot.lane.b32.xlu0 %v3991, 126
        %v4002 = vpop.permute.xlu0 %4001
        %4003 = vrot.lane.b32.xlu0 %v3992, 126
        %v4004 = vpop.permute.xlu0 %4003
        %v4009 = vadd.f32 %v3983, %v3998
        %v4010 = vadd.f32 %v3984, %v4000
        %v4011 = vadd.f32 %v3985, %v4002
        %v4012 = vadd.f32 %v3986, %v4004
        %s4013 = sld [smem:[#allocation16 + $0x18]]
        %v4014 = vld [vmem:[#allocation3 + $0x2] sm:$0xff]
        %v4015 = vld [vmem:[#allocation3 + $0xa] sm:$0xff]
        %v4016 = vld [vmem:[#allocation3 + $0x12] sm:$0xff]
        %v4017 = vld [vmem:[#allocation3 + $0x1a] sm:$0xff]
        %v4018 = vstv %s4013
        %v4019 = vmul.f32 %v4018, %v4014
        %v4020 = vmul.f32 %v4018, %v4015
        %v4021 = vmul.f32 %v4018, %v4016
        %v4022 = vmul.f32 %v4018, %v4017
        %v4023 = vadd.f32 %v4009, %v4019
        %v4024 = vadd.f32 %v4010, %v4020
        %v4025 = vadd.f32 %v4011, %v4021
        %v4026 = vadd.f32 %v4012, %v4022
        %s4027 = sld [smem:[#allocation16 + $0x19]]
        %v4028 = vstv %s4027
        %v4029 = vmul.f32 %v4028, %v4014
        %v4030 = vmul.f32 %v4028, %v4015
        %v4031 = vmul.f32 %v4028, %v4016
        %v4032 = vmul.f32 %v4028, %v4017
        %4037 = vrot.lane.b32.xlu0 %v4029, 127
        %v4038 = vpop.permute.xlu0 %4037
        %4039 = vrot.lane.b32.xlu0 %v4030, 127
        %v4040 = vpop.permute.xlu0 %4039
        %4041 = vrot.lane.b32.xlu0 %v4031, 127
        %v4042 = vpop.permute.xlu0 %4041
        %4043 = vrot.lane.b32.xlu0 %v4032, 127
        %v4044 = vpop.permute.xlu0 %4043
        %v4049 = vadd.f32 %v4023, %v4038
        %v4050 = vadd.f32 %v4024, %v4040
        %v4051 = vadd.f32 %v4025, %v4042
        %v4052 = vadd.f32 %v4026, %v4044
        %s4053 = sld [smem:[#allocation16 + $0x1a]]
        %v4054 = vstv %s4053
        %v4055 = vmul.f32 %v4054, %v4014
        %v4056 = vmul.f32 %v4054, %v4015
        %v4057 = vmul.f32 %v4054, %v4016
        %v4058 = vmul.f32 %v4054, %v4017
        %4063 = vrot.lane.b32.xlu0 %v4055, 126
        %v4064 = vpop.permute.xlu0 %4063
        %4065 = vrot.lane.b32.xlu0 %v4056, 126
        %v4066 = vpop.permute.xlu0 %4065
        %4067 = vrot.lane.b32.xlu0 %v4057, 126
        %v4068 = vpop.permute.xlu0 %4067
        %4069 = vrot.lane.b32.xlu0 %v4058, 126
        %v4070 = vpop.permute.xlu0 %4069
        %v4075 = vadd.f32 %v4049, %v4064
        %v4076 = vadd.f32 %v4050, %v4066
        %v4077 = vadd.f32 %v4051, %v4068
        %v4078 = vadd.f32 %v4052, %v4070
        %s4079 = sld [smem:[#allocation16 + $0x1b]]
        %v4080 = vld [vmem:[%s3465] sm:$0xff]
        %v4081 = vld [vmem:[%s3465 + $0x8] sm:$0xff]
        %v4082 = vld [vmem:[%s3465 + $0x10] sm:$0xff]
        %v4083 = vld [vmem:[%s3465 + $0x18] sm:$0xff]
        %v4084 = vstv %s4079
        %v4085 = vmul.f32 %v4084, %v4080
        %v4086 = vmul.f32 %v4084, %v4081
        %v4087 = vmul.f32 %v4084, %v4082
        %v4088 = vmul.f32 %v4084, %v4083
        %v4089 = vadd.f32 %v4075, %v4085
        %v4090 = vadd.f32 %v4076, %v4086
        %v4091 = vadd.f32 %v4077, %v4087
        %v4092 = vadd.f32 %v4078, %v4088
        %s4093 = sld [smem:[#allocation16 + $0x1c]]
        %v4094 = vstv %s4093
        %v4095 = vmul.f32 %v4094, %v4080
        %v4096 = vmul.f32 %v4094, %v4081
        %v4097 = vmul.f32 %v4094, %v4082
        %v4098 = vmul.f32 %v4094, %v4083
        %4103 = vrot.lane.b32.xlu0 %v4095, 127
        %v4104 = vpop.permute.xlu0 %4103
        %4105 = vrot.lane.b32.xlu0 %v4096, 127
        %v4106 = vpop.permute.xlu0 %4105
        %4107 = vrot.lane.b32.xlu0 %v4097, 127
        %v4108 = vpop.permute.xlu0 %4107
        %4109 = vrot.lane.b32.xlu0 %v4098, 127
        %v4110 = vpop.permute.xlu0 %4109
        %v4115 = vadd.f32 %v4089, %v4104
        %v4116 = vadd.f32 %v4090, %v4106
        %v4117 = vadd.f32 %v4091, %v4108
        %v4118 = vadd.f32 %v4092, %v4110
        %s4119 = sld [smem:[#allocation16 + $0x1d]]
        %v4120 = vstv %s4119
        %v4121 = vmul.f32 %v4120, %v4080
        %v4122 = vmul.f32 %v4120, %v4081
        %v4123 = vmul.f32 %v4120, %v4082
        %v4124 = vmul.f32 %v4120, %v4083
        %4129 = vrot.lane.b32.xlu0 %v4121, 126
        %v4130 = vpop.permute.xlu0 %4129
        %4131 = vrot.lane.b32.xlu0 %v4122, 126
        %v4132 = vpop.permute.xlu0 %4131
        %4133 = vrot.lane.b32.xlu0 %v4123, 126
        %v4134 = vpop.permute.xlu0 %4133
        %4135 = vrot.lane.b32.xlu0 %v4124, 126
        %v4136 = vpop.permute.xlu0 %4135
        %v4141 = vadd.f32 %v4115, %v4130
        %v4142 = vadd.f32 %v4116, %v4132
        %v4143 = vadd.f32 %v4117, %v4134
        %v4144 = vadd.f32 %v4118, %v4136
        %s4145 = sld [smem:[#allocation16 + $0x1e]]
        %v4146 = vld [vmem:[%s3465 + $0x1] sm:$0xff]
        %v4147 = vld [vmem:[%s3465 + $0x9] sm:$0xff]
        %v4148 = vld [vmem:[%s3465 + $0x11] sm:$0xff]
        %v4149 = vld [vmem:[%s3465 + $0x19] sm:$0xff]
        %v4150 = vstv %s4145
        %v4151 = vmul.f32 %v4150, %v4146
        %v4152 = vmul.f32 %v4150, %v4147
        %v4153 = vmul.f32 %v4150, %v4148
        %v4154 = vmul.f32 %v4150, %v4149
        %v4155 = vadd.f32 %v4141, %v4151
        %v4156 = vadd.f32 %v4142, %v4152
        %v4157 = vadd.f32 %v4143, %v4153
        %v4158 = vadd.f32 %v4144, %v4154
        %s4159 = sld [smem:[#allocation16 + $0x1f]]
        %v4160 = vstv %s4159
        %v4161 = vmul.f32 %v4160, %v4146
        %v4162 = vmul.f32 %v4160, %v4147
        %v4163 = vmul.f32 %v4160, %v4148
        %v4164 = vmul.f32 %v4160, %v4149
        %4169 = vrot.lane.b32.xlu0 %v4161, 127
        %v4170 = vpop.permute.xlu0 %4169
        %4171 = vrot.lane.b32.xlu0 %v4162, 127
        %v4172 = vpop.permute.xlu0 %4171
        %4173 = vrot.lane.b32.xlu0 %v4163, 127
        %v4174 = vpop.permute.xlu0 %4173
        %4175 = vrot.lane.b32.xlu0 %v4164, 127
        %v4176 = vpop.permute.xlu0 %4175
        %v4181 = vadd.f32 %v4155, %v4170
        %v4182 = vadd.f32 %v4156, %v4172
        %v4183 = vadd.f32 %v4157, %v4174
        %v4184 = vadd.f32 %v4158, %v4176
        %s4185 = sld [smem:[#allocation16 + $0x20]]
        %v4186 = vstv %s4185
        %v4187 = vmul.f32 %v4186, %v4146
        %v4188 = vmul.f32 %v4186, %v4147
        %v4189 = vmul.f32 %v4186, %v4148
        %v4190 = vmul.f32 %v4186, %v4149
        %4195 = vrot.lane.b32.xlu0 %v4187, 126
        %v4196 = vpop.permute.xlu0 %4195
        %4197 = vrot.lane.b32.xlu0 %v4188, 126
        %v4198 = vpop.permute.xlu0 %4197
        %4199 = vrot.lane.b32.xlu0 %v4189, 126
        %v4200 = vpop.permute.xlu0 %4199
        %4201 = vrot.lane.b32.xlu0 %v4190, 126
        %v4202 = vpop.permute.xlu0 %4201
        %v4207 = vadd.f32 %v4181, %v4196
        %v4208 = vadd.f32 %v4182, %v4198
        %v4209 = vadd.f32 %v4183, %v4200
        %v4210 = vadd.f32 %v4184, %v4202
        %s4211 = sld [smem:[#allocation16 + $0x21]]
        %v4212 = vld [vmem:[%s3465 + $0x2] sm:$0xff]
        %v4213 = vld [vmem:[%s3465 + $0xa] sm:$0xff]
        %v4214 = vld [vmem:[%s3465 + $0x12] sm:$0xff]
        %v4215 = vld [vmem:[%s3465 + $0x1a] sm:$0xff]
        %v4216 = vstv %s4211
        %v4217 = vmul.f32 %v4216, %v4212
        %v4218 = vmul.f32 %v4216, %v4213
        %v4219 = vmul.f32 %v4216, %v4214
        %v4220 = vmul.f32 %v4216, %v4215
        %v4221 = vadd.f32 %v4207, %v4217
        %v4222 = vadd.f32 %v4208, %v4218
        %v4223 = vadd.f32 %v4209, %v4219
        %v4224 = vadd.f32 %v4210, %v4220
        %s4225 = sld [smem:[#allocation16 + $0x22]]
        %v4226 = vstv %s4225
        %v4227 = vmul.f32 %v4226, %v4212
        %v4228 = vmul.f32 %v4226, %v4213
        %v4229 = vmul.f32 %v4226, %v4214
        %v4230 = vmul.f32 %v4226, %v4215
        %4235 = vrot.lane.b32.xlu0 %v4227, 127
        %v4236 = vpop.permute.xlu0 %4235
        %4237 = vrot.lane.b32.xlu0 %v4228, 127
        %v4238 = vpop.permute.xlu0 %4237
        %4239 = vrot.lane.b32.xlu0 %v4229, 127
        %v4240 = vpop.permute.xlu0 %4239
        %4241 = vrot.lane.b32.xlu0 %v4230, 127
        %v4242 = vpop.permute.xlu0 %4241
        %v4247 = vadd.f32 %v4221, %v4236
        %v4248 = vadd.f32 %v4222, %v4238
        %v4249 = vadd.f32 %v4223, %v4240
        %v4250 = vadd.f32 %v4224, %v4242
        %s4251 = sld [smem:[#allocation16 + $0x23]]
        %v4252 = vstv %s4251
        %v4253 = vmul.f32 %v4252, %v4212
        %v4254 = vmul.f32 %v4252, %v4213
        %v4255 = vmul.f32 %v4252, %v4214
        %v4256 = vmul.f32 %v4252, %v4215
        %4261 = vrot.lane.b32.xlu0 %v4253, 126
        %v4262 = vpop.permute.xlu0 %4261
        %4263 = vrot.lane.b32.xlu0 %v4254, 126
        %v4264 = vpop.permute.xlu0 %4263
        %4265 = vrot.lane.b32.xlu0 %v4255, 126
        %v4266 = vpop.permute.xlu0 %4265
        %4267 = vrot.lane.b32.xlu0 %v4256, 126
        %v4268 = vpop.permute.xlu0 %4267
        %v4273 = vadd.f32 %v4247, %v4262
        %v4274 = vadd.f32 %v4248, %v4264
        %v4275 = vadd.f32 %v4249, %v4266
        %v4276 = vadd.f32 %v4250, %v4268
        %v4277 = vmax.f32 %v4273, 0.0
        %v4278 = vmax.f32 %v4274, 0.0
        %v4279 = vmax.f32 %v4275, 0.0
        %v4280 = vmax.f32 %v4276, 0.0
        %s4281 = scalar_lea.vmem %s440, 32 [#allocation19]
        %4282 = vst.msk [vmem:[%s4281] sm:$0xff] %vm3873, %v4277
        %4283 = vst.msk [vmem:[%s4281 + $0x8] sm:$0xff] %vm3873, %v4278
        %4284 = vst.msk [vmem:[%s4281 + $0x10] sm:$0xff] %vm3873, %v4279
        %4285 = vst.msk [vmem:[%s4281 + $0x18] sm:$0xff] %vm3873, %v4280
        %s4286 = sand.u32 %s218, 1
        %s4287 = scalar_lea.sflag [#allocation6], %s4286
        %s4288 = sand.u32 %s218, 1
        %s4289 = smul.addr %s4288, 64
        %s4290 = scalar_lea.vmem [#allocation19], %s4289
        // Predicated region
        $region85: #{decoder_block_forward.1} parent=51 // pred_check
          %p4291 = pneg %p228
        $region86: #{decoder_block_forward.1} parent=51 // pred_check_branch
          %4293 = sbr.rel (%p4291) target = $region88
        $region87: #{decoder_block_forward.1} parent=51 // pred_region
          %s4295 = ssub.s32 1024, 1024
          %4296 = vsyncadd %s4287, %s4295
          %s4297 = smul.addr %s32, 8
          %s4298 = smul.addr %s4297, 128
          %s4299 = scalar_lea.hbm %s8, %s4298
          %s4300 = sshll.u32 %s4290, 4
          %s4301 = int_to_ptr.vmem [resolvable:$true] %s4300
          %4306 = dma.vmem_to_hbm [thread:$0]  %s4301, 1024, %s4299, %s4287, 128, 128, 8
        $region88: #{decoder_block_forward.1} parent=51 // pred_fallthru
          _
      $region52: #{decoder_block_forward.1} parent=5 // pred_fallthru
        _
      %p4307 = scmp.le.s32.totalorder 2, %s27
      // Predicated region
      $region89: #{decoder_block_forward.1} parent=5 // pred_check
        %p4308 = pneg %p4307
      $region90: #{decoder_block_forward.1} parent=5 // pred_check_branch
        %4310 = sbr.rel (%p4308) target = $region92
      $region91: #{decoder_block_forward.1} parent=5 // pred_region
        %s4311 = ssub.s32 %s27, 2
        // Predicated region
        $region93: #{decoder_block_forward.1} parent=91 // pred_check
          %p4312 = pneg %p234
        $region94: #{decoder_block_forward.1} parent=91 // pred_check_branch
          %4314 = sbr.rel (%p4312) target = $region96
        $region95: #{decoder_block_forward.1} parent=91 // pred_region
          %s4315 = sand.u32 %s219, 1
          %s4316 = scalar_lea.sflag [#allocation6], %s4315
          %s4317 = sand.u32 %s219, 1
          %s4318 = smul.addr %s4317, 64
          %s4319 = scalar_lea.vmem [#allocation19], %s4318
          %4320 = dma.done %s4316, 1024
        $region96: #{decoder_block_forward.1} parent=91 // pred_fallthru
          _
      $region92: #{decoder_block_forward.1} parent=5 // pred_fallthru
        _
    $region6: #{decoder_block_forward.1} parent=1 // loop_footer
      %s31 = sadd.s32 1, %s27
    $region7: #{decoder_block_forward.1} parent=1 // loop_footer_branch
      %26 = sbr.rel target = $region3
    $region8: #{decoder_block_forward.1} parent=1 // loop_exit
      _
    %4321 = vsyncpa [#allocation5], 1
    %s4322 = scalar_lea.sflag [#allocation5], 1
    %4323 = vsyncpa %s4322, 1
    %4324 = vsyncpa [#allocation9], 1
    %s4325 = scalar_lea.sflag [#allocation9], 1
    %4326 = vsyncpa %s4325, 1
    %4327 = vsyncpa [#allocation6], 1
    %s4328 = scalar_lea.sflag [#allocation6], 1
    %4329 = vsyncpa %s4328, 1
    %4330 = vsyncpa [#allocation7], 1
    %s4331 = scalar_lea.sflag [#allocation7], 1
    %4332 = vsyncpa %s4331, 1
    %4333 = vsyncpa [#allocation12], 1
    %4334 = vsyncpa [#allocation15], 1
    %4335 = vsyncpa [#allocation18], 1

</llo_original>
